<compile_context>
chip_gen: v5e
topology: v5e:2x2
jax: 0.10.0
libtpu: 0.0.40
codegen_flags: <defaults>
</compile_context>

<pallas_src>
import math
import functools

import jax
import jax.numpy as jnp
from jax.experimental import pallas as pl
from jax.experimental.pallas import tpu as pltpu


# ----------------------------------------------------------------------------
# Fused forward kernel (one grid step == one batch element)
# ----------------------------------------------------------------------------

def _fwd_kernel(
    tok_ref, emb_ref, pe_ref,
    Wqkv_ref, bqkv_ref, Wo_ref, bo_ref,
    ln1g_ref, ln1b_ref, W1_ref, b1_ref, W2_ref, b2_ref, ln2g_ref, ln2b_ref,
    aWqkv_ref, abqkv_ref, aWo_ref, abo_ref,
    clsW_ref, clsb_ref,
    out_ref,
    *, T, D, H, L, V):
    Dh = D // H
    scale = 1.0 / math.sqrt(Dh)
    bf16 = jnp.bfloat16
    f32 = jnp.float32

    def layernorm(x, g, b):
        mu = jnp.mean(x, axis=-1, keepdims=True)
        var = jnp.mean(jnp.square(x - mu), axis=-1, keepdims=True)
        return (x - mu) * jax.lax.rsqrt(var + 1e-5) * g + b

    def split_heads(m):
        # (T, H*Dh) -> (H, T, Dh): static lane slices stacked on a new leading
        # (batch) axis; the outputs are never concatenated back on the lane axis.
        return jnp.stack([m[:, h * Dh:(h + 1) * Dh] for h in range(H)], axis=0)

    def mha(x, Wqkv, bqkv, Wo3, bo):
        """PyTorch nn.MultiheadAttention self-attention on a (T, D) slab.

        Wqkv: (D, 3D) bf16;  Wo3: (H, Dh, D) bf16 (head-major out-proj rows).
        """
        qkv = jnp.dot(x.astype(bf16), Wqkv, preferred_element_type=f32) + bqkv
        q3 = split_heads(qkv[:, 0 * D:1 * D]).astype(bf16)       # (H, T, Dh)
        k3 = split_heads(qkv[:, 1 * D:2 * D]).astype(bf16)
        v3 = split_heads(qkv[:, 2 * D:3 * D]).astype(bf16)
        # One head-batched score matmul instead of H tiny ones.
        s = jnp.einsum("htd,hsd->hts", q3, k3,
                       preferred_element_type=f32) * scale        # (H, T, T)
        s = s - jnp.max(s, axis=-1, keepdims=True)
        p = jnp.exp(s)
        p = p * pl.reciprocal(jnp.sum(p, axis=-1, keepdims=True), approx=True)
        pv = jnp.einsum("hts,hsd->htd", p.astype(bf16), v3,
                        preferred_element_type=f32)               # (H, T, Dh)
        # Fold heads directly into the output projection (no lane-axis concat).
        o = jnp.einsum("htd,hdo->hto", pv.astype(bf16), Wo3,
                       preferred_element_type=f32)                # (H, T, D)
        return jnp.sum(o, axis=0) + bo                            # (T, D)

    # ---- embedding via one-hot matmul + positional encoding (dropout = id) ----
    # TODO(synk): at realistic vocab sizes switch to a DMA row-gather (emb in
    # pl.ANY + scalar-prefetched token ids) instead of the one-hot matmul.
    vocab_iota = jax.lax.broadcasted_iota(jnp.int32, (T, V), 1)
    onehot = (tok_ref[...] == vocab_iota).astype(bf16)            # (T, V)
    x = jnp.dot(onehot, emb_ref[...], preferred_element_type=f32)
    x = x + pe_ref[...]

    # ---- nn.TransformerEncoder stack (post-norm, ReLU), unrolled over L ----
    for l in range(L):
        a = mha(x, Wqkv_ref[l], bqkv_ref[l], Wo_ref[l], bo_ref[l])
        x = layernorm(x + a, ln1g_ref[l], ln1b_ref[l])
        h1 = jnp.dot(x.astype(bf16), W1_ref[l],
                     preferred_element_type=f32) + b1_ref[l]
        h1 = jnp.maximum(h1, 0.0)
        h2 = jnp.dot(h1.astype(bf16), W2_ref[l],
                     preferred_element_type=f32) + b2_ref[l]
        x = layernorm(x + h2, ln2g_ref[l], ln2b_ref[l])

    # ---- trailing nn.MultiheadAttention (dropout before it = identity) ----
    x = mha(x, aWqkv_ref[...], abqkv_ref[...], aWo_ref[...], abo_ref[...])

    # ---- mean over T + classifier ----
    pooled = jnp.mean(x, axis=0, keepdims=True)                   # (1, D)
    logits = (jnp.dot(pooled.astype(bf16), clsW_ref[...],
                      preferred_element_type=f32) + clsb_ref[...])  # (1, n_cls)
    out_ref[...] = logits.reshape(1, 1, -1)


# ----------------------------------------------------------------------------
# Wrapper
# ----------------------------------------------------------------------------

def prepare_kernel_params(params, *, nhead, seq_len):
    """One-time weight prep: bf16 cast, head-major Wo, PE slice."""
    bf16 = jnp.bfloat16
    L, D, _ = params["Wqkv"].shape
    Dh = D // nhead
    return {
        "emb": params["emb"].astype(bf16),
        "pe": params["pe"][:seq_len],
        "Wqkv": params["Wqkv"].astype(bf16),
        "bqkv": params["bqkv"],
        "Wo": params["Wo"].reshape(L, nhead, Dh, D).astype(bf16),
        "bo": params["bo"],
        "ln1_g": params["ln1_g"], "ln1_b": params["ln1_b"],
        "W1": params["W1"].astype(bf16), "b1": params["b1"],
        "W2": params["W2"].astype(bf16), "b2": params["b2"],
        "ln2_g": params["ln2_g"], "ln2_b": params["ln2_b"],
        "att_Wqkv": params["att_Wqkv"].astype(bf16),
        "att_bqkv": params["att_bqkv"],
        "att_Wo": params["att_Wo"].reshape(nhead, Dh, D).astype(bf16),
        "att_bo": params["att_bo"],
        "cls_W": params["cls_W"].astype(bf16),
        "cls_b": params["cls_b"],
    }


def transformer_model_forward(tokens, kp, *, nhead):
    """tokens:(B,T) int32 -> logits (B, n_cls). One fused pallas_call, grid=(B,)."""
    B, T = tokens.shape
    V, D = kp["emb"].shape
    L = kp["Wqkv"].shape[0]
    n_cls = kp["cls_W"].shape[1]
    assert kp["pe"].shape[0] == T, "positional encoding prepared for a different T"

    tok = tokens.reshape(B * T, 1).astype(jnp.int32)

    args = (
        tok, kp["emb"], kp["pe"],
        kp["Wqkv"], kp["bqkv"], kp["Wo"], kp["bo"],
        kp["ln1_g"], kp["ln1_b"], kp["W1"], kp["b1"], kp["W2"], kp["b2"],
        kp["ln2_g"], kp["ln2_b"],
        kp["att_Wqkv"], kp["att_bqkv"], kp["att_Wo"], kp["att_bo"],
        kp["cls_W"], kp["cls_b"],
    )

    def fixed(shape):
        zeros = (0,) * len(shape)
        return pl.BlockSpec(shape, lambda b, zeros=zeros: zeros)

    in_specs = ([pl.BlockSpec((T, 1), lambda b: (b, 0))]           # tokens: T rows per step
                + [fixed(a.shape) for a in args[1:]])              # weights: same block every step

    kernel = functools.partial(_fwd_kernel, T=T, D=D, H=nhead, L=L, V=V)

    out = pl.pallas_call(
        kernel,
        grid=(B,),
        out_shape=jax.ShapeDtypeStruct((B, 1, n_cls), jnp.float32),
        in_specs=in_specs,
        out_specs=pl.BlockSpec((1, 1, n_cls), lambda b: (b, 0, 0)),
        compiler_params=pltpu.CompilerParams(
            dimension_semantics=("parallel",)),     # batch split across TCs (v7x)
    )(*args)
    return out.reshape(B, n_cls)


# ----------------------------------------------------------------------------
# Deterministic parameter init (weights stacked per-layer for the fused kernel)
# ----------------------------------------------------------------------------

def make_positional_encoding(max_len, d_model):
    position = jnp.arange(max_len, dtype=jnp.float32)[:, None]
    div_term = jnp.exp(jnp.arange(0, d_model, 2, dtype=jnp.float32)
                       * (-math.log(10000.0) / d_model))
    pe = jnp.zeros((max_len, d_model), dtype=jnp.float32)
    pe = pe.at[:, 0::2].set(jnp.sin(position * div_term))
    pe = pe.at[:, 1::2].set(jnp.cos(position * div_term))
    return pe                                      # (max_len, d_model)


def init_params(key, vocab_size, ntoken, d_emb, d_hid, nhead, nlayers, n_cls=15):
    keys = iter(jax.random.split(key, 8 + 4 * nlayers))
    D = d_emb

    def dense(k, shape, scale=0.02):
        return (scale * jax.random.normal(k, shape)).astype(jnp.float32)

    # NOTE: weights are stored as (in, out) and applied as x @ W; loading real
    # PyTorch weights would require transposing each weight matrix and matching
    # the packed in_proj q/k/v ordering exactly.
    params = {
        "emb": dense(next(keys), (vocab_size, D), 1.0),
        "pe": make_positional_encoding(ntoken, D),
        "Wqkv": jnp.stack([dense(next(keys), (D, 3 * D)) for _ in range(nlayers)]),
        "bqkv": jnp.zeros((nlayers, 1, 3 * D), jnp.float32),
        "Wo": jnp.stack([dense(next(keys), (D, D)) for _ in range(nlayers)]),
        "bo": jnp.zeros((nlayers, 1, D), jnp.float32),
        "ln1_g": jnp.ones((nlayers, 1, D), jnp.float32),
        "ln1_b": jnp.zeros((nlayers, 1, D), jnp.float32),
        "W1": jnp.stack([dense(next(keys), (D, d_hid)) for _ in range(nlayers)]),
        "b1": jnp.zeros((nlayers, 1, d_hid), jnp.float32),
        "W2": jnp.stack([dense(next(keys), (d_hid, D)) for _ in range(nlayers)]),
        "b2": jnp.zeros((nlayers, 1, D), jnp.float32),
        "ln2_g": jnp.ones((nlayers, 1, D), jnp.float32),
        "ln2_b": jnp.zeros((nlayers, 1, D), jnp.float32),
        "att_Wqkv": dense(next(keys), (D, 3 * D)),
        "att_bqkv": jnp.zeros((1, 3 * D), jnp.float32),
        "att_Wo": dense(next(keys), (D, D)),
        "att_bo": jnp.zeros((1, D), jnp.float32),
        "cls_W": dense(next(keys), (D, n_cls)),
        "cls_b": jnp.zeros((1, n_cls), jnp.float32),
    }
    return params


# ----------------------------------------------------------------------------
# Main
# ----------------------------------------------------------------------------

if __name__ == "__main__":
    VOCAB = 50
    NTOKEN = 64        # max_len for positional encoding
    D_EMB = 32
    D_HID = 64
    NHEAD = 4
    NLAYERS = 2
    B, T = 2, 8

    key = jax.random.PRNGKey(0)
    k_tok, k_par = jax.random.split(key)

    params = init_params(k_par, VOCAB, NTOKEN, D_EMB, D_HID, NHEAD, NLAYERS)
    kparams = prepare_kernel_params(params, nhead=NHEAD, seq_len=T)
    tokens = jax.random.randint(k_tok, (B, T), 0, VOCAB, dtype=jnp.int32)

    fwd = jax.jit(functools.partial(transformer_model_forward, nhead=NHEAD))
    logits = fwd(tokens, kparams)
    jax.block_until_ready(logits)

    assert logits.shape == (B, 15), logits.shape
    assert bool(jnp.all(jnp.isfinite(logits)))
    print("KERNEL_OK")
</pallas_src>

<mosaic_0001>
module attributes {stable_mosaic.version = 11 : i64} {
  func.func @_fwd_kernel(%arg0: i32, %arg1: memref<8x1xi32, #tpu.memory_space<vmem>>, %arg2: memref<50x32xbf16, #tpu.memory_space<vmem>>, %arg3: memref<8x32xf32, #tpu.memory_space<vmem>>, %arg4: memref<2x32x96xbf16, #tpu.memory_space<vmem>>, %arg5: memref<2x1x96xf32, #tpu.memory_space<vmem>>, %arg6: memref<2x4x8x32xbf16, #tpu.memory_space<vmem>>, %arg7: memref<2x1x32xf32, #tpu.memory_space<vmem>>, %arg8: memref<2x1x32xf32, #tpu.memory_space<vmem>>, %arg9: memref<2x1x32xf32, #tpu.memory_space<vmem>>, %arg10: memref<2x32x64xbf16, #tpu.memory_space<vmem>>, %arg11: memref<2x1x64xf32, #tpu.memory_space<vmem>>, %arg12: memref<2x64x32xbf16, #tpu.memory_space<vmem>>, %arg13: memref<2x1x32xf32, #tpu.memory_space<vmem>>, %arg14: memref<2x1x32xf32, #tpu.memory_space<vmem>>, %arg15: memref<2x1x32xf32, #tpu.memory_space<vmem>>, %arg16: memref<32x96xbf16, #tpu.memory_space<vmem>>, %arg17: memref<1x96xf32, #tpu.memory_space<vmem>>, %arg18: memref<4x8x32xbf16, #tpu.memory_space<vmem>>, %arg19: memref<1x32xf32, #tpu.memory_space<vmem>>, %arg20: memref<32x15xbf16, #tpu.memory_space<vmem>>, %arg21: memref<1x15xf32, #tpu.memory_space<vmem>>, %arg22: memref<1x1x15xf32, #tpu.memory_space<vmem>>) attributes {dimension_semantics = [#tpu.dimension_semantics<parallel>], iteration_bounds = array<i64: 2>, scalar_prefetch = 0 : i64, scratch_operands = 0 : i64, tpu.core_type = #tpu.core_type<tc>, window_params = [{transform_indices = @transform_0, window_bounds = array<i64: 8, 1>}, {pipeline_mode = #tpu.pipeline_mode<synchronous>, transform_indices = @transform_1, window_bounds = array<i64: 50, 32>}, {pipeline_mode = #tpu.pipeline_mode<synchronous>, transform_indices = @transform_2, window_bounds = array<i64: 8, 32>}, {pipeline_mode = #tpu.pipeline_mode<synchronous>, transform_indices = @transform_3, window_bounds = array<i64: 2, 32, 96>}, {pipeline_mode = #tpu.pipeline_mode<synchronous>, transform_indices = @transform_4, window_bounds = array<i64: 2, 1, 96>}, {pipeline_mode = #tpu.pipeline_mode<synchronous>, transform_indices = @transform_5, window_bounds = array<i64: 2, 4, 8, 32>}, {pipeline_mode = #tpu.pipeline_mode<synchronous>, transform_indices = @transform_6, window_bounds = array<i64: 2, 1, 32>}, {pipeline_mode = #tpu.pipeline_mode<synchronous>, transform_indices = @transform_7, window_bounds = array<i64: 2, 1, 32>}, {pipeline_mode = #tpu.pipeline_mode<synchronous>, transform_indices = @transform_8, window_bounds = array<i64: 2, 1, 32>}, {pipeline_mode = #tpu.pipeline_mode<synchronous>, transform_indices = @transform_9, window_bounds = array<i64: 2, 32, 64>}, {pipeline_mode = #tpu.pipeline_mode<synchronous>, transform_indices = @transform_10, window_bounds = array<i64: 2, 1, 64>}, {pipeline_mode = #tpu.pipeline_mode<synchronous>, transform_indices = @transform_11, window_bounds = array<i64: 2, 64, 32>}, {pipeline_mode = #tpu.pipeline_mode<synchronous>, transform_indices = @transform_12, window_bounds = array<i64: 2, 1, 32>}, {pipeline_mode = #tpu.pipeline_mode<synchronous>, transform_indices = @transform_13, window_bounds = array<i64: 2, 1, 32>}, {pipeline_mode = #tpu.pipeline_mode<synchronous>, transform_indices = @transform_14, window_bounds = array<i64: 2, 1, 32>}, {pipeline_mode = #tpu.pipeline_mode<synchronous>, transform_indices = @transform_15, window_bounds = array<i64: 32, 96>}, {pipeline_mode = #tpu.pipeline_mode<synchronous>, transform_indices = @transform_16, window_bounds = array<i64: 1, 96>}, {pipeline_mode = #tpu.pipeline_mode<synchronous>, transform_indices = @transform_17, window_bounds = array<i64: 4, 8, 32>}, {pipeline_mode = #tpu.pipeline_mode<synchronous>, transform_indices = @transform_18, window_bounds = array<i64: 1, 32>}, {pipeline_mode = #tpu.pipeline_mode<synchronous>, transform_indices = @transform_19, window_bounds = array<i64: 32, 15>}, {pipeline_mode = #tpu.pipeline_mode<synchronous>, transform_indices = @transform_20, window_bounds = array<i64: 1, 15>}, {transform_indices = @transform_21, window_bounds = array<i64: 1, 1, 15>}]} {
    %0 = tpu.iota {dimensions = array<i32: 1>} : vector<8x50xi32>
    %c0 = arith.constant 0 : index
    %c0_0 = arith.constant 0 : index
    %1 = vector.load %arg1[%c0, %c0_0] : memref<8x1xi32, #tpu.memory_space<vmem>>, vector<8x1xi32>
    %2 = vector.broadcast %1 : vector<8x1xi32> to vector<8x50xi32>
    %3 = arith.cmpi eq, %2, %0 : vector<8x50xi32>
    %4 = arith.extui %3 : vector<8x50xi1> to vector<8x50xi32>
    %5 = arith.sitofp %4 : vector<8x50xi32> to vector<8x50xf32>
    %6 = arith.truncf %5 : vector<8x50xf32> to vector<8x50xbf16>
    %c0_1 = arith.constant 0 : index
    %c0_2 = arith.constant 0 : index
    %7 = vector.load %arg2[%c0_1, %c0_2] : memref<50x32xbf16, #tpu.memory_space<vmem>>, vector<50x32xbf16>
    %cst = arith.constant dense<0.000000e+00> : vector<8x32xf32>
    %8 = tpu.matmul %6, %7, %cst {dimension_numbers = #tpu.dot_dimension_numbers<[1], [0], [0], [1], [0, 0, 1, 1], [], []>} : vector<8x50xbf16>, vector<50x32xbf16>, vector<8x32xf32> -> vector<8x32xf32>
    %c0_3 = arith.constant 0 : index
    %c0_4 = arith.constant 0 : index
    %9 = vector.load %arg3[%c0_3, %c0_4] : memref<8x32xf32, #tpu.memory_space<vmem>>, vector<8x32xf32>
    %10 = arith.addf %8, %9 : vector<8x32xf32>
    %c0_5 = arith.constant 0 : index
    %c0_6 = arith.constant 0 : index
    %c0_7 = arith.constant 0 : index
    %11 = vector.load %arg4[%c0_5, %c0_6, %c0_7] : memref<2x32x96xbf16, #tpu.memory_space<vmem>>, vector<1x32x96xbf16>
    %12 = vector.shape_cast %11 : vector<1x32x96xbf16> to vector<32x96xbf16>
    %c0_8 = arith.constant 0 : index
    %c0_9 = arith.constant 0 : index
    %c0_10 = arith.constant 0 : index
    %13 = vector.load %arg5[%c0_8, %c0_9, %c0_10] : memref<2x1x96xf32, #tpu.memory_space<vmem>>, vector<1x1x96xf32>
    %14 = vector.shape_cast %13 : vector<1x1x96xf32> to vector<1x96xf32>
    %c0_11 = arith.constant 0 : index
    %c0_12 = arith.constant 0 : index
    %c0_13 = arith.constant 0 : index
    %c0_14 = arith.constant 0 : index
    %15 = vector.load %arg6[%c0_11, %c0_12, %c0_13, %c0_14] : memref<2x4x8x32xbf16, #tpu.memory_space<vmem>>, vector<1x4x8x32xbf16>
    %16 = vector.shape_cast %15 : vector<1x4x8x32xbf16> to vector<4x8x32xbf16>
    %c0_15 = arith.constant 0 : index
    %c0_16 = arith.constant 0 : index
    %c0_17 = arith.constant 0 : index
    %17 = vector.load %arg7[%c0_15, %c0_16, %c0_17] : memref<2x1x32xf32, #tpu.memory_space<vmem>>, vector<1x1x32xf32>
    %18 = vector.shape_cast %17 : vector<1x1x32xf32> to vector<1x32xf32>
    %19 = arith.truncf %10 : vector<8x32xf32> to vector<8x32xbf16>
    %cst_18 = arith.constant dense<0.000000e+00> : vector<8x96xf32>
    %20 = tpu.matmul %19, %12, %cst_18 {dimension_numbers = #tpu.dot_dimension_numbers<[1], [0], [0], [1], [0, 0, 1, 1], [], []>} : vector<8x32xbf16>, vector<32x96xbf16>, vector<8x96xf32> -> vector<8x96xf32>
    %21 = vector.broadcast %14 : vector<1x96xf32> to vector<8x96xf32>
    %22 = arith.addf %20, %21 : vector<8x96xf32>
    %23 = vector.extract_strided_slice %22 {offsets = [0, 0], sizes = [8, 32], strides = [1, 1]} : vector<8x96xf32> to vector<8x32xf32>
    %24 = vector.extract_strided_slice %23 {offsets = [0, 0], sizes = [8, 8], strides = [1, 1]} : vector<8x32xf32> to vector<8x8xf32>
    %25 = vector.extract_strided_slice %23 {offsets = [0, 8], sizes = [8, 8], strides = [1, 1]} : vector<8x32xf32> to vector<8x8xf32>
    %26 = vector.extract_strided_slice %23 {offsets = [0, 16], sizes = [8, 8], strides = [1, 1]} : vector<8x32xf32> to vector<8x8xf32>
    %27 = vector.extract_strided_slice %23 {offsets = [0, 24], sizes = [8, 8], strides = [1, 1]} : vector<8x32xf32> to vector<8x8xf32>
    %28 = vector.shape_cast %24 : vector<8x8xf32> to vector<1x8x8xf32>
    %29 = vector.shape_cast %25 : vector<8x8xf32> to vector<1x8x8xf32>
    %30 = vector.shape_cast %26 : vector<8x8xf32> to vector<1x8x8xf32>
    %31 = vector.shape_cast %27 : vector<8x8xf32> to vector<1x8x8xf32>
    %32 = tpu.concatenate %28, %29, %30, %31 in 0 : vector<1x8x8xf32>, vector<1x8x8xf32>, vector<1x8x8xf32>, vector<1x8x8xf32> -> vector<4x8x8xf32>
    %33 = arith.truncf %32 : vector<4x8x8xf32> to vector<4x8x8xbf16>
    %34 = vector.extract_strided_slice %22 {offsets = [0, 32], sizes = [8, 32], strides = [1, 1]} : vector<8x96xf32> to vector<8x32xf32>
    %35 = vector.extract_strided_slice %34 {offsets = [0, 0], sizes = [8, 8], strides = [1, 1]} : vector<8x32xf32> to vector<8x8xf32>
    %36 = vector.extract_strided_slice %34 {offsets = [0, 8], sizes = [8, 8], strides = [1, 1]} : vector<8x32xf32> to vector<8x8xf32>
    %37 = vector.extract_strided_slice %34 {offsets = [0, 16], sizes = [8, 8], strides = [1, 1]} : vector<8x32xf32> to vector<8x8xf32>
    %38 = vector.extract_strided_slice %34 {offsets = [0, 24], sizes = [8, 8], strides = [1, 1]} : vector<8x32xf32> to vector<8x8xf32>
    %39 = vector.shape_cast %35 : vector<8x8xf32> to vector<1x8x8xf32>
    %40 = vector.shape_cast %36 : vector<8x8xf32> to vector<1x8x8xf32>
    %41 = vector.shape_cast %37 : vector<8x8xf32> to vector<1x8x8xf32>
    %42 = vector.shape_cast %38 : vector<8x8xf32> to vector<1x8x8xf32>
    %43 = tpu.concatenate %39, %40, %41, %42 in 0 : vector<1x8x8xf32>, vector<1x8x8xf32>, vector<1x8x8xf32>, vector<1x8x8xf32> -> vector<4x8x8xf32>
    %44 = arith.truncf %43 : vector<4x8x8xf32> to vector<4x8x8xbf16>
    %45 = vector.extract_strided_slice %22 {offsets = [0, 64], sizes = [8, 32], strides = [1, 1]} : vector<8x96xf32> to vector<8x32xf32>
    %46 = vector.extract_strided_slice %45 {offsets = [0, 0], sizes = [8, 8], strides = [1, 1]} : vector<8x32xf32> to vector<8x8xf32>
    %47 = vector.extract_strided_slice %45 {offsets = [0, 8], sizes = [8, 8], strides = [1, 1]} : vector<8x32xf32> to vector<8x8xf32>
    %48 = vector.extract_strided_slice %45 {offsets = [0, 16], sizes = [8, 8], strides = [1, 1]} : vector<8x32xf32> to vector<8x8xf32>
    %49 = vector.extract_strided_slice %45 {offsets = [0, 24], sizes = [8, 8], strides = [1, 1]} : vector<8x32xf32> to vector<8x8xf32>
    %50 = vector.shape_cast %46 : vector<8x8xf32> to vector<1x8x8xf32>
    %51 = vector.shape_cast %47 : vector<8x8xf32> to vector<1x8x8xf32>
    %52 = vector.shape_cast %48 : vector<8x8xf32> to vector<1x8x8xf32>
    %53 = vector.shape_cast %49 : vector<8x8xf32> to vector<1x8x8xf32>
    %54 = tpu.concatenate %50, %51, %52, %53 in 0 : vector<1x8x8xf32>, vector<1x8x8xf32>, vector<1x8x8xf32>, vector<1x8x8xf32> -> vector<4x8x8xf32>
    %55 = arith.truncf %54 : vector<4x8x8xf32> to vector<4x8x8xbf16>
    "tpu.trace_start"() <{level = 10 : i32, message = "htd,hsd->hts"}> : () -> ()
    %cst_19 = arith.constant dense<0.000000e+00> : vector<4x8x8xf32>
    %56 = tpu.matmul %33, %44, %cst_19 {dimension_numbers = #tpu.dot_dimension_numbers<[2], [2], [1], [1], [0, 0, 0, 1, 1, 1], [0], [0]>} : vector<4x8x8xbf16>, vector<4x8x8xbf16>, vector<4x8x8xf32> -> vector<4x8x8xf32>
    "tpu.trace_stop"() : () -> ()
    %cst_20 = arith.constant 0.353553385 : f32
    %57 = vector.broadcast %cst_20 : f32 to vector<4x8x8xf32>
    %58 = arith.mulf %56, %57 : vector<4x8x8xf32>
    %cst_21 = arith.constant dense<0xFF800000> : vector<4x8xf32>
    %59 = vector.multi_reduction <maximumf>, %58, %cst_21 [2] : vector<4x8x8xf32> to vector<4x8xf32>
    %60 = vector.shape_cast %59 : vector<4x8xf32> to vector<4x8x1xf32>
    %61 = vector.broadcast %60 : vector<4x8x1xf32> to vector<4x8x8xf32>
    %62 = arith.subf %58, %61 : vector<4x8x8xf32>
    %63 = math.exp %62 : vector<4x8x8xf32>
    %cst_22 = arith.constant dense<0.000000e+00> : vector<4x8xf32>
    %64 = vector.multi_reduction <add>, %63, %cst_22 [2] : vector<4x8x8xf32> to vector<4x8xf32>
    %65 = vector.shape_cast %64 : vector<4x8xf32> to vector<4x8x1xf32>
    %66 = tpu.reciprocal %65 {approx = true} : vector<4x8x1xf32> -> vector<4x8x1xf32>
    %67 = vector.broadcast %66 : vector<4x8x1xf32> to vector<4x8x8xf32>
    %68 = arith.mulf %63, %67 : vector<4x8x8xf32>
    %69 = arith.truncf %68 : vector<4x8x8xf32> to vector<4x8x8xbf16>
    "tpu.trace_start"() <{level = 10 : i32, message = "hts,hsd->htd"}> : () -> ()
    %cst_23 = arith.constant dense<0.000000e+00> : vector<4x8x8xf32>
    %70 = tpu.matmul %69, %55, %cst_23 {dimension_numbers = #tpu.dot_dimension_numbers<[2], [1], [1], [2], [0, 0, 0, 1, 1, 2], [0], [0]>} : vector<4x8x8xbf16>, vector<4x8x8xbf16>, vector<4x8x8xf32> -> vector<4x8x8xf32>
    "tpu.trace_stop"() : () -> ()
    %71 = arith.truncf %70 : vector<4x8x8xf32> to vector<4x8x8xbf16>
    "tpu.trace_start"() <{level = 10 : i32, message = "htd,hdo->hto"}> : () -> ()
    %cst_24 = arith.constant dense<0.000000e+00> : vector<4x8x32xf32>
    %72 = tpu.matmul %71, %16, %cst_24 {dimension_numbers = #tpu.dot_dimension_numbers<[2], [1], [1], [2], [0, 0, 0, 1, 1, 2], [0], [0]>} : vector<4x8x8xbf16>, vector<4x8x32xbf16>, vector<4x8x32xf32> -> vector<4x8x32xf32>
    "tpu.trace_stop"() : () -> ()
    %cst_25 = arith.constant dense<0.000000e+00> : vector<8x32xf32>
    %73 = vector.multi_reduction <add>, %72, %cst_25 [0] : vector<4x8x32xf32> to vector<8x32xf32>
    %74 = vector.broadcast %18 : vector<1x32xf32> to vector<8x32xf32>
    %75 = arith.addf %73, %74 : vector<8x32xf32>
    %76 = arith.addf %10, %75 : vector<8x32xf32>
    %c0_26 = arith.constant 0 : index
    %c0_27 = arith.constant 0 : index
    %c0_28 = arith.constant 0 : index
    %77 = vector.load %arg8[%c0_26, %c0_27, %c0_28] : memref<2x1x32xf32, #tpu.memory_space<vmem>>, vector<1x1x32xf32>
    %78 = vector.shape_cast %77 : vector<1x1x32xf32> to vector<1x32xf32>
    %c0_29 = arith.constant 0 : index
    %c0_30 = arith.constant 0 : index
    %c0_31 = arith.constant 0 : index
    %79 = vector.load %arg9[%c0_29, %c0_30, %c0_31] : memref<2x1x32xf32, #tpu.memory_space<vmem>>, vector<1x1x32xf32>
    %80 = vector.shape_cast %79 : vector<1x1x32xf32> to vector<1x32xf32>
    %cst_32 = arith.constant dense<0.000000e+00> : vector<8xf32>
    %81 = vector.multi_reduction <add>, %76, %cst_32 [1] : vector<8x32xf32> to vector<8xf32>
    %82 = vector.shape_cast %81 : vector<8xf32> to vector<8x1xf32>
    %cst_33 = arith.constant 3.200000e+01 : f32
    %83 = vector.broadcast %cst_33 : f32 to vector<8x1xf32>
    %84 = arith.divf %82, %83 : vector<8x1xf32>
    %85 = vector.broadcast %84 : vector<8x1xf32> to vector<8x32xf32>
    %86 = arith.subf %76, %85 : vector<8x32xf32>
    %87 = arith.mulf %86, %86 : vector<8x32xf32>
    %cst_34 = arith.constant dense<0.000000e+00> : vector<8xf32>
    %88 = vector.multi_reduction <add>, %87, %cst_34 [1] : vector<8x32xf32> to vector<8xf32>
    %89 = vector.shape_cast %88 : vector<8xf32> to vector<8x1xf32>
    %cst_35 = arith.constant 3.200000e+01 : f32
    %90 = vector.broadcast %cst_35 : f32 to vector<8x1xf32>
    %91 = arith.divf %89, %90 : vector<8x1xf32>
    %92 = vector.broadcast %84 : vector<8x1xf32> to vector<8x32xf32>
    %93 = arith.subf %76, %92 : vector<8x32xf32>
    %cst_36 = arith.constant 9.99999974E-6 : f32
    %94 = vector.broadcast %cst_36 : f32 to vector<8x1xf32>
    %95 = arith.addf %91, %94 : vector<8x1xf32>
    %96 = math.rsqrt %95 : vector<8x1xf32>
    %97 = vector.broadcast %96 : vector<8x1xf32> to vector<8x32xf32>
    %98 = arith.mulf %93, %97 : vector<8x32xf32>
    %99 = vector.broadcast %78 : vector<1x32xf32> to vector<8x32xf32>
    %100 = arith.mulf %98, %99 : vector<8x32xf32>
    %101 = vector.broadcast %80 : vector<1x32xf32> to vector<8x32xf32>
    %102 = arith.addf %100, %101 : vector<8x32xf32>
    %103 = arith.truncf %102 : vector<8x32xf32> to vector<8x32xbf16>
    %c0_37 = arith.constant 0 : index
    %c0_38 = arith.constant 0 : index
    %c0_39 = arith.constant 0 : index
    %104 = vector.load %arg10[%c0_37, %c0_38, %c0_39] : memref<2x32x64xbf16, #tpu.memory_space<vmem>>, vector<1x32x64xbf16>
    %105 = vector.shape_cast %104 : vector<1x32x64xbf16> to vector<32x64xbf16>
    %cst_40 = arith.constant dense<0.000000e+00> : vector<8x64xf32>
    %106 = tpu.matmul %103, %105, %cst_40 {dimension_numbers = #tpu.dot_dimension_numbers<[1], [0], [0], [1], [0, 0, 1, 1], [], []>} : vector<8x32xbf16>, vector<32x64xbf16>, vector<8x64xf32> -> vector<8x64xf32>
    %c0_41 = arith.constant 0 : index
    %c0_42 = arith.constant 0 : index
    %c0_43 = arith.constant 0 : index
    %107 = vector.load %arg11[%c0_41, %c0_42, %c0_43] : memref<2x1x64xf32, #tpu.memory_space<vmem>>, vector<1x1x64xf32>
    %108 = vector.shape_cast %107 : vector<1x1x64xf32> to vector<1x64xf32>
    %109 = vector.broadcast %108 : vector<1x64xf32> to vector<8x64xf32>
    %110 = arith.addf %106, %109 : vector<8x64xf32>
    %cst_44 = arith.constant 0.000000e+00 : f32
    %111 = vector.broadcast %cst_44 : f32 to vector<8x64xf32>
    %112 = arith.maximumf %110, %111 : vector<8x64xf32>
    %113 = arith.truncf %112 : vector<8x64xf32> to vector<8x64xbf16>
    %c0_45 = arith.constant 0 : index
    %c0_46 = arith.constant 0 : index
    %c0_47 = arith.constant 0 : index
    %114 = vector.load %arg12[%c0_45, %c0_46, %c0_47] : memref<2x64x32xbf16, #tpu.memory_space<vmem>>, vector<1x64x32xbf16>
    %115 = vector.shape_cast %114 : vector<1x64x32xbf16> to vector<64x32xbf16>
    %cst_48 = arith.constant dense<0.000000e+00> : vector<8x32xf32>
    %116 = tpu.matmul %113, %115, %cst_48 {dimension_numbers = #tpu.dot_dimension_numbers<[1], [0], [0], [1], [0, 0, 1, 1], [], []>} : vector<8x64xbf16>, vector<64x32xbf16>, vector<8x32xf32> -> vector<8x32xf32>
    %c0_49 = arith.constant 0 : index
    %c0_50 = arith.constant 0 : index
    %c0_51 = arith.constant 0 : index
    %117 = vector.load %arg13[%c0_49, %c0_50, %c0_51] : memref<2x1x32xf32, #tpu.memory_space<vmem>>, vector<1x1x32xf32>
    %118 = vector.shape_cast %117 : vector<1x1x32xf32> to vector<1x32xf32>
    %119 = vector.broadcast %118 : vector<1x32xf32> to vector<8x32xf32>
    %120 = arith.addf %116, %119 : vector<8x32xf32>
    %121 = arith.addf %102, %120 : vector<8x32xf32>
    %c0_52 = arith.constant 0 : index
    %c0_53 = arith.constant 0 : index
    %c0_54 = arith.constant 0 : index
    %122 = vector.load %arg14[%c0_52, %c0_53, %c0_54] : memref<2x1x32xf32, #tpu.memory_space<vmem>>, vector<1x1x32xf32>
    %123 = vector.shape_cast %122 : vector<1x1x32xf32> to vector<1x32xf32>
    %c0_55 = arith.constant 0 : index
    %c0_56 = arith.constant 0 : index
    %c0_57 = arith.constant 0 : index
    %124 = vector.load %arg15[%c0_55, %c0_56, %c0_57] : memref<2x1x32xf32, #tpu.memory_space<vmem>>, vector<1x1x32xf32>
    %125 = vector.shape_cast %124 : vector<1x1x32xf32> to vector<1x32xf32>
    %cst_58 = arith.constant dense<0.000000e+00> : vector<8xf32>
    %126 = vector.multi_reduction <add>, %121, %cst_58 [1] : vector<8x32xf32> to vector<8xf32>
    %127 = vector.shape_cast %126 : vector<8xf32> to vector<8x1xf32>
    %cst_59 = arith.constant 3.200000e+01 : f32
    %128 = vector.broadcast %cst_59 : f32 to vector<8x1xf32>
    %129 = arith.divf %127, %128 : vector<8x1xf32>
    %130 = vector.broadcast %129 : vector<8x1xf32> to vector<8x32xf32>
    %131 = arith.subf %121, %130 : vector<8x32xf32>
    %132 = arith.mulf %131, %131 : vector<8x32xf32>
    %cst_60 = arith.constant dense<0.000000e+00> : vector<8xf32>
    %133 = vector.multi_reduction <add>, %132, %cst_60 [1] : vector<8x32xf32> to vector<8xf32>
    %134 = vector.shape_cast %133 : vector<8xf32> to vector<8x1xf32>
    %cst_61 = arith.constant 3.200000e+01 : f32
    %135 = vector.broadcast %cst_61 : f32 to vector<8x1xf32>
    %136 = arith.divf %134, %135 : vector<8x1xf32>
    %137 = vector.broadcast %129 : vector<8x1xf32> to vector<8x32xf32>
    %138 = arith.subf %121, %137 : vector<8x32xf32>
    %cst_62 = arith.constant 9.99999974E-6 : f32
    %139 = vector.broadcast %cst_62 : f32 to vector<8x1xf32>
    %140 = arith.addf %136, %139 : vector<8x1xf32>
    %141 = math.rsqrt %140 : vector<8x1xf32>
    %142 = vector.broadcast %141 : vector<8x1xf32> to vector<8x32xf32>
    %143 = arith.mulf %138, %142 : vector<8x32xf32>
    %144 = vector.broadcast %123 : vector<1x32xf32> to vector<8x32xf32>
    %145 = arith.mulf %143, %144 : vector<8x32xf32>
    %146 = vector.broadcast %125 : vector<1x32xf32> to vector<8x32xf32>
    %147 = arith.addf %145, %146 : vector<8x32xf32>
    %c1 = arith.constant 1 : index
    %c0_63 = arith.constant 0 : index
    %c0_64 = arith.constant 0 : index
    %148 = vector.load %arg4[%c1, %c0_63, %c0_64] : memref<2x32x96xbf16, #tpu.memory_space<vmem>>, vector<1x32x96xbf16>
    %149 = vector.shape_cast %148 : vector<1x32x96xbf16> to vector<32x96xbf16>
    %c1_65 = arith.constant 1 : index
    %c0_66 = arith.constant 0 : index
    %c0_67 = arith.constant 0 : index
    %150 = vector.load %arg5[%c1_65, %c0_66, %c0_67] : memref<2x1x96xf32, #tpu.memory_space<vmem>>, vector<1x1x96xf32>
    %151 = vector.shape_cast %150 : vector<1x1x96xf32> to vector<1x96xf32>
    %c1_68 = arith.constant 1 : index
    %c0_69 = arith.constant 0 : index
    %c0_70 = arith.constant 0 : index
    %c0_71 = arith.constant 0 : index
    %152 = vector.load %arg6[%c1_68, %c0_69, %c0_70, %c0_71] : memref<2x4x8x32xbf16, #tpu.memory_space<vmem>>, vector<1x4x8x32xbf16>
    %153 = vector.shape_cast %152 : vector<1x4x8x32xbf16> to vector<4x8x32xbf16>
    %c1_72 = arith.constant 1 : index
    %c0_73 = arith.constant 0 : index
    %c0_74 = arith.constant 0 : index
    %154 = vector.load %arg7[%c1_72, %c0_73, %c0_74] : memref<2x1x32xf32, #tpu.memory_space<vmem>>, vector<1x1x32xf32>
    %155 = vector.shape_cast %154 : vector<1x1x32xf32> to vector<1x32xf32>
    %156 = arith.truncf %147 : vector<8x32xf32> to vector<8x32xbf16>
    %cst_75 = arith.constant dense<0.000000e+00> : vector<8x96xf32>
    %157 = tpu.matmul %156, %149, %cst_75 {dimension_numbers = #tpu.dot_dimension_numbers<[1], [0], [0], [1], [0, 0, 1, 1], [], []>} : vector<8x32xbf16>, vector<32x96xbf16>, vector<8x96xf32> -> vector<8x96xf32>
    %158 = vector.broadcast %151 : vector<1x96xf32> to vector<8x96xf32>
    %159 = arith.addf %157, %158 : vector<8x96xf32>
    %160 = vector.extract_strided_slice %159 {offsets = [0, 0], sizes = [8, 32], strides = [1, 1]} : vector<8x96xf32> to vector<8x32xf32>
    %161 = vector.extract_strided_slice %160 {offsets = [0, 0], sizes = [8, 8], strides = [1, 1]} : vector<8x32xf32> to vector<8x8xf32>
    %162 = vector.extract_strided_slice %160 {offsets = [0, 8], sizes = [8, 8], strides = [1, 1]} : vector<8x32xf32> to vector<8x8xf32>
    %163 = vector.extract_strided_slice %160 {offsets = [0, 16], sizes = [8, 8], strides = [1, 1]} : vector<8x32xf32> to vector<8x8xf32>
    %164 = vector.extract_strided_slice %160 {offsets = [0, 24], sizes = [8, 8], strides = [1, 1]} : vector<8x32xf32> to vector<8x8xf32>
    %165 = vector.shape_cast %161 : vector<8x8xf32> to vector<1x8x8xf32>
    %166 = vector.shape_cast %162 : vector<8x8xf32> to vector<1x8x8xf32>
    %167 = vector.shape_cast %163 : vector<8x8xf32> to vector<1x8x8xf32>
    %168 = vector.shape_cast %164 : vector<8x8xf32> to vector<1x8x8xf32>
    %169 = tpu.concatenate %165, %166, %167, %168 in 0 : vector<1x8x8xf32>, vector<1x8x8xf32>, vector<1x8x8xf32>, vector<1x8x8xf32> -> vector<4x8x8xf32>
    %170 = arith.truncf %169 : vector<4x8x8xf32> to vector<4x8x8xbf16>
    %171 = vector.extract_strided_slice %159 {offsets = [0, 32], sizes = [8, 32], strides = [1, 1]} : vector<8x96xf32> to vector<8x32xf32>
    %172 = vector.extract_strided_slice %171 {offsets = [0, 0], sizes = [8, 8], strides = [1, 1]} : vector<8x32xf32> to vector<8x8xf32>
    %173 = vector.extract_strided_slice %171 {offsets = [0, 8], sizes = [8, 8], strides = [1, 1]} : vector<8x32xf32> to vector<8x8xf32>
    %174 = vector.extract_strided_slice %171 {offsets = [0, 16], sizes = [8, 8], strides = [1, 1]} : vector<8x32xf32> to vector<8x8xf32>
    %175 = vector.extract_strided_slice %171 {offsets = [0, 24], sizes = [8, 8], strides = [1, 1]} : vector<8x32xf32> to vector<8x8xf32>
    %176 = vector.shape_cast %172 : vector<8x8xf32> to vector<1x8x8xf32>
    %177 = vector.shape_cast %173 : vector<8x8xf32> to vector<1x8x8xf32>
    %178 = vector.shape_cast %174 : vector<8x8xf32> to vector<1x8x8xf32>
    %179 = vector.shape_cast %175 : vector<8x8xf32> to vector<1x8x8xf32>
    %180 = tpu.concatenate %176, %177, %178, %179 in 0 : vector<1x8x8xf32>, vector<1x8x8xf32>, vector<1x8x8xf32>, vector<1x8x8xf32> -> vector<4x8x8xf32>
    %181 = arith.truncf %180 : vector<4x8x8xf32> to vector<4x8x8xbf16>
    %182 = vector.extract_strided_slice %159 {offsets = [0, 64], sizes = [8, 32], strides = [1, 1]} : vector<8x96xf32> to vector<8x32xf32>
    %183 = vector.extract_strided_slice %182 {offsets = [0, 0], sizes = [8, 8], strides = [1, 1]} : vector<8x32xf32> to vector<8x8xf32>
    %184 = vector.extract_strided_slice %182 {offsets = [0, 8], sizes = [8, 8], strides = [1, 1]} : vector<8x32xf32> to vector<8x8xf32>
    %185 = vector.extract_strided_slice %182 {offsets = [0, 16], sizes = [8, 8], strides = [1, 1]} : vector<8x32xf32> to vector<8x8xf32>
    %186 = vector.extract_strided_slice %182 {offsets = [0, 24], sizes = [8, 8], strides = [1, 1]} : vector<8x32xf32> to vector<8x8xf32>
    %187 = vector.shape_cast %183 : vector<8x8xf32> to vector<1x8x8xf32>
    %188 = vector.shape_cast %184 : vector<8x8xf32> to vector<1x8x8xf32>
    %189 = vector.shape_cast %185 : vector<8x8xf32> to vector<1x8x8xf32>
    %190 = vector.shape_cast %186 : vector<8x8xf32> to vector<1x8x8xf32>
    %191 = tpu.concatenate %187, %188, %189, %190 in 0 : vector<1x8x8xf32>, vector<1x8x8xf32>, vector<1x8x8xf32>, vector<1x8x8xf32> -> vector<4x8x8xf32>
    %192 = arith.truncf %191 : vector<4x8x8xf32> to vector<4x8x8xbf16>
    "tpu.trace_start"() <{level = 10 : i32, message = "htd,hsd->hts"}> : () -> ()
    %cst_76 = arith.constant dense<0.000000e+00> : vector<4x8x8xf32>
    %193 = tpu.matmul %170, %181, %cst_76 {dimension_numbers = #tpu.dot_dimension_numbers<[2], [2], [1], [1], [0, 0, 0, 1, 1, 1], [0], [0]>} : vector<4x8x8xbf16>, vector<4x8x8xbf16>, vector<4x8x8xf32> -> vector<4x8x8xf32>
    "tpu.trace_stop"() : () -> ()
    %cst_77 = arith.constant 0.353553385 : f32
    %194 = vector.broadcast %cst_77 : f32 to vector<4x8x8xf32>
    %195 = arith.mulf %193, %194 : vector<4x8x8xf32>
    %cst_78 = arith.constant dense<0xFF800000> : vector<4x8xf32>
    %196 = vector.multi_reduction <maximumf>, %195, %cst_78 [2] : vector<4x8x8xf32> to vector<4x8xf32>
    %197 = vector.shape_cast %196 : vector<4x8xf32> to vector<4x8x1xf32>
    %198 = vector.broadcast %197 : vector<4x8x1xf32> to vector<4x8x8xf32>
    %199 = arith.subf %195, %198 : vector<4x8x8xf32>
    %200 = math.exp %199 : vector<4x8x8xf32>
    %cst_79 = arith.constant dense<0.000000e+00> : vector<4x8xf32>
    %201 = vector.multi_reduction <add>, %200, %cst_79 [2] : vector<4x8x8xf32> to vector<4x8xf32>
    %202 = vector.shape_cast %201 : vector<4x8xf32> to vector<4x8x1xf32>
    %203 = tpu.reciprocal %202 {approx = true} : vector<4x8x1xf32> -> vector<4x8x1xf32>
    %204 = vector.broadcast %203 : vector<4x8x1xf32> to vector<4x8x8xf32>
    %205 = arith.mulf %200, %204 : vector<4x8x8xf32>
    %206 = arith.truncf %205 : vector<4x8x8xf32> to vector<4x8x8xbf16>
    "tpu.trace_start"() <{level = 10 : i32, message = "hts,hsd->htd"}> : () -> ()
    %cst_80 = arith.constant dense<0.000000e+00> : vector<4x8x8xf32>
    %207 = tpu.matmul %206, %192, %cst_80 {dimension_numbers = #tpu.dot_dimension_numbers<[2], [1], [1], [2], [0, 0, 0, 1, 1, 2], [0], [0]>} : vector<4x8x8xbf16>, vector<4x8x8xbf16>, vector<4x8x8xf32> -> vector<4x8x8xf32>
    "tpu.trace_stop"() : () -> ()
    %208 = arith.truncf %207 : vector<4x8x8xf32> to vector<4x8x8xbf16>
    "tpu.trace_start"() <{level = 10 : i32, message = "htd,hdo->hto"}> : () -> ()
    %cst_81 = arith.constant dense<0.000000e+00> : vector<4x8x32xf32>
    %209 = tpu.matmul %208, %153, %cst_81 {dimension_numbers = #tpu.dot_dimension_numbers<[2], [1], [1], [2], [0, 0, 0, 1, 1, 2], [0], [0]>} : vector<4x8x8xbf16>, vector<4x8x32xbf16>, vector<4x8x32xf32> -> vector<4x8x32xf32>
    "tpu.trace_stop"() : () -> ()
    %cst_82 = arith.constant dense<0.000000e+00> : vector<8x32xf32>
    %210 = vector.multi_reduction <add>, %209, %cst_82 [0] : vector<4x8x32xf32> to vector<8x32xf32>
    %211 = vector.broadcast %155 : vector<1x32xf32> to vector<8x32xf32>
    %212 = arith.addf %210, %211 : vector<8x32xf32>
    %213 = arith.addf %147, %212 : vector<8x32xf32>
    %c1_83 = arith.constant 1 : index
    %c0_84 = arith.constant 0 : index
    %c0_85 = arith.constant 0 : index
    %214 = vector.load %arg8[%c1_83, %c0_84, %c0_85] : memref<2x1x32xf32, #tpu.memory_space<vmem>>, vector<1x1x32xf32>
    %215 = vector.shape_cast %214 : vector<1x1x32xf32> to vector<1x32xf32>
    %c1_86 = arith.constant 1 : index
    %c0_87 = arith.constant 0 : index
    %c0_88 = arith.constant 0 : index
    %216 = vector.load %arg9[%c1_86, %c0_87, %c0_88] : memref<2x1x32xf32, #tpu.memory_space<vmem>>, vector<1x1x32xf32>
    %217 = vector.shape_cast %216 : vector<1x1x32xf32> to vector<1x32xf32>
    %cst_89 = arith.constant dense<0.000000e+00> : vector<8xf32>
    %218 = vector.multi_reduction <add>, %213, %cst_89 [1] : vector<8x32xf32> to vector<8xf32>
    %219 = vector.shape_cast %218 : vector<8xf32> to vector<8x1xf32>
    %cst_90 = arith.constant 3.200000e+01 : f32
    %220 = vector.broadcast %cst_90 : f32 to vector<8x1xf32>
    %221 = arith.divf %219, %220 : vector<8x1xf32>
    %222 = vector.broadcast %221 : vector<8x1xf32> to vector<8x32xf32>
    %223 = arith.subf %213, %222 : vector<8x32xf32>
    %224 = arith.mulf %223, %223 : vector<8x32xf32>
    %cst_91 = arith.constant dense<0.000000e+00> : vector<8xf32>
    %225 = vector.multi_reduction <add>, %224, %cst_91 [1] : vector<8x32xf32> to vector<8xf32>
    %226 = vector.shape_cast %225 : vector<8xf32> to vector<8x1xf32>
    %cst_92 = arith.constant 3.200000e+01 : f32
    %227 = vector.broadcast %cst_92 : f32 to vector<8x1xf32>
    %228 = arith.divf %226, %227 : vector<8x1xf32>
    %229 = vector.broadcast %221 : vector<8x1xf32> to vector<8x32xf32>
    %230 = arith.subf %213, %229 : vector<8x32xf32>
    %cst_93 = arith.constant 9.99999974E-6 : f32
    %231 = vector.broadcast %cst_93 : f32 to vector<8x1xf32>
    %232 = arith.addf %228, %231 : vector<8x1xf32>
    %233 = math.rsqrt %232 : vector<8x1xf32>
    %234 = vector.broadcast %233 : vector<8x1xf32> to vector<8x32xf32>
    %235 = arith.mulf %230, %234 : vector<8x32xf32>
    %236 = vector.broadcast %215 : vector<1x32xf32> to vector<8x32xf32>
    %237 = arith.mulf %235, %236 : vector<8x32xf32>
    %238 = vector.broadcast %217 : vector<1x32xf32> to vector<8x32xf32>
    %239 = arith.addf %237, %238 : vector<8x32xf32>
    %240 = arith.truncf %239 : vector<8x32xf32> to vector<8x32xbf16>
    %c1_94 = arith.constant 1 : index
    %c0_95 = arith.constant 0 : index
    %c0_96 = arith.constant 0 : index
    %241 = vector.load %arg10[%c1_94, %c0_95, %c0_96] : memref<2x32x64xbf16, #tpu.memory_space<vmem>>, vector<1x32x64xbf16>
    %242 = vector.shape_cast %241 : vector<1x32x64xbf16> to vector<32x64xbf16>
    %cst_97 = arith.constant dense<0.000000e+00> : vector<8x64xf32>
    %243 = tpu.matmul %240, %242, %cst_97 {dimension_numbers = #tpu.dot_dimension_numbers<[1], [0], [0], [1], [0, 0, 1, 1], [], []>} : vector<8x32xbf16>, vector<32x64xbf16>, vector<8x64xf32> -> vector<8x64xf32>
    %c1_98 = arith.constant 1 : index
    %c0_99 = arith.constant 0 : index
    %c0_100 = arith.constant 0 : index
    %244 = vector.load %arg11[%c1_98, %c0_99, %c0_100] : memref<2x1x64xf32, #tpu.memory_space<vmem>>, vector<1x1x64xf32>
    %245 = vector.shape_cast %244 : vector<1x1x64xf32> to vector<1x64xf32>
    %246 = vector.broadcast %245 : vector<1x64xf32> to vector<8x64xf32>
    %247 = arith.addf %243, %246 : vector<8x64xf32>
    %cst_101 = arith.constant 0.000000e+00 : f32
    %248 = vector.broadcast %cst_101 : f32 to vector<8x64xf32>
    %249 = arith.maximumf %247, %248 : vector<8x64xf32>
    %250 = arith.truncf %249 : vector<8x64xf32> to vector<8x64xbf16>
    %c1_102 = arith.constant 1 : index
    %c0_103 = arith.constant 0 : index
    %c0_104 = arith.constant 0 : index
    %251 = vector.load %arg12[%c1_102, %c0_103, %c0_104] : memref<2x64x32xbf16, #tpu.memory_space<vmem>>, vector<1x64x32xbf16>
    %252 = vector.shape_cast %251 : vector<1x64x32xbf16> to vector<64x32xbf16>
    %cst_105 = arith.constant dense<0.000000e+00> : vector<8x32xf32>
    %253 = tpu.matmul %250, %252, %cst_105 {dimension_numbers = #tpu.dot_dimension_numbers<[1], [0], [0], [1], [0, 0, 1, 1], [], []>} : vector<8x64xbf16>, vector<64x32xbf16>, vector<8x32xf32> -> vector<8x32xf32>
    %c1_106 = arith.constant 1 : index
    %c0_107 = arith.constant 0 : index
    %c0_108 = arith.constant 0 : index
    %254 = vector.load %arg13[%c1_106, %c0_107, %c0_108] : memref<2x1x32xf32, #tpu.memory_space<vmem>>, vector<1x1x32xf32>
    %255 = vector.shape_cast %254 : vector<1x1x32xf32> to vector<1x32xf32>
    %256 = vector.broadcast %255 : vector<1x32xf32> to vector<8x32xf32>
    %257 = arith.addf %253, %256 : vector<8x32xf32>
    %258 = arith.addf %239, %257 : vector<8x32xf32>
    %c1_109 = arith.constant 1 : index
    %c0_110 = arith.constant 0 : index
    %c0_111 = arith.constant 0 : index
    %259 = vector.load %arg14[%c1_109, %c0_110, %c0_111] : memref<2x1x32xf32, #tpu.memory_space<vmem>>, vector<1x1x32xf32>
    %260 = vector.shape_cast %259 : vector<1x1x32xf32> to vector<1x32xf32>
    %c1_112 = arith.constant 1 : index
    %c0_113 = arith.constant 0 : index
    %c0_114 = arith.constant 0 : index
    %261 = vector.load %arg15[%c1_112, %c0_113, %c0_114] : memref<2x1x32xf32, #tpu.memory_space<vmem>>, vector<1x1x32xf32>
    %262 = vector.shape_cast %261 : vector<1x1x32xf32> to vector<1x32xf32>
    %cst_115 = arith.constant dense<0.000000e+00> : vector<8xf32>
    %263 = vector.multi_reduction <add>, %258, %cst_115 [1] : vector<8x32xf32> to vector<8xf32>
    %264 = vector.shape_cast %263 : vector<8xf32> to vector<8x1xf32>
    %cst_116 = arith.constant 3.200000e+01 : f32
    %265 = vector.broadcast %cst_116 : f32 to vector<8x1xf32>
    %266 = arith.divf %264, %265 : vector<8x1xf32>
    %267 = vector.broadcast %266 : vector<8x1xf32> to vector<8x32xf32>
    %268 = arith.subf %258, %267 : vector<8x32xf32>
    %269 = arith.mulf %268, %268 : vector<8x32xf32>
    %cst_117 = arith.constant dense<0.000000e+00> : vector<8xf32>
    %270 = vector.multi_reduction <add>, %269, %cst_117 [1] : vector<8x32xf32> to vector<8xf32>
    %271 = vector.shape_cast %270 : vector<8xf32> to vector<8x1xf32>
    %cst_118 = arith.constant 3.200000e+01 : f32
    %272 = vector.broadcast %cst_118 : f32 to vector<8x1xf32>
    %273 = arith.divf %271, %272 : vector<8x1xf32>
    %274 = vector.broadcast %266 : vector<8x1xf32> to vector<8x32xf32>
    %275 = arith.subf %258, %274 : vector<8x32xf32>
    %cst_119 = arith.constant 9.99999974E-6 : f32
    %276 = vector.broadcast %cst_119 : f32 to vector<8x1xf32>
    %277 = arith.addf %273, %276 : vector<8x1xf32>
    %278 = math.rsqrt %277 : vector<8x1xf32>
    %279 = vector.broadcast %278 : vector<8x1xf32> to vector<8x32xf32>
    %280 = arith.mulf %275, %279 : vector<8x32xf32>
    %281 = vector.broadcast %260 : vector<1x32xf32> to vector<8x32xf32>
    %282 = arith.mulf %280, %281 : vector<8x32xf32>
    %283 = vector.broadcast %262 : vector<1x32xf32> to vector<8x32xf32>
    %284 = arith.addf %282, %283 : vector<8x32xf32>
    %c0_120 = arith.constant 0 : index
    %c0_121 = arith.constant 0 : index
    %285 = vector.load %arg16[%c0_120, %c0_121] : memref<32x96xbf16, #tpu.memory_space<vmem>>, vector<32x96xbf16>
    %c0_122 = arith.constant 0 : index
    %c0_123 = arith.constant 0 : index
    %286 = vector.load %arg17[%c0_122, %c0_123] : memref<1x96xf32, #tpu.memory_space<vmem>>, vector<1x96xf32>
    %c0_124 = arith.constant 0 : index
    %c0_125 = arith.constant 0 : index
    %c0_126 = arith.constant 0 : index
    %287 = vector.load %arg18[%c0_124, %c0_125, %c0_126] : memref<4x8x32xbf16, #tpu.memory_space<vmem>>, vector<4x8x32xbf16>
    %c0_127 = arith.constant 0 : index
    %c0_128 = arith.constant 0 : index
    %288 = vector.load %arg19[%c0_127, %c0_128] : memref<1x32xf32, #tpu.memory_space<vmem>>, vector<1x32xf32>
    %289 = arith.truncf %284 : vector<8x32xf32> to vector<8x32xbf16>
    %cst_129 = arith.constant dense<0.000000e+00> : vector<8x96xf32>
    %290 = tpu.matmul %289, %285, %cst_129 {dimension_numbers = #tpu.dot_dimension_numbers<[1], [0], [0], [1], [0, 0, 1, 1], [], []>} : vector<8x32xbf16>, vector<32x96xbf16>, vector<8x96xf32> -> vector<8x96xf32>
    %291 = vector.broadcast %286 : vector<1x96xf32> to vector<8x96xf32>
    %292 = arith.addf %290, %291 : vector<8x96xf32>
    %293 = vector.extract_strided_slice %292 {offsets = [0, 0], sizes = [8, 32], strides = [1, 1]} : vector<8x96xf32> to vector<8x32xf32>
    %294 = vector.extract_strided_slice %293 {offsets = [0, 0], sizes = [8, 8], strides = [1, 1]} : vector<8x32xf32> to vector<8x8xf32>
    %295 = vector.extract_strided_slice %293 {offsets = [0, 8], sizes = [8, 8], strides = [1, 1]} : vector<8x32xf32> to vector<8x8xf32>
    %296 = vector.extract_strided_slice %293 {offsets = [0, 16], sizes = [8, 8], strides = [1, 1]} : vector<8x32xf32> to vector<8x8xf32>
    %297 = vector.extract_strided_slice %293 {offsets = [0, 24], sizes = [8, 8], strides = [1, 1]} : vector<8x32xf32> to vector<8x8xf32>
    %298 = vector.shape_cast %294 : vector<8x8xf32> to vector<1x8x8xf32>
    %299 = vector.shape_cast %295 : vector<8x8xf32> to vector<1x8x8xf32>
    %300 = vector.shape_cast %296 : vector<8x8xf32> to vector<1x8x8xf32>
    %301 = vector.shape_cast %297 : vector<8x8xf32> to vector<1x8x8xf32>
    %302 = tpu.concatenate %298, %299, %300, %301 in 0 : vector<1x8x8xf32>, vector<1x8x8xf32>, vector<1x8x8xf32>, vector<1x8x8xf32> -> vector<4x8x8xf32>
    %303 = arith.truncf %302 : vector<4x8x8xf32> to vector<4x8x8xbf16>
    %304 = vector.extract_strided_slice %292 {offsets = [0, 32], sizes = [8, 32], strides = [1, 1]} : vector<8x96xf32> to vector<8x32xf32>
    %305 = vector.extract_strided_slice %304 {offsets = [0, 0], sizes = [8, 8], strides = [1, 1]} : vector<8x32xf32> to vector<8x8xf32>
    %306 = vector.extract_strided_slice %304 {offsets = [0, 8], sizes = [8, 8], strides = [1, 1]} : vector<8x32xf32> to vector<8x8xf32>
    %307 = vector.extract_strided_slice %304 {offsets = [0, 16], sizes = [8, 8], strides = [1, 1]} : vector<8x32xf32> to vector<8x8xf32>
    %308 = vector.extract_strided_slice %304 {offsets = [0, 24], sizes = [8, 8], strides = [1, 1]} : vector<8x32xf32> to vector<8x8xf32>
    %309 = vector.shape_cast %305 : vector<8x8xf32> to vector<1x8x8xf32>
    %310 = vector.shape_cast %306 : vector<8x8xf32> to vector<1x8x8xf32>
    %311 = vector.shape_cast %307 : vector<8x8xf32> to vector<1x8x8xf32>
    %312 = vector.shape_cast %308 : vector<8x8xf32> to vector<1x8x8xf32>
    %313 = tpu.concatenate %309, %310, %311, %312 in 0 : vector<1x8x8xf32>, vector<1x8x8xf32>, vector<1x8x8xf32>, vector<1x8x8xf32> -> vector<4x8x8xf32>
    %314 = arith.truncf %313 : vector<4x8x8xf32> to vector<4x8x8xbf16>
    %315 = vector.extract_strided_slice %292 {offsets = [0, 64], sizes = [8, 32], strides = [1, 1]} : vector<8x96xf32> to vector<8x32xf32>
    %316 = vector.extract_strided_slice %315 {offsets = [0, 0], sizes = [8, 8], strides = [1, 1]} : vector<8x32xf32> to vector<8x8xf32>
    %317 = vector.extract_strided_slice %315 {offsets = [0, 8], sizes = [8, 8], strides = [1, 1]} : vector<8x32xf32> to vector<8x8xf32>
    %318 = vector.extract_strided_slice %315 {offsets = [0, 16], sizes = [8, 8], strides = [1, 1]} : vector<8x32xf32> to vector<8x8xf32>
    %319 = vector.extract_strided_slice %315 {offsets = [0, 24], sizes = [8, 8], strides = [1, 1]} : vector<8x32xf32> to vector<8x8xf32>
    %320 = vector.shape_cast %316 : vector<8x8xf32> to vector<1x8x8xf32>
    %321 = vector.shape_cast %317 : vector<8x8xf32> to vector<1x8x8xf32>
    %322 = vector.shape_cast %318 : vector<8x8xf32> to vector<1x8x8xf32>
    %323 = vector.shape_cast %319 : vector<8x8xf32> to vector<1x8x8xf32>
    %324 = tpu.concatenate %320, %321, %322, %323 in 0 : vector<1x8x8xf32>, vector<1x8x8xf32>, vector<1x8x8xf32>, vector<1x8x8xf32> -> vector<4x8x8xf32>
    %325 = arith.truncf %324 : vector<4x8x8xf32> to vector<4x8x8xbf16>
    "tpu.trace_start"() <{level = 10 : i32, message = "htd,hsd->hts"}> : () -> ()
    %cst_130 = arith.constant dense<0.000000e+00> : vector<4x8x8xf32>
    %326 = tpu.matmul %303, %314, %cst_130 {dimension_numbers = #tpu.dot_dimension_numbers<[2], [2], [1], [1], [0, 0, 0, 1, 1, 1], [0], [0]>} : vector<4x8x8xbf16>, vector<4x8x8xbf16>, vector<4x8x8xf32> -> vector<4x8x8xf32>
    "tpu.trace_stop"() : () -> ()
    %cst_131 = arith.constant 0.353553385 : f32
    %327 = vector.broadcast %cst_131 : f32 to vector<4x8x8xf32>
    %328 = arith.mulf %326, %327 : vector<4x8x8xf32>
    %cst_132 = arith.constant dense<0xFF800000> : vector<4x8xf32>
    %329 = vector.multi_reduction <maximumf>, %328, %cst_132 [2] : vector<4x8x8xf32> to vector<4x8xf32>
    %330 = vector.shape_cast %329 : vector<4x8xf32> to vector<4x8x1xf32>
    %331 = vector.broadcast %330 : vector<4x8x1xf32> to vector<4x8x8xf32>
    %332 = arith.subf %328, %331 : vector<4x8x8xf32>
    %333 = math.exp %332 : vector<4x8x8xf32>
    %cst_133 = arith.constant dense<0.000000e+00> : vector<4x8xf32>
    %334 = vector.multi_reduction <add>, %333, %cst_133 [2] : vector<4x8x8xf32> to vector<4x8xf32>
    %335 = vector.shape_cast %334 : vector<4x8xf32> to vector<4x8x1xf32>
    %336 = tpu.reciprocal %335 {approx = true} : vector<4x8x1xf32> -> vector<4x8x1xf32>
    %337 = vector.broadcast %336 : vector<4x8x1xf32> to vector<4x8x8xf32>
    %338 = arith.mulf %333, %337 : vector<4x8x8xf32>
    %339 = arith.truncf %338 : vector<4x8x8xf32> to vector<4x8x8xbf16>
    "tpu.trace_start"() <{level = 10 : i32, message = "hts,hsd->htd"}> : () -> ()
    %cst_134 = arith.constant dense<0.000000e+00> : vector<4x8x8xf32>
    %340 = tpu.matmul %339, %325, %cst_134 {dimension_numbers = #tpu.dot_dimension_numbers<[2], [1], [1], [2], [0, 0, 0, 1, 1, 2], [0], [0]>} : vector<4x8x8xbf16>, vector<4x8x8xbf16>, vector<4x8x8xf32> -> vector<4x8x8xf32>
    "tpu.trace_stop"() : () -> ()
    %341 = arith.truncf %340 : vector<4x8x8xf32> to vector<4x8x8xbf16>
    "tpu.trace_start"() <{level = 10 : i32, message = "htd,hdo->hto"}> : () -> ()
    %cst_135 = arith.constant dense<0.000000e+00> : vector<4x8x32xf32>
    %342 = tpu.matmul %341, %287, %cst_135 {dimension_numbers = #tpu.dot_dimension_numbers<[2], [1], [1], [2], [0, 0, 0, 1, 1, 2], [0], [0]>} : vector<4x8x8xbf16>, vector<4x8x32xbf16>, vector<4x8x32xf32> -> vector<4x8x32xf32>
    "tpu.trace_stop"() : () -> ()
    %cst_136 = arith.constant dense<0.000000e+00> : vector<8x32xf32>
    %343 = vector.multi_reduction <add>, %342, %cst_136 [0] : vector<4x8x32xf32> to vector<8x32xf32>
    %344 = vector.broadcast %288 : vector<1x32xf32> to vector<8x32xf32>
    %345 = arith.addf %343, %344 : vector<8x32xf32>
    %cst_137 = arith.constant dense<0.000000e+00> : vector<32xf32>
    %346 = vector.multi_reduction <add>, %345, %cst_137 [0] : vector<8x32xf32> to vector<32xf32>
    %347 = vector.shape_cast %346 : vector<32xf32> to vector<1x32xf32>
    %cst_138 = arith.constant 8.000000e+00 : f32
    %348 = vector.broadcast %cst_138 : f32 to vector<1x32xf32>
    %349 = arith.divf %347, %348 : vector<1x32xf32>
    %350 = arith.truncf %349 : vector<1x32xf32> to vector<1x32xbf16>
    %c0_139 = arith.constant 0 : index
    %c0_140 = arith.constant 0 : index
    %351 = vector.load %arg20[%c0_139, %c0_140] : memref<32x15xbf16, #tpu.memory_space<vmem>>, vector<32x15xbf16>
    %cst_141 = arith.constant dense<0.000000e+00> : vector<1x15xf32>
    %352 = tpu.matmul %350, %351, %cst_141 {dimension_numbers = #tpu.dot_dimension_numbers<[1], [0], [0], [1], [0, 0, 1, 1], [], []>} : vector<1x32xbf16>, vector<32x15xbf16>, vector<1x15xf32> -> vector<1x15xf32>
    %c0_142 = arith.constant 0 : index
    %c0_143 = arith.constant 0 : index
    %353 = vector.load %arg21[%c0_142, %c0_143] : memref<1x15xf32, #tpu.memory_space<vmem>>, vector<1x15xf32>
    %354 = arith.addf %352, %353 : vector<1x15xf32>
    %355 = vector.shape_cast %354 : vector<1x15xf32> to vector<1x1x15xf32>
    %c0_144 = arith.constant 0 : index
    %c0_145 = arith.constant 0 : index
    %c0_146 = arith.constant 0 : index
    %356 = vector.load %arg22[%c0_144, %c0_145, %c0_146] : memref<1x1x15xf32, #tpu.memory_space<vmem>>, vector<1x1x15xf32>
    tpu.vector_store %arg22[%c0_144, %c0_145, %c0_146], %355 {strides = array<i32>} : memref<1x1x15xf32, #tpu.memory_space<vmem>>, vector<1x1x15xf32>,
    return
  }
  func.func @transform_0(%arg0: i32) -> (i32, i32) {
    %c0_i32 = arith.constant 0 : i32
    %c0_i32_0 = arith.constant 0 : i32
    return %arg0, %c0_i32 : i32, i32
  }
  func.func @transform_1(%arg0: i32) -> (i32, i32) {
    %c0_i32 = arith.constant 0 : i32
    %c0_i32_0 = arith.constant 0 : i32
    %c0_i32_1 = arith.constant 0 : i32
    return %c0_i32, %c0_i32_0 : i32, i32
  }
  func.func @transform_2(%arg0: i32) -> (i32, i32) {
    %c0_i32 = arith.constant 0 : i32
    %c0_i32_0 = arith.constant 0 : i32
    %c0_i32_1 = arith.constant 0 : i32
    return %c0_i32, %c0_i32_0 : i32, i32
  }
  func.func @transform_3(%arg0: i32) -> (i32, i32, i32) {
    %c0_i32 = arith.constant 0 : i32
    %c0_i32_0 = arith.constant 0 : i32
    %c0_i32_1 = arith.constant 0 : i32
    %c0_i32_2 = arith.constant 0 : i32
    return %c0_i32, %c0_i32_0, %c0_i32_1 : i32, i32, i32
  }
  func.func @transform_4(%arg0: i32) -> (i32, i32, i32) {
    %c0_i32 = arith.constant 0 : i32
    %c0_i32_0 = arith.constant 0 : i32
    %c0_i32_1 = arith.constant 0 : i32
    %c0_i32_2 = arith.constant 0 : i32
    return %c0_i32, %c0_i32_0, %c0_i32_1 : i32, i32, i32
  }
  func.func @transform_5(%arg0: i32) -> (i32, i32, i32, i32) {
    %c0_i32 = arith.constant 0 : i32
    %c0_i32_0 = arith.constant 0 : i32
    %c0_i32_1 = arith.constant 0 : i32
    %c0_i32_2 = arith.constant 0 : i32
    %c0_i32_3 = arith.constant 0 : i32
    return %c0_i32, %c0_i32_0, %c0_i32_1, %c0_i32_2 : i32, i32, i32, i32
  }
  func.func @transform_6(%arg0: i32) -> (i32, i32, i32) {
    %c0_i32 = arith.constant 0 : i32
    %c0_i32_0 = arith.constant 0 : i32
    %c0_i32_1 = arith.constant 0 : i32
    %c0_i32_2 = arith.constant 0 : i32
    return %c0_i32, %c0_i32_0, %c0_i32_1 : i32, i32, i32
  }
  func.func @transform_7(%arg0: i32) -> (i32, i32, i32) {
    %c0_i32 = arith.constant 0 : i32
    %c0_i32_0 = arith.constant 0 : i32
    %c0_i32_1 = arith.constant 0 : i32
    %c0_i32_2 = arith.constant 0 : i32
    return %c0_i32, %c0_i32_0, %c0_i32_1 : i32, i32, i32
  }
  func.func @transform_8(%arg0: i32) -> (i32, i32, i32) {
    %c0_i32 = arith.constant 0 : i32
    %c0_i32_0 = arith.constant 0 : i32
    %c0_i32_1 = arith.constant 0 : i32
    %c0_i32_2 = arith.constant 0 : i32
    return %c0_i32, %c0_i32_0, %c0_i32_1 : i32, i32, i32
  }
  func.func @transform_9(%arg0: i32) -> (i32, i32, i32) {
    %c0_i32 = arith.constant 0 : i32
    %c0_i32_0 = arith.constant 0 : i32
    %c0_i32_1 = arith.constant 0 : i32
    %c0_i32_2 = arith.constant 0 : i32
    return %c0_i32, %c0_i32_0, %c0_i32_1 : i32, i32, i32
  }
  func.func @transform_10(%arg0: i32) -> (i32, i32, i32) {
    %c0_i32 = arith.constant 0 : i32
    %c0_i32_0 = arith.constant 0 : i32
    %c0_i32_1 = arith.constant 0 : i32
    %c0_i32_2 = arith.constant 0 : i32
    return %c0_i32, %c0_i32_0, %c0_i32_1 : i32, i32, i32
  }
  func.func @transform_11(%arg0: i32) -> (i32, i32, i32) {
    %c0_i32 = arith.constant 0 : i32
    %c0_i32_0 = arith.constant 0 : i32
    %c0_i32_1 = arith.constant 0 : i32
    %c0_i32_2 = arith.constant 0 : i32
    return %c0_i32, %c0_i32_0, %c0_i32_1 : i32, i32, i32
  }
  func.func @transform_12(%arg0: i32) -> (i32, i32, i32) {
    %c0_i32 = arith.constant 0 : i32
    %c0_i32_0 = arith.constant 0 : i32
    %c0_i32_1 = arith.constant 0 : i32
    %c0_i32_2 = arith.constant 0 : i32
    return %c0_i32, %c0_i32_0, %c0_i32_1 : i32, i32, i32
  }
  func.func @transform_13(%arg0: i32) -> (i32, i32, i32) {
    %c0_i32 = arith.constant 0 : i32
    %c0_i32_0 = arith.constant 0 : i32
    %c0_i32_1 = arith.constant 0 : i32
    %c0_i32_2 = arith.constant 0 : i32
    return %c0_i32, %c0_i32_0, %c0_i32_1 : i32, i32, i32
  }
  func.func @transform_14(%arg0: i32) -> (i32, i32, i32) {
    %c0_i32 = arith.constant 0 : i32
    %c0_i32_0 = arith.constant 0 : i32
    %c0_i32_1 = arith.constant 0 : i32
    %c0_i32_2 = arith.constant 0 : i32
    return %c0_i32, %c0_i32_0, %c0_i32_1 : i32, i32, i32
  }
  func.func @transform_15(%arg0: i32) -> (i32, i32) {
    %c0_i32 = arith.constant 0 : i32
    %c0_i32_0 = arith.constant 0 : i32
    %c0_i32_1 = arith.constant 0 : i32
    return %c0_i32, %c0_i32_0 : i32, i32
  }
  func.func @transform_16(%arg0: i32) -> (i32, i32) {
    %c0_i32 = arith.constant 0 : i32
    %c0_i32_0 = arith.constant 0 : i32
    %c0_i32_1 = arith.constant 0 : i32
    return %c0_i32, %c0_i32_0 : i32, i32
  }
  func.func @transform_17(%arg0: i32) -> (i32, i32, i32) {
    %c0_i32 = arith.constant 0 : i32
    %c0_i32_0 = arith.constant 0 : i32
    %c0_i32_1 = arith.constant 0 : i32
    %c0_i32_2 = arith.constant 0 : i32
    return %c0_i32, %c0_i32_0, %c0_i32_1 : i32, i32, i32
  }
  func.func @transform_18(%arg0: i32) -> (i32, i32) {
    %c0_i32 = arith.constant 0 : i32
    %c0_i32_0 = arith.constant 0 : i32
    %c0_i32_1 = arith.constant 0 : i32
    return %c0_i32, %c0_i32_0 : i32, i32
  }
  func.func @transform_19(%arg0: i32) -> (i32, i32) {
    %c0_i32 = arith.constant 0 : i32
    %c0_i32_0 = arith.constant 0 : i32
    %c0_i32_1 = arith.constant 0 : i32
    return %c0_i32, %c0_i32_0 : i32, i32
  }
  func.func @transform_20(%arg0: i32) -> (i32, i32) {
    %c0_i32 = arith.constant 0 : i32
    %c0_i32_0 = arith.constant 0 : i32
    %c0_i32_1 = arith.constant 0 : i32
    return %c0_i32, %c0_i32_0 : i32, i32
  }
  func.func @transform_21(%arg0: i32) -> (i32, i32, i32) {
    %c0_i32 = arith.constant 0 : i32
    %c0_i32_0 = arith.constant 0 : i32
    %c0_i32_1 = arith.constant 0 : i32
    return %arg0, %c0_i32, %c0_i32_0 : i32, i32, i32
  }
}

</mosaic_0001>

<llo_original>
// kernel: transformer_model_forward.1
$region0: #{transformer_model_forward.1}
  #allocation0 [shape = 'u32[]', space=smem, size = 0x4, offset = 0x4, fixed_abs, tag = 'smem constant byte address 0x4 - core index']
  #allocation1 [shape = 'u32[72,128]{1,0:T(1,128)}', space=vmem, size = 0x9000, scoped, tag = 'internal scratch']
  %s0 = inlined_call_operand.vmem [shape: s32[16,1], index: 0, kind: input, shape index: {}]
  %s1 = inlined_call_operand.vmem [shape: bf16[50,32], index: 1, kind: input, shape index: {}]
  %s2 = inlined_call_operand.vmem [shape: f32[8,32], index: 2, kind: input, shape index: {}]
  %s3 = inlined_call_operand.vmem [shape: bf16[2,32,96], index: 3, kind: input, shape index: {}]
  %s4 = inlined_call_operand.vmem [shape: f32[2,1,96], index: 4, kind: input, shape index: {}]
  %s5 = inlined_call_operand.vmem [shape: bf16[2,4,8,32], index: 5, kind: input, shape index: {}]
  %s6 = inlined_call_operand.vmem [shape: f32[2,1,32], index: 6, kind: input, shape index: {}]
  %s7 = inlined_call_operand.vmem [shape: f32[2,1,32], index: 7, kind: input, shape index: {}]
  %s8 = inlined_call_operand.vmem [shape: f32[2,1,32], index: 8, kind: input, shape index: {}]
  %s9 = inlined_call_operand.vmem [shape: bf16[2,32,64], index: 9, kind: input, shape index: {}]
  %s10 = inlined_call_operand.vmem [shape: f32[2,1,64], index: 10, kind: input, shape index: {}]
  %s11 = inlined_call_operand.vmem [shape: bf16[2,64,32], index: 11, kind: input, shape index: {}]
  %s12 = inlined_call_operand.vmem [shape: f32[2,1,32], index: 12, kind: input, shape index: {}]
  %s13 = inlined_call_operand.vmem [shape: f32[2,1,32], index: 13, kind: input, shape index: {}]
  %s14 = inlined_call_operand.vmem [shape: f32[2,1,32], index: 14, kind: input, shape index: {}]
  %s15 = inlined_call_operand.vmem [shape: bf16[32,96], index: 15, kind: input, shape index: {}]
  %s16 = inlined_call_operand.hbm [shape: f32[1,96], index: 16, kind: input, shape index: {}]
  %s17 = inlined_call_operand.hbm [shape: bf16[4,8,32], index: 17, kind: input, shape index: {}]
  %s18 = inlined_call_operand.hbm [shape: f32[1,32], index: 18, kind: input, shape index: {}]
  %s19 = inlined_call_operand.vmem [shape: bf16[32,15], index: 19, kind: input, shape index: {}]
  %s20 = inlined_call_operand.vmem [shape: f32[1,15], index: 20, kind: input, shape index: {}]
  %s21 = inlined_call_operand.hbm [shape: f32[2,1,15], index: 21, kind: output, shape index: {}]
  %s22 = sld [smem:[#allocation0]]
  $region129: #{transformer_model_forward.1} parent=0
    _
  %s24 = ssub.s32 1, %s22
  %s25 = scalar_select 0, %s24, %s22
  $region1: #{transformer_model_forward.1} parent=0
    #allocation2 [shape = 'u8[512]{0}', space=vmem, size = 0x400, scoped, tag = 'input window, operand 16, single buffered']
    #allocation3 [shape = 's32[2]{0}', space=sflag, size = 0x8, scoped, tag = 'scoped memory for transformer_model_forward.1']
    #allocation4 [shape = 's32[2]{0}', space=sflag, size = 0x8, scoped, tag = 'scoped memory for transformer_model_forward.1']
    #allocation5 [shape = 'u8[8192]{0}', space=vmem, size = 0x2000, scoped, tag = 'input window, operand 17, single buffered']
    #allocation6 [shape = 's32[1]{0}', space=sflag, size = 0x4, scoped, tag = 'scoped memory for transformer_model_forward.1']
    #allocation7 [shape = 'u8[512]{0}', space=vmem, size = 0x400, scoped, tag = 'input window, operand 18, single buffered']
    #allocation8 [shape = 'u8[1024]{0}', space=vmem, size = 0x400, scoped, tag = 'output window, operand 0']
    %26 = vsyncpa [#allocation3], 0
    %27 = vsyncpa [#allocation6], 0
    %28 = vsyncpa [#allocation4], 0
    %s29 = scalar_lea.sflag [#allocation4], 1
    %30 = vsyncpa %s29, 0
    loop: start=0, step=1, limit=4
    $region2: #{transformer_model_forward.1} parent=1 // loop_pre_header
      _
    $region3: #{transformer_model_forward.1} parent=1 // loop_header
      %s32 = sphi 0, %s36
      %p33 = scmp.ge.s32.totalorder %s32, 4
      %s42 = sphi 0, %s44
      %s45 = sphi 0, %s42
      %s46 = sphi 0, %s45
      %s62 = sphi 0, %s46
      %s66 = sphi 0, %s66
      %s68 = sphi 0, %s66
      %s69 = sphi 0, %s68
      %s83 = sphi 0, %s69
      %s87 = sphi 0, %s87
      %s89 = sphi 0, %s87
      %s90 = sphi 0, %s89
      %s104 = sphi 0, %s90
      %s108 = sphi 0, %s108
      %s110 = sphi 0, %s108
      %s111 = sphi 0, %s110
      %s125 = sphi 0, %s111
      %s129 = sphi 0, %s129
      %s131 = sphi 0, %s129
      %s132 = sphi 0, %s131
      %s146 = sphi 0, %s132
      %s150 = sphi 0, %s150
      %s152 = sphi 0, %s150
      %s153 = sphi 0, %s152
      %s167 = sphi 0, %s153
      %s171 = sphi 0, %s171
      %s173 = sphi 0, %s171
      %s174 = sphi 0, %s173
      %s188 = sphi 0, %s174
      %s192 = sphi 0, %s192
      %s194 = sphi 0, %s192
      %s195 = sphi 0, %s194
      %s209 = sphi 0, %s195
      %s213 = sphi 0, %s213
      %s215 = sphi 0, %s213
      %s216 = sphi 0, %s215
      %s230 = sphi 0, %s216
      %s234 = sphi 0, %s234
      %s236 = sphi 0, %s234
      %s237 = sphi 0, %s236
      %s251 = sphi 0, %s237
      %s255 = sphi 0, %s255
      %s257 = sphi 0, %s255
      %s258 = sphi 0, %s257
      %s272 = sphi 0, %s258
      %s276 = sphi 0, %s276
      %s278 = sphi 0, %s276
      %s279 = sphi 0, %s278
      %s293 = sphi 0, %s279
      %s297 = sphi 0, %s297
      %s299 = sphi 0, %s297
      %s300 = sphi 0, %s299
      %s314 = sphi 0, %s300
      %s318 = sphi 0, %s318
      %s320 = sphi 0, %s318
      %s321 = sphi 0, %s320
      %s335 = sphi 0, %s321
      %s339 = sphi 0, %s339
      %s341 = sphi 0, %s339
      %s342 = sphi 0, %s341
      %s356 = sphi 0, %s342
      %s360 = sphi 0, %s360
      %s362 = sphi 0, %s360
      %s363 = sphi 0, %s362
      %s377 = sphi 0, %s363
      %s381 = sphi 0, %s381
      %s383 = sphi 0, %s381
      %s384 = sphi 0, %s383
      %s398 = sphi 0, %s384
      %s402 = sphi 0, %s402
      %s404 = sphi 0, %s402
      %s405 = sphi 0, %s404
      %s419 = sphi 0, %s405
      %s423 = sphi 0, %s423
      %s425 = sphi 0, %s423
      %s426 = sphi 0, %s425
      %s440 = sphi 0, %s426
      %s444 = sphi 0, %s444
      %s446 = sphi 0, %s444
      %s447 = sphi 0, %s446
      %s461 = sphi 0, %s447
      %s465 = sphi 0, %s465
      %s467 = sphi 0, %s465
      %s468 = sphi 0, %s467
      %s482 = sphi 0, %s468
      %s488 = sphi 0, %s490
      %s491 = sphi 0, %s488
      %s492 = sphi 0, %s491
      %s508 = sphi 0, %s492
    $region4: #{transformer_model_forward.1} parent=1 // loop_header_branch
      %35 = sbr.rel (%p33) target = $region8
    $region5: #{transformer_model_forward.1} parent=1 // loop_body
      %s37 = ssub.s32 %s32, 1
      %s38 = ssub.s32 %s32, 2
      %s39 = sadd.s32 %s32, 1
      %s40 = ssub.s32 %s32, %s39
      %p41 = scmp.eq.s32.totalorder %s40, 0
      %s43 = sadd.s32 %s42, 1
      %s44 = scalar_select %p41, %s42, %s43
      %p47 = pneg %p41
      %p48 = scmp.eq.s32.totalorder %s32, 1
      %p49 = por %p47, %p48
      %p50 = scmp.ne.s32.totalorder %s42, %s45
      %p51 = scmp.eq.s32.totalorder %s32, 0
      %p52 = por %p50, %p51
      %p53 = scmp.ne.s32.totalorder %s42, %s45
      %p54 = scmp.eq.s32.totalorder %s37, 1
      %p55 = por %p53, %p54
      %p56 = scmp.ne.s32.totalorder %s45, %s46
      %p57 = scmp.eq.s32.totalorder %s37, 0
      %p58 = por %p56, %p57
      %p59 = scmp.ne.s32.totalorder %s45, %s46
      %p60 = scmp.eq.s32.totalorder %s38, 1
      %p61 = por %p59, %p60
      %p63 = scmp.ne.s32.totalorder %s46, %s62
      %p64 = scmp.eq.s32.totalorder %s38, 0
      %p65 = por %p63, %p64
      %s67 = sadd.s32 %s66, 1
      %p70 = scmp.eq.s32.totalorder %s32, 1
      %p71 = scmp.ne.s32.totalorder %s66, %s68
      %p72 = scmp.eq.s32.totalorder %s32, 0
      %p73 = por %p71, %p72
      %p74 = scmp.ne.s32.totalorder %s66, %s68
      %p75 = scmp.eq.s32.totalorder %s37, 1
      %p76 = por %p74, %p75
      %p77 = scmp.ne.s32.totalorder %s68, %s69
      %p78 = scmp.eq.s32.totalorder %s37, 0
      %p79 = por %p77, %p78
      %p80 = scmp.ne.s32.totalorder %s68, %s69
      %p81 = scmp.eq.s32.totalorder %s38, 1
      %p82 = por %p80, %p81
      %p84 = scmp.ne.s32.totalorder %s69, %s83
      %p85 = scmp.eq.s32.totalorder %s38, 0
      %p86 = por %p84, %p85
      %s88 = sadd.s32 %s87, 1
      %p91 = scmp.eq.s32.totalorder %s32, 1
      %p92 = scmp.ne.s32.totalorder %s87, %s89
      %p93 = scmp.eq.s32.totalorder %s32, 0
      %p94 = por %p92, %p93
      %p95 = scmp.ne.s32.totalorder %s87, %s89
      %p96 = scmp.eq.s32.totalorder %s37, 1
      %p97 = por %p95, %p96
      %p98 = scmp.ne.s32.totalorder %s89, %s90
      %p99 = scmp.eq.s32.totalorder %s37, 0
      %p100 = por %p98, %p99
      %p101 = scmp.ne.s32.totalorder %s89, %s90
      %p102 = scmp.eq.s32.totalorder %s38, 1
      %p103 = por %p101, %p102
      %p105 = scmp.ne.s32.totalorder %s90, %s104
      %p106 = scmp.eq.s32.totalorder %s38, 0
      %p107 = por %p105, %p106
      %s109 = sadd.s32 %s108, 1
      %p112 = scmp.eq.s32.totalorder %s32, 1
      %p113 = scmp.ne.s32.totalorder %s108, %s110
      %p114 = scmp.eq.s32.totalorder %s32, 0
      %p115 = por %p113, %p114
      %p116 = scmp.ne.s32.totalorder %s108, %s110
      %p117 = scmp.eq.s32.totalorder %s37, 1
      %p118 = por %p116, %p117
      %p119 = scmp.ne.s32.totalorder %s110, %s111
      %p120 = scmp.eq.s32.totalorder %s37, 0
      %p121 = por %p119, %p120
      %p122 = scmp.ne.s32.totalorder %s110, %s111
      %p123 = scmp.eq.s32.totalorder %s38, 1
      %p124 = por %p122, %p123
      %p126 = scmp.ne.s32.totalorder %s111, %s125
      %p127 = scmp.eq.s32.totalorder %s38, 0
      %p128 = por %p126, %p127
      %s130 = sadd.s32 %s129, 1
      %p133 = scmp.eq.s32.totalorder %s32, 1
      %p134 = scmp.ne.s32.totalorder %s129, %s131
      %p135 = scmp.eq.s32.totalorder %s32, 0
      %p136 = por %p134, %p135
      %p137 = scmp.ne.s32.totalorder %s129, %s131
      %p138 = scmp.eq.s32.totalorder %s37, 1
      %p139 = por %p137, %p138
      %p140 = scmp.ne.s32.totalorder %s131, %s132
      %p141 = scmp.eq.s32.totalorder %s37, 0
      %p142 = por %p140, %p141
      %p143 = scmp.ne.s32.totalorder %s131, %s132
      %p144 = scmp.eq.s32.totalorder %s38, 1
      %p145 = por %p143, %p144
      %p147 = scmp.ne.s32.totalorder %s132, %s146
      %p148 = scmp.eq.s32.totalorder %s38, 0
      %p149 = por %p147, %p148
      %s151 = sadd.s32 %s150, 1
      %p154 = scmp.eq.s32.totalorder %s32, 1
      %p155 = scmp.ne.s32.totalorder %s150, %s152
      %p156 = scmp.eq.s32.totalorder %s32, 0
      %p157 = por %p155, %p156
      %p158 = scmp.ne.s32.totalorder %s150, %s152
      %p159 = scmp.eq.s32.totalorder %s37, 1
      %p160 = por %p158, %p159
      %p161 = scmp.ne.s32.totalorder %s152, %s153
      %p162 = scmp.eq.s32.totalorder %s37, 0
      %p163 = por %p161, %p162
      %p164 = scmp.ne.s32.totalorder %s152, %s153
      %p165 = scmp.eq.s32.totalorder %s38, 1
      %p166 = por %p164, %p165
      %p168 = scmp.ne.s32.totalorder %s153, %s167
      %p169 = scmp.eq.s32.totalorder %s38, 0
      %p170 = por %p168, %p169
      %s172 = sadd.s32 %s171, 1
      %p175 = scmp.eq.s32.totalorder %s32, 1
      %p176 = scmp.ne.s32.totalorder %s171, %s173
      %p177 = scmp.eq.s32.totalorder %s32, 0
      %p178 = por %p176, %p177
      %p179 = scmp.ne.s32.totalorder %s171, %s173
      %p180 = scmp.eq.s32.totalorder %s37, 1
      %p181 = por %p179, %p180
      %p182 = scmp.ne.s32.totalorder %s173, %s174
      %p183 = scmp.eq.s32.totalorder %s37, 0
      %p184 = por %p182, %p183
      %p185 = scmp.ne.s32.totalorder %s173, %s174
      %p186 = scmp.eq.s32.totalorder %s38, 1
      %p187 = por %p185, %p186
      %p189 = scmp.ne.s32.totalorder %s174, %s188
      %p190 = scmp.eq.s32.totalorder %s38, 0
      %p191 = por %p189, %p190
      %s193 = sadd.s32 %s192, 1
      %p196 = scmp.eq.s32.totalorder %s32, 1
      %p197 = scmp.ne.s32.totalorder %s192, %s194
      %p198 = scmp.eq.s32.totalorder %s32, 0
      %p199 = por %p197, %p198
      %p200 = scmp.ne.s32.totalorder %s192, %s194
      %p201 = scmp.eq.s32.totalorder %s37, 1
      %p202 = por %p200, %p201
      %p203 = scmp.ne.s32.totalorder %s194, %s195
      %p204 = scmp.eq.s32.totalorder %s37, 0
      %p205 = por %p203, %p204
      %p206 = scmp.ne.s32.totalorder %s194, %s195
      %p207 = scmp.eq.s32.totalorder %s38, 1
      %p208 = por %p206, %p207
      %p210 = scmp.ne.s32.totalorder %s195, %s209
      %p211 = scmp.eq.s32.totalorder %s38, 0
      %p212 = por %p210, %p211
      %s214 = sadd.s32 %s213, 1
      %p217 = scmp.eq.s32.totalorder %s32, 1
      %p218 = scmp.ne.s32.totalorder %s213, %s215
      %p219 = scmp.eq.s32.totalorder %s32, 0
      %p220 = por %p218, %p219
      %p221 = scmp.ne.s32.totalorder %s213, %s215
      %p222 = scmp.eq.s32.totalorder %s37, 1
      %p223 = por %p221, %p222
      %p224 = scmp.ne.s32.totalorder %s215, %s216
      %p225 = scmp.eq.s32.totalorder %s37, 0
      %p226 = por %p224, %p225
      %p227 = scmp.ne.s32.totalorder %s215, %s216
      %p228 = scmp.eq.s32.totalorder %s38, 1
      %p229 = por %p227, %p228
      %p231 = scmp.ne.s32.totalorder %s216, %s230
      %p232 = scmp.eq.s32.totalorder %s38, 0
      %p233 = por %p231, %p232
      %s235 = sadd.s32 %s234, 1
      %p238 = scmp.eq.s32.totalorder %s32, 1
      %p239 = scmp.ne.s32.totalorder %s234, %s236
      %p240 = scmp.eq.s32.totalorder %s32, 0
      %p241 = por %p239, %p240
      %p242 = scmp.ne.s32.totalorder %s234, %s236
      %p243 = scmp.eq.s32.totalorder %s37, 1
      %p244 = por %p242, %p243
      %p245 = scmp.ne.s32.totalorder %s236, %s237
      %p246 = scmp.eq.s32.totalorder %s37, 0
      %p247 = por %p245, %p246
      %p248 = scmp.ne.s32.totalorder %s236, %s237
      %p249 = scmp.eq.s32.totalorder %s38, 1
      %p250 = por %p248, %p249
      %p252 = scmp.ne.s32.totalorder %s237, %s251
      %p253 = scmp.eq.s32.totalorder %s38, 0
      %p254 = por %p252, %p253
      %s256 = sadd.s32 %s255, 1
      %p259 = scmp.eq.s32.totalorder %s32, 1
      %p260 = scmp.ne.s32.totalorder %s255, %s257
      %p261 = scmp.eq.s32.totalorder %s32, 0
      %p262 = por %p260, %p261
      %p263 = scmp.ne.s32.totalorder %s255, %s257
      %p264 = scmp.eq.s32.totalorder %s37, 1
      %p265 = por %p263, %p264
      %p266 = scmp.ne.s32.totalorder %s257, %s258
      %p267 = scmp.eq.s32.totalorder %s37, 0
      %p268 = por %p266, %p267
      %p269 = scmp.ne.s32.totalorder %s257, %s258
      %p270 = scmp.eq.s32.totalorder %s38, 1
      %p271 = por %p269, %p270
      %p273 = scmp.ne.s32.totalorder %s258, %s272
      %p274 = scmp.eq.s32.totalorder %s38, 0
      %p275 = por %p273, %p274
      %s277 = sadd.s32 %s276, 1
      %p280 = scmp.eq.s32.totalorder %s32, 1
      %p281 = scmp.ne.s32.totalorder %s276, %s278
      %p282 = scmp.eq.s32.totalorder %s32, 0
      %p283 = por %p281, %p282
      %p284 = scmp.ne.s32.totalorder %s276, %s278
      %p285 = scmp.eq.s32.totalorder %s37, 1
      %p286 = por %p284, %p285
      %p287 = scmp.ne.s32.totalorder %s278, %s279
      %p288 = scmp.eq.s32.totalorder %s37, 0
      %p289 = por %p287, %p288
      %p290 = scmp.ne.s32.totalorder %s278, %s279
      %p291 = scmp.eq.s32.totalorder %s38, 1
      %p292 = por %p290, %p291
      %p294 = scmp.ne.s32.totalorder %s279, %s293
      %p295 = scmp.eq.s32.totalorder %s38, 0
      %p296 = por %p294, %p295
      %s298 = sadd.s32 %s297, 1
      %p301 = scmp.eq.s32.totalorder %s32, 1
      %p302 = scmp.ne.s32.totalorder %s297, %s299
      %p303 = scmp.eq.s32.totalorder %s32, 0
      %p304 = por %p302, %p303
      %p305 = scmp.ne.s32.totalorder %s297, %s299
      %p306 = scmp.eq.s32.totalorder %s37, 1
      %p307 = por %p305, %p306
      %p308 = scmp.ne.s32.totalorder %s299, %s300
      %p309 = scmp.eq.s32.totalorder %s37, 0
      %p310 = por %p308, %p309
      %p311 = scmp.ne.s32.totalorder %s299, %s300
      %p312 = scmp.eq.s32.totalorder %s38, 1
      %p313 = por %p311, %p312
      %p315 = scmp.ne.s32.totalorder %s300, %s314
      %p316 = scmp.eq.s32.totalorder %s38, 0
      %p317 = por %p315, %p316
      %s319 = sadd.s32 %s318, 1
      %p322 = scmp.eq.s32.totalorder %s32, 1
      %p323 = scmp.ne.s32.totalorder %s318, %s320
      %p324 = scmp.eq.s32.totalorder %s32, 0
      %p325 = por %p323, %p324
      %p326 = scmp.ne.s32.totalorder %s318, %s320
      %p327 = scmp.eq.s32.totalorder %s37, 1
      %p328 = por %p326, %p327
      %p329 = scmp.ne.s32.totalorder %s320, %s321
      %p330 = scmp.eq.s32.totalorder %s37, 0
      %p331 = por %p329, %p330
      %p332 = scmp.ne.s32.totalorder %s320, %s321
      %p333 = scmp.eq.s32.totalorder %s38, 1
      %p334 = por %p332, %p333
      %p336 = scmp.ne.s32.totalorder %s321, %s335
      %p337 = scmp.eq.s32.totalorder %s38, 0
      %p338 = por %p336, %p337
      %s340 = sadd.s32 %s339, 1
      %p343 = scmp.eq.s32.totalorder %s32, 1
      %p344 = scmp.ne.s32.totalorder %s339, %s341
      %p345 = scmp.eq.s32.totalorder %s32, 0
      %p346 = por %p344, %p345
      %p347 = scmp.ne.s32.totalorder %s339, %s341
      %p348 = scmp.eq.s32.totalorder %s37, 1
      %p349 = por %p347, %p348
      %p350 = scmp.ne.s32.totalorder %s341, %s342
      %p351 = scmp.eq.s32.totalorder %s37, 0
      %p352 = por %p350, %p351
      %p353 = scmp.ne.s32.totalorder %s341, %s342
      %p354 = scmp.eq.s32.totalorder %s38, 1
      %p355 = por %p353, %p354
      %p357 = scmp.ne.s32.totalorder %s342, %s356
      %p358 = scmp.eq.s32.totalorder %s38, 0
      %p359 = por %p357, %p358
      %s361 = sadd.s32 %s360, 1
      %p364 = scmp.eq.s32.totalorder %s32, 1
      %p365 = scmp.ne.s32.totalorder %s360, %s362
      %p366 = scmp.eq.s32.totalorder %s32, 0
      %p367 = por %p365, %p366
      %p368 = scmp.ne.s32.totalorder %s360, %s362
      %p369 = scmp.eq.s32.totalorder %s37, 1
      %p370 = por %p368, %p369
      %p371 = scmp.ne.s32.totalorder %s362, %s363
      %p372 = scmp.eq.s32.totalorder %s37, 0
      %p373 = por %p371, %p372
      %p374 = scmp.ne.s32.totalorder %s362, %s363
      %p375 = scmp.eq.s32.totalorder %s38, 1
      %p376 = por %p374, %p375
      %p378 = scmp.ne.s32.totalorder %s363, %s377
      %p379 = scmp.eq.s32.totalorder %s38, 0
      %p380 = por %p378, %p379
      %s382 = sadd.s32 %s381, 1
      %p385 = scmp.eq.s32.totalorder %s32, 1
      %p386 = scmp.ne.s32.totalorder %s381, %s383
      %p387 = scmp.eq.s32.totalorder %s32, 0
      %p388 = por %p386, %p387
      %p389 = scmp.ne.s32.totalorder %s381, %s383
      %p390 = scmp.eq.s32.totalorder %s37, 1
      %p391 = por %p389, %p390
      %p392 = scmp.ne.s32.totalorder %s383, %s384
      %p393 = scmp.eq.s32.totalorder %s37, 0
      %p394 = por %p392, %p393
      %p395 = scmp.ne.s32.totalorder %s383, %s384
      %p396 = scmp.eq.s32.totalorder %s38, 1
      %p397 = por %p395, %p396
      %p399 = scmp.ne.s32.totalorder %s384, %s398
      %p400 = scmp.eq.s32.totalorder %s38, 0
      %p401 = por %p399, %p400
      %s403 = sadd.s32 %s402, 1
      %p406 = scmp.eq.s32.totalorder %s32, 1
      %p407 = scmp.ne.s32.totalorder %s402, %s404
      %p408 = scmp.eq.s32.totalorder %s32, 0
      %p409 = por %p407, %p408
      %p410 = scmp.ne.s32.totalorder %s402, %s404
      %p411 = scmp.eq.s32.totalorder %s37, 1
      %p412 = por %p410, %p411
      %p413 = scmp.ne.s32.totalorder %s404, %s405
      %p414 = scmp.eq.s32.totalorder %s37, 0
      %p415 = por %p413, %p414
      %p416 = scmp.ne.s32.totalorder %s404, %s405
      %p417 = scmp.eq.s32.totalorder %s38, 1
      %p418 = por %p416, %p417
      %p420 = scmp.ne.s32.totalorder %s405, %s419
      %p421 = scmp.eq.s32.totalorder %s38, 0
      %p422 = por %p420, %p421
      %s424 = sadd.s32 %s423, 1
      %p427 = scmp.eq.s32.totalorder %s32, 1
      %p428 = scmp.ne.s32.totalorder %s423, %s425
      %p429 = scmp.eq.s32.totalorder %s32, 0
      %p430 = por %p428, %p429
      %p431 = scmp.ne.s32.totalorder %s423, %s425
      %p432 = scmp.eq.s32.totalorder %s37, 1
      %p433 = por %p431, %p432
      %p434 = scmp.ne.s32.totalorder %s425, %s426
      %p435 = scmp.eq.s32.totalorder %s37, 0
      %p436 = por %p434, %p435
      %p437 = scmp.ne.s32.totalorder %s425, %s426
      %p438 = scmp.eq.s32.totalorder %s38, 1
      %p439 = por %p437, %p438
      %p441 = scmp.ne.s32.totalorder %s426, %s440
      %p442 = scmp.eq.s32.totalorder %s38, 0
      %p443 = por %p441, %p442
      %s445 = sadd.s32 %s444, 1
      %p448 = scmp.eq.s32.totalorder %s32, 1
      %p449 = scmp.ne.s32.totalorder %s444, %s446
      %p450 = scmp.eq.s32.totalorder %s32, 0
      %p451 = por %p449, %p450
      %p452 = scmp.ne.s32.totalorder %s444, %s446
      %p453 = scmp.eq.s32.totalorder %s37, 1
      %p454 = por %p452, %p453
      %p455 = scmp.ne.s32.totalorder %s446, %s447
      %p456 = scmp.eq.s32.totalorder %s37, 0
      %p457 = por %p455, %p456
      %p458 = scmp.ne.s32.totalorder %s446, %s447
      %p459 = scmp.eq.s32.totalorder %s38, 1
      %p460 = por %p458, %p459
      %p462 = scmp.ne.s32.totalorder %s447, %s461
      %p463 = scmp.eq.s32.totalorder %s38, 0
      %p464 = por %p462, %p463
      %s466 = sadd.s32 %s465, 1
      %p469 = scmp.eq.s32.totalorder %s32, 1
      %p470 = scmp.ne.s32.totalorder %s465, %s467
      %p471 = scmp.eq.s32.totalorder %s32, 0
      %p472 = por %p470, %p471
      %p473 = scmp.ne.s32.totalorder %s465, %s467
      %p474 = scmp.eq.s32.totalorder %s37, 1
      %p475 = por %p473, %p474
      %p476 = scmp.ne.s32.totalorder %s467, %s468
      %p477 = scmp.eq.s32.totalorder %s37, 0
      %p478 = por %p476, %p477
      %p479 = scmp.ne.s32.totalorder %s467, %s468
      %p480 = scmp.eq.s32.totalorder %s38, 1
      %p481 = por %p479, %p480
      %p483 = scmp.ne.s32.totalorder %s468, %s482
      %p484 = scmp.eq.s32.totalorder %s38, 0
      %p485 = por %p483, %p484
      %s486 = ssub.s32 %s32, %s39
      %p487 = scmp.eq.s32.totalorder %s486, 0
      %s489 = sadd.s32 %s488, 1
      %s490 = scalar_select %p487, %s488, %s489
      %p493 = pneg %p487
      %p494 = scmp.eq.s32.totalorder %s32, 1
      %p495 = por %p493, %p494
      %p496 = scmp.ne.s32.totalorder %s488, %s491
      %p497 = scmp.eq.s32.totalorder %s32, 0
      %p498 = por %p496, %p497
      %p499 = scmp.ne.s32.totalorder %s488, %s491
      %p500 = scmp.eq.s32.totalorder %s37, 1
      %p501 = por %p499, %p500
      %p502 = scmp.ne.s32.totalorder %s491, %s492
      %p503 = scmp.eq.s32.totalorder %s37, 0
      %p504 = por %p502, %p503
      %p505 = scmp.ne.s32.totalorder %s491, %s492
      %p506 = scmp.eq.s32.totalorder %s38, 1
      %p507 = por %p505, %p506
      %p509 = scmp.ne.s32.totalorder %s492, %s508
      %p510 = scmp.eq.s32.totalorder %s38, 0
      %p511 = por %p509, %p510
      %p512 = scmp.le.s32.totalorder 1, %s32
      %p513 = scmp.lt.s32.totalorder %s32, 3
      %p514 = pnand %p512, %p513
      %p515 = pneg %p514
      // Predicated region
      $region9: #{transformer_model_forward.1} parent=5 // pred_check
        _
      $region10: #{transformer_model_forward.1} parent=5 // pred_check_branch
        %517 = sbr.rel (%p514) target = $region12
      $region11: #{transformer_model_forward.1} parent=5 // pred_region
        %s518 = ssub.s32 %s32, 1
        // Predicated region
        $region13: #{transformer_model_forward.1} parent=11 // pred_check
          %p519 = pneg %p79
        $region14: #{transformer_model_forward.1} parent=11 // pred_check_branch
          %521 = sbr.rel (%p519) target = $region16
        $region15: #{transformer_model_forward.1} parent=11 // pred_region
          _
        $region16: #{transformer_model_forward.1} parent=11 // pred_fallthru
          _
        // Predicated region
        $region17: #{transformer_model_forward.1} parent=11 // pred_check
          %p522 = pneg %p100
        $region18: #{transformer_model_forward.1} parent=11 // pred_check_branch
          %524 = sbr.rel (%p522) target = $region20
        $region19: #{transformer_model_forward.1} parent=11 // pred_region
          _
        $region20: #{transformer_model_forward.1} parent=11 // pred_fallthru
          _
        // Predicated region
        $region21: #{transformer_model_forward.1} parent=11 // pred_check
          %p525 = pneg %p121
        $region22: #{transformer_model_forward.1} parent=11 // pred_check_branch
          %527 = sbr.rel (%p525) target = $region24
        $region23: #{transformer_model_forward.1} parent=11 // pred_region
          _
        $region24: #{transformer_model_forward.1} parent=11 // pred_fallthru
          _
        // Predicated region
        $region25: #{transformer_model_forward.1} parent=11 // pred_check
          %p528 = pneg %p142
        $region26: #{transformer_model_forward.1} parent=11 // pred_check_branch
          %530 = sbr.rel (%p528) target = $region28
        $region27: #{transformer_model_forward.1} parent=11 // pred_region
          _
        $region28: #{transformer_model_forward.1} parent=11 // pred_fallthru
          _
        // Predicated region
        $region29: #{transformer_model_forward.1} parent=11 // pred_check
          %p531 = pneg %p163
        $region30: #{transformer_model_forward.1} parent=11 // pred_check_branch
          %533 = sbr.rel (%p531) target = $region32
        $region31: #{transformer_model_forward.1} parent=11 // pred_region
          _
        $region32: #{transformer_model_forward.1} parent=11 // pred_fallthru
          _
        // Predicated region
        $region33: #{transformer_model_forward.1} parent=11 // pred_check
          %p534 = pneg %p184
        $region34: #{transformer_model_forward.1} parent=11 // pred_check_branch
          %536 = sbr.rel (%p534) target = $region36
        $region35: #{transformer_model_forward.1} parent=11 // pred_region
          _
        $region36: #{transformer_model_forward.1} parent=11 // pred_fallthru
          _
        // Predicated region
        $region37: #{transformer_model_forward.1} parent=11 // pred_check
          %p537 = pneg %p205
        $region38: #{transformer_model_forward.1} parent=11 // pred_check_branch
          %539 = sbr.rel (%p537) target = $region40
        $region39: #{transformer_model_forward.1} parent=11 // pred_region
          _
        $region40: #{transformer_model_forward.1} parent=11 // pred_fallthru
          _
        // Predicated region
        $region41: #{transformer_model_forward.1} parent=11 // pred_check
          %p540 = pneg %p226
        $region42: #{transformer_model_forward.1} parent=11 // pred_check_branch
          %542 = sbr.rel (%p540) target = $region44
        $region43: #{transformer_model_forward.1} parent=11 // pred_region
          _
        $region44: #{transformer_model_forward.1} parent=11 // pred_fallthru
          _
        // Predicated region
        $region45: #{transformer_model_forward.1} parent=11 // pred_check
          %p543 = pneg %p247
        $region46: #{transformer_model_forward.1} parent=11 // pred_check_branch
          %545 = sbr.rel (%p543) target = $region48
        $region47: #{transformer_model_forward.1} parent=11 // pred_region
          _
        $region48: #{transformer_model_forward.1} parent=11 // pred_fallthru
          _
        // Predicated region
        $region49: #{transformer_model_forward.1} parent=11 // pred_check
          %p546 = pneg %p268
        $region50: #{transformer_model_forward.1} parent=11 // pred_check_branch
          %548 = sbr.rel (%p546) target = $region52
        $region51: #{transformer_model_forward.1} parent=11 // pred_region
          _
        $region52: #{transformer_model_forward.1} parent=11 // pred_fallthru
          _
        // Predicated region
        $region53: #{transformer_model_forward.1} parent=11 // pred_check
          %p549 = pneg %p289
        $region54: #{transformer_model_forward.1} parent=11 // pred_check_branch
          %551 = sbr.rel (%p549) target = $region56
        $region55: #{transformer_model_forward.1} parent=11 // pred_region
          _
        $region56: #{transformer_model_forward.1} parent=11 // pred_fallthru
          _
        // Predicated region
        $region57: #{transformer_model_forward.1} parent=11 // pred_check
          %p552 = pneg %p310
        $region58: #{transformer_model_forward.1} parent=11 // pred_check_branch
          %554 = sbr.rel (%p552) target = $region60
        $region59: #{transformer_model_forward.1} parent=11 // pred_region
          _
        $region60: #{transformer_model_forward.1} parent=11 // pred_fallthru
          _
        // Predicated region
        $region61: #{transformer_model_forward.1} parent=11 // pred_check
          %p555 = pneg %p331
        $region62: #{transformer_model_forward.1} parent=11 // pred_check_branch
          %557 = sbr.rel (%p555) target = $region64
        $region63: #{transformer_model_forward.1} parent=11 // pred_region
          _
        $region64: #{transformer_model_forward.1} parent=11 // pred_fallthru
          _
        // Predicated region
        $region65: #{transformer_model_forward.1} parent=11 // pred_check
          %p558 = pneg %p352
        $region66: #{transformer_model_forward.1} parent=11 // pred_check_branch
          %560 = sbr.rel (%p558) target = $region68
        $region67: #{transformer_model_forward.1} parent=11 // pred_region
          _
        $region68: #{transformer_model_forward.1} parent=11 // pred_fallthru
          _
        // Predicated region
        $region69: #{transformer_model_forward.1} parent=11 // pred_check
          %p561 = pneg %p373
        $region70: #{transformer_model_forward.1} parent=11 // pred_check_branch
          %563 = sbr.rel (%p561) target = $region72
        $region71: #{transformer_model_forward.1} parent=11 // pred_region
          _
        $region72: #{transformer_model_forward.1} parent=11 // pred_fallthru
          _
        // Predicated region
        $region73: #{transformer_model_forward.1} parent=11 // pred_check
          %p564 = pneg %p394
        $region74: #{transformer_model_forward.1} parent=11 // pred_check_branch
          %566 = sbr.rel (%p564) target = $region76
        $region75: #{transformer_model_forward.1} parent=11 // pred_region
          %568 = vsyncadd [#allocation3], 0
          %s570 = sshll.u32 %s16, 4
          %s571 = int_to_ptr.hbm [resolvable:$true] %s570
          %s572 = sshll.u32 [#allocation2], 4
          %s573 = int_to_ptr.vmem [resolvable:$true] %s572
          %575 = dma.hbm_to_vmem [thread:$0]  %s571, 16, %s573, [#allocation3]
        $region76: #{transformer_model_forward.1} parent=11 // pred_fallthru
          _
        // Predicated region
        $region77: #{transformer_model_forward.1} parent=11 // pred_check
          %p576 = pneg %p415
        $region78: #{transformer_model_forward.1} parent=11 // pred_check_branch
          %578 = sbr.rel (%p576) target = $region80
        $region79: #{transformer_model_forward.1} parent=11 // pred_region
          %580 = vsyncadd [#allocation6], 0
          %s581 = sshll.u32 %s17, 4
          %s582 = int_to_ptr.hbm [resolvable:$true] %s581
          %s583 = sshll.u32 [#allocation5], 4
          %s584 = int_to_ptr.vmem [resolvable:$true] %s583
          %589 = dma.hbm_to_vmem [thread:$0]  %s582, 256, %s584, [#allocation6], 64, 64, 4
        $region80: #{transformer_model_forward.1} parent=11 // pred_fallthru
          _
        // Predicated region
        $region81: #{transformer_model_forward.1} parent=11 // pred_check
          %p590 = pneg %p436
        $region82: #{transformer_model_forward.1} parent=11 // pred_check_branch
          %592 = sbr.rel (%p590) target = $region84
        $region83: #{transformer_model_forward.1} parent=11 // pred_region
          %594 = vsyncadd [#allocation6], 0
          %s596 = sshll.u32 %s18, 4
          %s597 = int_to_ptr.hbm [resolvable:$true] %s596
          %s598 = sshll.u32 [#allocation7], 4
          %s599 = int_to_ptr.vmem [resolvable:$true] %s598
          %601 = dma.hbm_to_vmem [thread:$0]  %s597, 16, %s599, [#allocation6]
        $region84: #{transformer_model_forward.1} parent=11 // pred_fallthru
          _
        // Predicated region
        $region85: #{transformer_model_forward.1} parent=11 // pred_check
          %p602 = pneg %p457
        $region86: #{transformer_model_forward.1} parent=11 // pred_check_branch
          %604 = sbr.rel (%p602) target = $region88
        $region87: #{transformer_model_forward.1} parent=11 // pred_region
          _
        $region88: #{transformer_model_forward.1} parent=11 // pred_fallthru
          _
        // Predicated region
        $region89: #{transformer_model_forward.1} parent=11 // pred_check
          %p605 = pneg %p478
        $region90: #{transformer_model_forward.1} parent=11 // pred_check_branch
          %607 = sbr.rel (%p605) target = $region92
        $region91: #{transformer_model_forward.1} parent=11 // pred_region
          _
        $region92: #{transformer_model_forward.1} parent=11 // pred_fallthru
          _
      $region12: #{transformer_model_forward.1} parent=5 // pred_fallthru
        _
      %p608 = scmp.lt.s32.totalorder %s32, 2
      // Predicated region
      $region93: #{transformer_model_forward.1} parent=5 // pred_check
        %p609 = pneg %p608
      $region94: #{transformer_model_forward.1} parent=5 // pred_check_branch
        %611 = sbr.rel (%p609) target = $region96
      $region95: #{transformer_model_forward.1} parent=5 // pred_region
        // Predicated region
        $region97: #{transformer_model_forward.1} parent=95 // pred_check
          %p612 = pneg %p52
        $region98: #{transformer_model_forward.1} parent=95 // pred_check_branch
          %614 = sbr.rel (%p612) target = $region100
        $region99: #{transformer_model_forward.1} parent=95 // pred_region
          %p615 = scmp.lt.s32.totalorder %s32, 1
          %s616 = scalar_select %p615, %s32, 1
          %s617 = smul.addr %s616, 8
          %s618 = scalar_lea.vmem %s0, %s617
        $region100: #{transformer_model_forward.1} parent=95 // pred_fallthru
          _
      $region96: #{transformer_model_forward.1} parent=5 // pred_fallthru
        _
      %p619 = scmp.le.s32.totalorder 1, %s32
      %p620 = scmp.lt.s32.totalorder %s32, 3
      %p621 = pnand %p619, %p620
      %p622 = pneg %p621
      // Predicated region
      $region101: #{transformer_model_forward.1} parent=5 // pred_check
        _
      $region102: #{transformer_model_forward.1} parent=5 // pred_check_branch
        %624 = sbr.rel (%p621) target = $region104
      $region103: #{transformer_model_forward.1} parent=5 // pred_region
        %s625 = ssub.s32 %s32, 1
        // Predicated region
        $region105: #{transformer_model_forward.1} parent=103 // pred_check
          %p626 = pneg %p394
        $region106: #{transformer_model_forward.1} parent=103 // pred_check_branch
          %628 = sbr.rel (%p626) target = $region108
        $region107: #{transformer_model_forward.1} parent=103 // pred_region
          %630 = dma.done [#allocation3], 16
        $region108: #{transformer_model_forward.1} parent=103 // pred_fallthru
          _
        // Predicated region
        $region109: #{transformer_model_forward.1} parent=103 // pred_check
          %p631 = pneg %p415
        $region110: #{transformer_model_forward.1} parent=103 // pred_check_branch
          %633 = sbr.rel (%p631) target = $region112
        $region111: #{transformer_model_forward.1} parent=103 // pred_region
          %635 = dma.done [#allocation6], 256
        $region112: #{transformer_model_forward.1} parent=103 // pred_fallthru
          _
        // Predicated region
        $region113: #{transformer_model_forward.1} parent=103 // pred_check
          %p636 = pneg %p436
        $region114: #{transformer_model_forward.1} parent=103 // pred_check_branch
          %638 = sbr.rel (%p636) target = $region116
        $region115: #{transformer_model_forward.1} parent=103 // pred_region
          %640 = dma.done [#allocation6], 16
        $region116: #{transformer_model_forward.1} parent=103 // pred_fallthru
          _
        %p641 = scmp.lt.s32.totalorder %s37, 1
        %s642 = scalar_select %p641, %s37, 1
        %s643 = smul.addr %s642, 8
        %s644 = scalar_lea.vmem %s0, %s643
        %p645 = pneg %p58
        %p646 = pneg %p55
        %p647 = pneg %p79
        %p648 = pneg %p76
        %p649 = pneg %p100
        %p650 = pneg %p97
        %p651 = pneg %p121
        %p652 = pneg %p118
        %p653 = pneg %p142
        %p654 = pneg %p139
        %p655 = pneg %p163
        %p656 = pneg %p160
        %p657 = pneg %p184
        %p658 = pneg %p181
        %p659 = pneg %p205
        %p660 = pneg %p202
        %p661 = pneg %p226
        %p662 = pneg %p223
        %p663 = pneg %p247
        %p664 = pneg %p244
        %p665 = pneg %p268
        %p666 = pneg %p265
        %p667 = pneg %p289
        %p668 = pneg %p286
        %p669 = pneg %p310
        %p670 = pneg %p307
        %p671 = pneg %p331
        %p672 = pneg %p328
        %p673 = pneg %p352
        %p674 = pneg %p349
        %p675 = pneg %p373
        %p676 = pneg %p370
        %p677 = pneg %p394
        %p678 = pneg %p391
        %p679 = pneg %p415
        %p680 = pneg %p412
        %p681 = pneg %p436
        %p682 = pneg %p433
        %p683 = pneg %p457
        %p684 = pneg %p454
        %p685 = pneg %p478
        %p686 = pneg %p475
        %p687 = pneg %p504
        %p688 = pneg %p501
        %s689 = sand.u32 %s491, 1
        %s690 = scalar_lea.sflag [#allocation4], %s689
        %s691 = sand.u32 %s491, 1
        %s692 = scalar_lea.vmem [#allocation8], %s691
        %p693 = scmp.lt.s32.totalorder %s37, 1
        %s694 = scalar_select %p693, %s37, 1
        %s695 = smul.addr %s694, 8
        %s696 = scalar_lea.vmem %s0, %s695
        %v698 = vlaneseq
        %v699 = vand.u32 %v698, 127
        %v700 = vld [vmem:[%s696] sm:$0xff]
        %701 = vset.pattern.permute.xlu0 0
        %702 = vperm.xlu0 %701, %v700
        %v703 = vpop.permute.xlu0 %702
        %vm704 = vcmp.eq.s32.totalorder %v703, %v699
        %v705 = vsel %vm704, 1, 0
        %v706 = vcvt.s32.f32 %v705
        %v707 = vpack.c.bf16 %v706, %v706
        %v708 = vld [vmem:[%s1] sm:$0xf]
        %v709 = vld [vmem:[%s1 + $0x4] sm:$0xf]
        %v710 = vld [vmem:[%s1 + $0x8] sm:$0xf]
        %v711 = vld [vmem:[%s1 + $0xc] sm:$0xf]
        %v712 = vld [vmem:[%s1 + $0x10] sm:$0xf]
        %v713 = vld [vmem:[%s1 + $0x14] sm:$0xf]
        %v714 = vld [vmem:[%s1 + $0x18] sm:$0x1]
        %v715 = vld [vmem:[%s2] sm:$0xff]
        %v723 = vunpack.c.l.b16 %v708
        %v724 = vunpack.c.l.b16 %v709
        %v725 = vunpack.c.l.b16 %v710
        %v726 = vunpack.c.l.b16 %v711
        %v727 = vunpack.c.l.b16 %v712
        %v728 = vunpack.c.l.b16 %v713
        %v729 = vunpack.c.l.b16 %v714
        %v730 = vpack.c.b16 %v724, %v723
        %v731 = vpack.c.b16 %v726, %v725
        %v732 = vpack.c.b16 %v728, %v727
        %v733 = vpack.c.b16 %v729, %v729
        %vm737 = vcmask 408576
        %v739 = vsel %vm737, %v707, 0
        %vm741 = vcmask 1040384
        %v743 = vsel %vm741, %v733, 0
        %745 = vmatpush.bf16.msra.mxu0 0
        %746 = vmatpush.bf16.msra.mxu0 0
        %747 = vmatpush.bf16.msra.mxu0 0
        %748 = vmatpush.bf16.msra.mxu0 0
        %749 = vmatpush.bf16.msra.mxu0 %v743
        %750 = vmatpush.bf16.msra.mxu0 %v732
        %751 = vmatpush.bf16.msra.mxu0 %v731
        %752 = vmatpush.bf16.msra.mxu0 %v730
        %753 = vmatmul.bf16.gmra.mxu0 %v739
        %v754 = vpop.f32.mrf.mxu0
        %v755 = vadd.f32 %v715, %v754
        %v756 = vpop.f32.mrf.mxu0
        %757 = vdwg.mxu0
        %v758 = vld [vmem:[%s3] sm:$0xf]
        %v759 = vld [vmem:[%s3 + $0x4] sm:$0xf]
        %v760 = vld [vmem:[%s3 + $0x8] sm:$0xf]
        %v761 = vld [vmem:[%s3 + $0xc] sm:$0xf]
        %v762 = vld [vmem:[%s4] sm:$0x1]
        %v763 = vld [vmem:[%s5] sm:$0xf]
        %v764 = vld [vmem:[%s5 + $0x4] sm:$0xf]
        %v765 = vld [vmem:[%s5 + $0x8] sm:$0xf]
        %v766 = vld [vmem:[%s5 + $0xc] sm:$0xf]
        %v767 = vld [vmem:[%s6] sm:$0x1]
        %v768 = vpack.c.bf16 %v755, %v755
        %v770 = vperm.slane %v762, 0
        %v776 = vunpack.c.l.b16 %v758
        %v777 = vunpack.c.l.b16 %v759
        %v778 = vunpack.c.l.b16 %v760
        %v779 = vunpack.c.l.b16 %v761
        %v780 = vpack.c.b16 %v777, %v776
        %v781 = vpack.c.b16 %v779, %v778
        %vm784 = vcmask 261120
        %v786 = vsel %vm784, %v768, 0
        %788 = vmatpush.bf16.msra.mxu0 0
        %789 = vmatpush.bf16.msra.mxu0 0
        %790 = vmatpush.bf16.msra.mxu0 0
        %791 = vmatpush.bf16.msra.mxu0 0
        %792 = vmatpush.bf16.msra.mxu0 0
        %793 = vmatpush.bf16.msra.mxu0 0
        %794 = vmatpush.bf16.msra.mxu0 %v781
        %795 = vmatpush.bf16.msra.mxu0 %v780
        %796 = vmatmul.bf16.gmra.mxu0 %v786
        %v797 = vpop.f32.mrf.mxu0
        %v798 = vadd.f32 %v770, %v797
        %v799 = vpop.f32.mrf.mxu0
        %800 = vdwg.mxu0
        %802 = vrot.lane.b32.xlu0 %v798, 120
        %v803 = vpop.permute.xlu0 %802
        %805 = vrot.lane.b32.xlu0 %v798, 112
        %v806 = vpop.permute.xlu0 %805
        %808 = vrot.lane.b32.xlu0 %v798, 104
        %v809 = vpop.permute.xlu0 %808
        %v811 = vpack.c.bf16 %v798, %v798
        %v812 = vpack.c.bf16 %v803, %v803
        %v813 = vpack.c.bf16 %v806, %v806
        %v814 = vpack.c.bf16 %v809, %v809
        %v816 = vunpack.c.l.b16 %v811
        %v817 = vpack.c.b16 %v816, %v816
        %818 = vrot.lane.b32.xlu0 %v817, 96
        %v819 = vpop.permute.xlu0 %818
        %vm820 = vcmask 64512
        %v822 = vsel %vm820, %v811, 0
        %v825 = vsel %vm820, %v819, 0
        %827 = vmatpush.bf16.xpose.msra.mxu0 0
        %828 = vmatpush.bf16.xpose.msra.mxu0 0
        %829 = vmatpush.bf16.xpose.msra.mxu0 0
        %830 = vmatpush.bf16.xpose.msra.mxu0 0
        %831 = vmatpush.bf16.xpose.msra.mxu0 0
        %832 = vmatpush.bf16.xpose.msra.mxu0 0
        %833 = vmatpush.bf16.xpose.msra.mxu0 0
        %834 = vmatpush.bf16.xpose.msra.mxu0 %v825
        %835 = vmatmul.bf16.gmra.mxu0 %v822
        %v836 = vpop.f32.mrf.mxu0
        %v837 = vadd.f32 0.0, %v836
        %v838 = vpop.f32.mrf.mxu0
        %839 = vdwg.mxu0
        %v841 = vunpack.c.l.b16 %v812
        %v842 = vpack.c.b16 %v841, %v841
        %843 = vrot.lane.b32.xlu0 %v842, 96
        %v844 = vpop.permute.xlu0 %843
        %v846 = vsel %vm820, %v812, 0
        %v849 = vsel %vm820, %v844, 0
        %851 = vmatpush.bf16.xpose.msra.mxu0 0
        %852 = vmatpush.bf16.xpose.msra.mxu0 0
        %853 = vmatpush.bf16.xpose.msra.mxu0 0
        %854 = vmatpush.bf16.xpose.msra.mxu0 0
        %855 = vmatpush.bf16.xpose.msra.mxu0 0
        %856 = vmatpush.bf16.xpose.msra.mxu0 0
        %857 = vmatpush.bf16.xpose.msra.mxu0 0
        %858 = vmatpush.bf16.xpose.msra.mxu0 %v849
        %859 = vmatmul.bf16.gmra.mxu0 %v846
        %v860 = vpop.f32.mrf.mxu0
        %v861 = vadd.f32 0.0, %v860
        %v862 = vpop.f32.mrf.mxu0
        %863 = vdwg.mxu0
        %v865 = vunpack.c.l.b16 %v813
        %v866 = vpack.c.b16 %v865, %v865
        %867 = vrot.lane.b32.xlu0 %v866, 96
        %v868 = vpop.permute.xlu0 %867
        %v870 = vsel %vm820, %v813, 0
        %v873 = vsel %vm820, %v868, 0
        %875 = vmatpush.bf16.xpose.msra.mxu0 0
        %876 = vmatpush.bf16.xpose.msra.mxu0 0
        %877 = vmatpush.bf16.xpose.msra.mxu0 0
        %878 = vmatpush.bf16.xpose.msra.mxu0 0
        %879 = vmatpush.bf16.xpose.msra.mxu0 0
        %880 = vmatpush.bf16.xpose.msra.mxu0 0
        %881 = vmatpush.bf16.xpose.msra.mxu0 0
        %882 = vmatpush.bf16.xpose.msra.mxu0 %v873
        %883 = vmatmul.bf16.gmra.mxu0 %v870
        %v884 = vpop.f32.mrf.mxu0
        %v885 = vadd.f32 0.0, %v884
        %v886 = vpop.f32.mrf.mxu0
        %887 = vdwg.mxu0
        %v889 = vunpack.c.l.b16 %v814
        %v890 = vpack.c.b16 %v889, %v889
        %891 = vrot.lane.b32.xlu0 %v890, 96
        %v892 = vpop.permute.xlu0 %891
        %v894 = vsel %vm820, %v814, 0
        %v897 = vsel %vm820, %v892, 0
        %899 = vmatpush.bf16.xpose.msra.mxu0 0
        %900 = vmatpush.bf16.xpose.msra.mxu0 0
        %901 = vmatpush.bf16.xpose.msra.mxu0 0
        %902 = vmatpush.bf16.xpose.msra.mxu0 0
        %903 = vmatpush.bf16.xpose.msra.mxu0 0
        %904 = vmatpush.bf16.xpose.msra.mxu0 0
        %905 = vmatpush.bf16.xpose.msra.mxu0 0
        %906 = vmatpush.bf16.xpose.msra.mxu0 %v897
        %907 = vmatmul.bf16.gmra.mxu0 %v894
        %v908 = vpop.f32.mrf.mxu0
        %v909 = vadd.f32 0.0, %v908
        %v910 = vpop.f32.mrf.mxu0
        %911 = vdwg.mxu0
        %v912 = vmul.f32 %v837, 0.35355338
        %v913 = vmul.f32 %v861, 0.35355338
        %v914 = vmul.f32 %v885, 0.35355338
        %v915 = vmul.f32 %v909, 0.35355338
        %v916 = vsel %vm820, %v912, -inf
        %917 = vmax.xlane.f32.xlu0 %v916
        %v918 = vpop.xlane.xlu0 %917
        %v919 = vsel %vm820, %v913, -inf
        %920 = vmax.xlane.f32.xlu0 %v919
        %v921 = vpop.xlane.xlu0 %920
        %v922 = vsel %vm820, %v914, -inf
        %923 = vmax.xlane.f32.xlu0 %v922
        %v924 = vpop.xlane.xlu0 %923
        %v925 = vsel %vm820, %v915, -inf
        %926 = vmax.xlane.f32.xlu0 %v925
        %v927 = vpop.xlane.xlu0 %926
        %v928 = vsub.f32 %v912, %v918
        %v929 = vsub.f32 %v913, %v921
        %v930 = vsub.f32 %v914, %v924
        %v931 = vsub.f32 %v915, %v927
        %v932 = vmul.f32 %v928, 1.442695
        %v933 = vpow.pop %v932
        %v934 = vmul.f32 %v929, 1.442695
        %v935 = vpow.pop %v934
        %v936 = vmul.f32 %v930, 1.442695
        %v937 = vpow.pop %v936
        %v938 = vmul.f32 %v931, 1.442695
        %v939 = vpow.pop %v938
        %v940 = vsel %vm820, %v933, 0.0
        %941 = vadd.xlane.f32.xlu0 %v940
        %v942 = vpop.xlane.xlu0 %941
        %v943 = vsel %vm820, %v935, 0.0
        %944 = vadd.xlane.f32.xlu0 %v943
        %v945 = vpop.xlane.xlu0 %944
        %v946 = vsel %vm820, %v937, 0.0
        %947 = vadd.xlane.f32.xlu0 %v946
        %v948 = vpop.xlane.xlu0 %947
        %v949 = vsel %vm820, %v939, 0.0
        %950 = vadd.xlane.f32.xlu0 %v949
        %v951 = vpop.xlane.xlu0 %950
        %v952 = vrcp.pop %v942
        %v953 = vrcp.pop %v945
        %v954 = vrcp.pop %v948
        %v955 = vrcp.pop %v951
        %v956 = vmul.f32 %v933, %v952
        %v957 = vmul.f32 %v935, %v953
        %v958 = vmul.f32 %v937, %v954
        %v959 = vmul.f32 %v939, %v955
        %v960 = vpack.c.bf16 %v956, %v956
        %v961 = vpack.c.bf16 %v957, %v957
        %v962 = vpack.c.bf16 %v958, %v958
        %v963 = vpack.c.bf16 %v959, %v959
        %964 = vrot.lane.b32.xlu0 %v817, 64
        %v965 = vpop.permute.xlu0 %964
        %v967 = vsel %vm820, %v960, 0
        %vm969 = vcmask 1043456
        %v971 = vsel %vm969, %v965, 0
        %973 = vmatpush.bf16.msra.mxu0 0
        %974 = vmatpush.bf16.msra.mxu0 0
        %975 = vmatpush.bf16.msra.mxu0 0
        %976 = vmatpush.bf16.msra.mxu0 0
        %977 = vmatpush.bf16.msra.mxu0 0
        %978 = vmatpush.bf16.msra.mxu0 0
        %979 = vmatpush.bf16.msra.mxu0 0
        %980 = vmatpush.bf16.msra.mxu0 %v971
        %981 = vmatmul.bf16.gmra.mxu0 %v967
        %v982 = vpop.f32.mrf.mxu0
        %v983 = vadd.f32 0.0, %v982
        %v984 = vpop.f32.mrf.mxu0
        %985 = vdwg.mxu0
        %986 = vrot.lane.b32.xlu0 %v842, 64
        %v987 = vpop.permute.xlu0 %986
        %v989 = vsel %vm820, %v961, 0
        %v992 = vsel %vm969, %v987, 0
        %994 = vmatpush.bf16.msra.mxu0 0
        %995 = vmatpush.bf16.msra.mxu0 0
        %996 = vmatpush.bf16.msra.mxu0 0
        %997 = vmatpush.bf16.msra.mxu0 0
        %998 = vmatpush.bf16.msra.mxu0 0
        %999 = vmatpush.bf16.msra.mxu0 0
        %1000 = vmatpush.bf16.msra.mxu0 0
        %1001 = vmatpush.bf16.msra.mxu0 %v992
        %1002 = vmatmul.bf16.gmra.mxu0 %v989
        %v1003 = vpop.f32.mrf.mxu0
        %v1004 = vadd.f32 0.0, %v1003
        %v1005 = vpop.f32.mrf.mxu0
        %1006 = vdwg.mxu0
        %1007 = vrot.lane.b32.xlu0 %v866, 64
        %v1008 = vpop.permute.xlu0 %1007
        %v1010 = vsel %vm820, %v962, 0
        %v1013 = vsel %vm969, %v1008, 0
        %1015 = vmatpush.bf16.msra.mxu0 0
        %1016 = vmatpush.bf16.msra.mxu0 0
        %1017 = vmatpush.bf16.msra.mxu0 0
        %1018 = vmatpush.bf16.msra.mxu0 0
        %1019 = vmatpush.bf16.msra.mxu0 0
        %1020 = vmatpush.bf16.msra.mxu0 0
        %1021 = vmatpush.bf16.msra.mxu0 0
        %1022 = vmatpush.bf16.msra.mxu0 %v1013
        %1023 = vmatmul.bf16.gmra.mxu0 %v1010
        %v1024 = vpop.f32.mrf.mxu0
        %v1025 = vadd.f32 0.0, %v1024
        %v1026 = vpop.f32.mrf.mxu0
        %1027 = vdwg.mxu0
        %1028 = vrot.lane.b32.xlu0 %v890, 64
        %v1029 = vpop.permute.xlu0 %1028
        %v1031 = vsel %vm820, %v963, 0
        %v1034 = vsel %vm969, %v1029, 0
        %1036 = vmatpush.bf16.msra.mxu0 0
        %1037 = vmatpush.bf16.msra.mxu0 0
        %1038 = vmatpush.bf16.msra.mxu0 0
        %1039 = vmatpush.bf16.msra.mxu0 0
        %1040 = vmatpush.bf16.msra.mxu0 0
        %1041 = vmatpush.bf16.msra.mxu0 0
        %1042 = vmatpush.bf16.msra.mxu0 0
        %1043 = vmatpush.bf16.msra.mxu0 %v1034
        %1044 = vmatmul.bf16.gmra.mxu0 %v1031
        %v1045 = vpop.f32.mrf.mxu0
        %v1046 = vadd.f32 0.0, %v1045
        %v1047 = vpop.f32.mrf.mxu0
        %1048 = vdwg.mxu0
        %v1049 = vpack.c.bf16 %v983, %v983
        %v1050 = vpack.c.bf16 %v1004, %v1004
        %v1051 = vpack.c.bf16 %v1025, %v1025
        %v1052 = vpack.c.bf16 %v1046, %v1046
        %v1054 = vsel %vm820, %v1049, 0
        %v1057 = vsel %vm969, %v763, 0
        %1059 = vmatpush.bf16.msra.mxu0 0
        %1060 = vmatpush.bf16.msra.mxu0 0
        %1061 = vmatpush.bf16.msra.mxu0 0
        %1062 = vmatpush.bf16.msra.mxu0 0
        %1063 = vmatpush.bf16.msra.mxu0 0
        %1064 = vmatpush.bf16.msra.mxu0 0
        %1065 = vmatpush.bf16.msra.mxu0 0
        %1066 = vmatpush.bf16.msra.mxu0 %v1057
        %1067 = vmatmul.bf16.gmra.mxu0 %v1054
        %v1068 = vpop.f32.mrf.mxu0
        %v1069 = vadd.f32 0.0, %v1068
        %v1070 = vpop.f32.mrf.mxu0
        %1071 = vdwg.mxu0
        %v1073 = vsel %vm820, %v1050, 0
        %v1076 = vsel %vm969, %v764, 0
        %1078 = vmatpush.bf16.msra.mxu0 0
        %1079 = vmatpush.bf16.msra.mxu0 0
        %1080 = vmatpush.bf16.msra.mxu0 0
        %1081 = vmatpush.bf16.msra.mxu0 0
        %1082 = vmatpush.bf16.msra.mxu0 0
        %1083 = vmatpush.bf16.msra.mxu0 0
        %1084 = vmatpush.bf16.msra.mxu0 0
        %1085 = vmatpush.bf16.msra.mxu0 %v1076
        %1086 = vmatmul.bf16.gmra.mxu0 %v1073
        %v1087 = vpop.f32.mrf.mxu0
        %v1088 = vadd.f32 0.0, %v1087
        %v1089 = vpop.f32.mrf.mxu0
        %1090 = vdwg.mxu0
        %v1092 = vsel %vm820, %v1051, 0
        %v1095 = vsel %vm969, %v765, 0
        %1097 = vmatpush.bf16.msra.mxu0 0
        %1098 = vmatpush.bf16.msra.mxu0 0
        %1099 = vmatpush.bf16.msra.mxu0 0
        %1100 = vmatpush.bf16.msra.mxu0 0
        %1101 = vmatpush.bf16.msra.mxu0 0
        %1102 = vmatpush.bf16.msra.mxu0 0
        %1103 = vmatpush.bf16.msra.mxu0 0
        %1104 = vmatpush.bf16.msra.mxu0 %v1095
        %1105 = vmatmul.bf16.gmra.mxu0 %v1092
        %v1106 = vpop.f32.mrf.mxu0
        %v1107 = vadd.f32 0.0, %v1106
        %v1108 = vpop.f32.mrf.mxu0
        %1109 = vdwg.mxu0
        %v1111 = vsel %vm820, %v1052, 0
        %v1114 = vsel %vm969, %v766, 0
        %1116 = vmatpush.bf16.msra.mxu0 0
        %1117 = vmatpush.bf16.msra.mxu0 0
        %1118 = vmatpush.bf16.msra.mxu0 0
        %1119 = vmatpush.bf16.msra.mxu0 0
        %1120 = vmatpush.bf16.msra.mxu0 0
        %1121 = vmatpush.bf16.msra.mxu0 0
        %1122 = vmatpush.bf16.msra.mxu0 0
        %1123 = vmatpush.bf16.msra.mxu0 %v1114
        %1124 = vmatmul.bf16.gmra.mxu0 %v1111
        %v1125 = vpop.f32.mrf.mxu0
        %v1126 = vadd.f32 0.0, %v1125
        %v1127 = vpop.f32.mrf.mxu0
        %1128 = vdwg.mxu0
        %v1129 = vsel %vm784, %v1069, 0.0
        %v1130 = vsel %vm784, %v1088, 0.0
        %v1131 = vadd.f32 %v1129, %v1130
        %v1132 = vsel %vm784, %v1107, 0.0
        %v1133 = vadd.f32 %v1131, %v1132
        %v1134 = vsel %vm784, %v1126, 0.0
        %v1135 = vadd.f32 %v1133, %v1134
        %v1137 = vperm.slane %v767, 0
        %v1139 = vadd.f32 %v1135, %v1137
        %v1140 = vadd.f32 %v755, %v1139
        %v1141 = vld [vmem:[%s7] sm:$0x1]
        %v1142 = vld [vmem:[%s8] sm:$0x1]
        %v1143 = vsel %vm784, %v1140, 0.0
        %1144 = vadd.xlane.f32.xlu0 %v1143
        %v1145 = vpop.xlane.xlu0 %1144
        %v1146 = vrcp.pop 32.0
        %v1147 = vmul.f32 32.0, %v1146
        %v1148 = vsub.f32 1.0, %v1147
        %v1149 = vmul.f32 %v1146, %v1148
        %v1150 = vadd.f32 %v1146, %v1149
        %vm1151 = vweird.f32 %v1146
        %v1152 = vsel %vm1151, %v1146, %v1150
        %v1153 = vmul.f32 %v1145, %v1152
        %v1154 = vsub.f32 %v1140, %v1153
        %v1155 = vmul.f32 %v1154, %v1154
        %v1156 = vsel %vm784, %v1155, 0.0
        %1157 = vadd.xlane.f32.xlu0 %v1156
        %v1158 = vpop.xlane.xlu0 %1157
        %v1159 = vmul.f32 %v1158, %v1152
        %v1160 = vadd.f32 %v1159, 1e-05
        %v1161 = vrsqrt.pop %v1160
        %v1162 = vmul.f32 %v1161, %v1160
        %v1163 = vmul.f32 %v1162, %v1161
        %v1164 = vmul.f32 0.5, %v1163
        %v1165 = vsub.f32 1.5, %v1164
        %v1166 = vmul.f32 %v1161, %v1165
        %vm1167 = vweird.f32 %v1160
        %vm1168 = vweird.f32 %v1161
        %vm1169 = vmor %vm1167, %vm1168
        %v1170 = vsel %vm1169, %v1161, %v1166
        %v1171 = vmul.f32 %v1154, %v1170
        %v1173 = vperm.slane %v1141, 0
        %v1175 = vmul.f32 %v1171, %v1173
        %v1177 = vperm.slane %v1142, 0
        %v1179 = vadd.f32 %v1175, %v1177
        %v1180 = vpack.c.bf16 %v1179, %v1179
        %v1181 = vld [vmem:[%s9] sm:$0xf]
        %v1182 = vld [vmem:[%s9 + $0x4] sm:$0xf]
        %v1183 = vld [vmem:[%s9 + $0x8] sm:$0xf]
        %v1184 = vld [vmem:[%s9 + $0xc] sm:$0xf]
        %v1185 = vld [vmem:[%s10] sm:$0x1]
        %v1187 = vperm.slane %v1185, 0
        %v1193 = vunpack.c.l.b16 %v1181
        %v1194 = vunpack.c.l.b16 %v1182
        %v1195 = vunpack.c.l.b16 %v1183
        %v1196 = vunpack.c.l.b16 %v1184
        %v1197 = vpack.c.b16 %v1194, %v1193
        %v1198 = vpack.c.b16 %v1196, %v1195
        %v1202 = vsel %vm784, %v1180, 0
        %1204 = vmatpush.bf16.msra.mxu0 0
        %1205 = vmatpush.bf16.msra.mxu0 0
        %1206 = vmatpush.bf16.msra.mxu0 0
        %1207 = vmatpush.bf16.msra.mxu0 0
        %1208 = vmatpush.bf16.msra.mxu0 0
        %1209 = vmatpush.bf16.msra.mxu0 0
        %1210 = vmatpush.bf16.msra.mxu0 %v1198
        %1211 = vmatpush.bf16.msra.mxu0 %v1197
        %1212 = vmatmul.bf16.gmra.mxu0 %v1202
        %v1213 = vpop.f32.mrf.mxu0
        %v1214 = vadd.f32 %v1187, %v1213
        %v1215 = vpop.f32.mrf.mxu0
        %1216 = vdwg.mxu0
        %v1217 = vmax.f32 %v1214, 0.0
        %v1218 = vpack.c.bf16 %v1217, %v1217
        %v1219 = vld [vmem:[%s11] sm:$0xf]
        %v1220 = vld [vmem:[%s11 + $0x4] sm:$0xf]
        %v1221 = vld [vmem:[%s11 + $0x8] sm:$0xf]
        %v1222 = vld [vmem:[%s11 + $0xc] sm:$0xf]
        %v1223 = vld [vmem:[%s11 + $0x10] sm:$0xf]
        %v1224 = vld [vmem:[%s11 + $0x14] sm:$0xf]
        %v1225 = vld [vmem:[%s11 + $0x18] sm:$0xf]
        %v1226 = vld [vmem:[%s11 + $0x1c] sm:$0xf]
        %v1227 = vld [vmem:[%s12] sm:$0x1]
        %v1229 = vperm.slane %v1227, 0
        %v1239 = vunpack.c.l.b16 %v1219
        %v1240 = vunpack.c.l.b16 %v1220
        %v1241 = vunpack.c.l.b16 %v1221
        %v1242 = vunpack.c.l.b16 %v1222
        %v1243 = vunpack.c.l.b16 %v1223
        %v1244 = vunpack.c.l.b16 %v1224
        %v1245 = vunpack.c.l.b16 %v1225
        %v1246 = vunpack.c.l.b16 %v1226
        %v1247 = vpack.c.b16 %v1240, %v1239
        %v1248 = vpack.c.b16 %v1242, %v1241
        %v1249 = vpack.c.b16 %v1244, %v1243
        %v1250 = vpack.c.b16 %v1246, %v1245
        %vm1255 = vcmask 523264
        %v1257 = vsel %vm1255, %v1218, 0
        %1259 = vmatpush.bf16.msra.mxu0 0
        %1260 = vmatpush.bf16.msra.mxu0 0
        %1261 = vmatpush.bf16.msra.mxu0 0
        %1262 = vmatpush.bf16.msra.mxu0 0
        %1263 = vmatpush.bf16.msra.mxu0 %v1250
        %1264 = vmatpush.bf16.msra.mxu0 %v1249
        %1265 = vmatpush.bf16.msra.mxu0 %v1248
        %1266 = vmatpush.bf16.msra.mxu0 %v1247
        %1267 = vmatmul.bf16.gmra.mxu0 %v1257
        %v1268 = vpop.f32.mrf.mxu0
        %v1269 = vadd.f32 %v1229, %v1268
        %v1270 = vpop.f32.mrf.mxu0
        %1271 = vdwg.mxu0
        %v1272 = vadd.f32 %v1179, %v1269
        %v1273 = vld [vmem:[%s13] sm:$0x1]
        %v1274 = vld [vmem:[%s14] sm:$0x1]
        %v1275 = vsel %vm784, %v1272, 0.0
        %1276 = vadd.xlane.f32.xlu0 %v1275
        %v1277 = vpop.xlane.xlu0 %1276
        %v1278 = vmul.f32 %v1277, %v1152
        %v1279 = vsub.f32 %v1272, %v1278
        %v1280 = vmul.f32 %v1279, %v1279
        %v1281 = vsel %vm784, %v1280, 0.0
        %1282 = vadd.xlane.f32.xlu0 %v1281
        %v1283 = vpop.xlane.xlu0 %1282
        %v1284 = vmul.f32 %v1283, %v1152
        %v1285 = vadd.f32 %v1284, 1e-05
        %v1286 = vrsqrt.pop %v1285
        %v1287 = vmul.f32 %v1286, %v1285
        %v1288 = vmul.f32 %v1287, %v1286
        %v1289 = vmul.f32 0.5, %v1288
        %v1290 = vsub.f32 1.5, %v1289
        %v1291 = vmul.f32 %v1286, %v1290
        %vm1292 = vweird.f32 %v1285
        %vm1293 = vweird.f32 %v1286
        %vm1294 = vmor %vm1292, %vm1293
        %v1295 = vsel %vm1294, %v1286, %v1291
        %v1296 = vmul.f32 %v1279, %v1295
        %v1298 = vperm.slane %v1273, 0
        %v1300 = vmul.f32 %v1296, %v1298
        %v1302 = vperm.slane %v1274, 0
        %v1304 = vadd.f32 %v1300, %v1302
        %s1305 = scalar_lea.vmem %s3, 16
        %v1306 = vld [vmem:[%s1305] sm:$0xf]
        %v1307 = vld [vmem:[%s1305 + $0x4] sm:$0xf]
        %v1308 = vld [vmem:[%s1305 + $0x8] sm:$0xf]
        %v1309 = vld [vmem:[%s1305 + $0xc] sm:$0xf]
        %s1310 = scalar_lea.vmem %s4, 1
        %v1311 = vld [vmem:[%s1310] sm:$0x1]
        %s1312 = scalar_lea.vmem %s5, 16
        %v1313 = vld [vmem:[%s1312] sm:$0xf]
        %v1314 = vld [vmem:[%s1312 + $0x4] sm:$0xf]
        %v1315 = vld [vmem:[%s1312 + $0x8] sm:$0xf]
        %v1316 = vld [vmem:[%s1312 + $0xc] sm:$0xf]
        %s1317 = scalar_lea.vmem %s6, 1
        %v1318 = vld [vmem:[%s1317] sm:$0x1]
        %v1319 = vpack.c.bf16 %v1304, %v1304
        %v1321 = vperm.slane %v1311, 0
        %v1327 = vunpack.c.l.b16 %v1306
        %v1328 = vunpack.c.l.b16 %v1307
        %v1329 = vunpack.c.l.b16 %v1308
        %v1330 = vunpack.c.l.b16 %v1309
        %v1331 = vpack.c.b16 %v1328, %v1327
        %v1332 = vpack.c.b16 %v1330, %v1329
        %v1336 = vsel %vm784, %v1319, 0
        %1338 = vmatpush.bf16.msra.mxu0 0
        %1339 = vmatpush.bf16.msra.mxu0 0
        %1340 = vmatpush.bf16.msra.mxu0 0
        %1341 = vmatpush.bf16.msra.mxu0 0
        %1342 = vmatpush.bf16.msra.mxu0 0
        %1343 = vmatpush.bf16.msra.mxu0 0
        %1344 = vmatpush.bf16.msra.mxu0 %v1332
        %1345 = vmatpush.bf16.msra.mxu0 %v1331
        %1346 = vmatmul.bf16.gmra.mxu0 %v1336
        %v1347 = vpop.f32.mrf.mxu0
        %v1348 = vadd.f32 %v1321, %v1347
        %v1349 = vpop.f32.mrf.mxu0
        %1350 = vdwg.mxu0
        %1352 = vrot.lane.b32.xlu0 %v1348, 120
        %v1353 = vpop.permute.xlu0 %1352
        %1355 = vrot.lane.b32.xlu0 %v1348, 112
        %v1356 = vpop.permute.xlu0 %1355
        %1358 = vrot.lane.b32.xlu0 %v1348, 104
        %v1359 = vpop.permute.xlu0 %1358
        %v1361 = vpack.c.bf16 %v1348, %v1348
        %v1362 = vpack.c.bf16 %v1353, %v1353
        %v1363 = vpack.c.bf16 %v1356, %v1356
        %v1364 = vpack.c.bf16 %v1359, %v1359
        %v1366 = vunpack.c.l.b16 %v1361
        %v1367 = vpack.c.b16 %v1366, %v1366
        %1368 = vrot.lane.b32.xlu0 %v1367, 96
        %v1369 = vpop.permute.xlu0 %1368
        %v1371 = vsel %vm820, %v1361, 0
        %v1374 = vsel %vm820, %v1369, 0
        %1376 = vmatpush.bf16.xpose.msra.mxu0 0
        %1377 = vmatpush.bf16.xpose.msra.mxu0 0
        %1378 = vmatpush.bf16.xpose.msra.mxu0 0
        %1379 = vmatpush.bf16.xpose.msra.mxu0 0
        %1380 = vmatpush.bf16.xpose.msra.mxu0 0
        %1381 = vmatpush.bf16.xpose.msra.mxu0 0
        %1382 = vmatpush.bf16.xpose.msra.mxu0 0
        %1383 = vmatpush.bf16.xpose.msra.mxu0 %v1374
        %1384 = vmatmul.bf16.gmra.mxu0 %v1371
        %v1385 = vpop.f32.mrf.mxu0
        %v1386 = vadd.f32 0.0, %v1385
        %v1387 = vpop.f32.mrf.mxu0
        %1388 = vdwg.mxu0
        %v1390 = vunpack.c.l.b16 %v1362
        %v1391 = vpack.c.b16 %v1390, %v1390
        %1392 = vrot.lane.b32.xlu0 %v1391, 96
        %v1393 = vpop.permute.xlu0 %1392
        %v1395 = vsel %vm820, %v1362, 0
        %v1398 = vsel %vm820, %v1393, 0
        %1400 = vmatpush.bf16.xpose.msra.mxu0 0
        %1401 = vmatpush.bf16.xpose.msra.mxu0 0
        %1402 = vmatpush.bf16.xpose.msra.mxu0 0
        %1403 = vmatpush.bf16.xpose.msra.mxu0 0
        %1404 = vmatpush.bf16.xpose.msra.mxu0 0
        %1405 = vmatpush.bf16.xpose.msra.mxu0 0
        %1406 = vmatpush.bf16.xpose.msra.mxu0 0
        %1407 = vmatpush.bf16.xpose.msra.mxu0 %v1398
        %1408 = vmatmul.bf16.gmra.mxu0 %v1395
        %v1409 = vpop.f32.mrf.mxu0
        %v1410 = vadd.f32 0.0, %v1409
        %v1411 = vpop.f32.mrf.mxu0
        %1412 = vdwg.mxu0
        %v1414 = vunpack.c.l.b16 %v1363
        %v1415 = vpack.c.b16 %v1414, %v1414
        %1416 = vrot.lane.b32.xlu0 %v1415, 96
        %v1417 = vpop.permute.xlu0 %1416
        %v1419 = vsel %vm820, %v1363, 0
        %v1422 = vsel %vm820, %v1417, 0
        %1424 = vmatpush.bf16.xpose.msra.mxu0 0
        %1425 = vmatpush.bf16.xpose.msra.mxu0 0
        %1426 = vmatpush.bf16.xpose.msra.mxu0 0
        %1427 = vmatpush.bf16.xpose.msra.mxu0 0
        %1428 = vmatpush.bf16.xpose.msra.mxu0 0
        %1429 = vmatpush.bf16.xpose.msra.mxu0 0
        %1430 = vmatpush.bf16.xpose.msra.mxu0 0
        %1431 = vmatpush.bf16.xpose.msra.mxu0 %v1422
        %1432 = vmatmul.bf16.gmra.mxu0 %v1419
        %v1433 = vpop.f32.mrf.mxu0
        %v1434 = vadd.f32 0.0, %v1433
        %v1435 = vpop.f32.mrf.mxu0
        %1436 = vdwg.mxu0
        %v1438 = vunpack.c.l.b16 %v1364
        %v1439 = vpack.c.b16 %v1438, %v1438
        %1440 = vrot.lane.b32.xlu0 %v1439, 96
        %v1441 = vpop.permute.xlu0 %1440
        %v1443 = vsel %vm820, %v1364, 0
        %v1446 = vsel %vm820, %v1441, 0
        %1448 = vmatpush.bf16.xpose.msra.mxu0 0
        %1449 = vmatpush.bf16.xpose.msra.mxu0 0
        %1450 = vmatpush.bf16.xpose.msra.mxu0 0
        %1451 = vmatpush.bf16.xpose.msra.mxu0 0
        %1452 = vmatpush.bf16.xpose.msra.mxu0 0
        %1453 = vmatpush.bf16.xpose.msra.mxu0 0
        %1454 = vmatpush.bf16.xpose.msra.mxu0 0
        %1455 = vmatpush.bf16.xpose.msra.mxu0 %v1446
        %1456 = vmatmul.bf16.gmra.mxu0 %v1443
        %v1457 = vpop.f32.mrf.mxu0
        %v1458 = vadd.f32 0.0, %v1457
        %v1459 = vpop.f32.mrf.mxu0
        %1460 = vdwg.mxu0
        %v1461 = vmul.f32 %v1386, 0.35355338
        %v1462 = vmul.f32 %v1410, 0.35355338
        %v1463 = vmul.f32 %v1434, 0.35355338
        %v1464 = vmul.f32 %v1458, 0.35355338
        %v1465 = vsel %vm820, %v1461, -inf
        %1466 = vmax.xlane.f32.xlu0 %v1465
        %v1467 = vpop.xlane.xlu0 %1466
        %v1468 = vsel %vm820, %v1462, -inf
        %1469 = vmax.xlane.f32.xlu0 %v1468
        %v1470 = vpop.xlane.xlu0 %1469
        %v1471 = vsel %vm820, %v1463, -inf
        %1472 = vmax.xlane.f32.xlu0 %v1471
        %v1473 = vpop.xlane.xlu0 %1472
        %v1474 = vsel %vm820, %v1464, -inf
        %1475 = vmax.xlane.f32.xlu0 %v1474
        %v1476 = vpop.xlane.xlu0 %1475
        %v1477 = vsub.f32 %v1461, %v1467
        %v1478 = vsub.f32 %v1462, %v1470
        %v1479 = vsub.f32 %v1463, %v1473
        %v1480 = vsub.f32 %v1464, %v1476
        %v1481 = vmul.f32 %v1477, 1.442695
        %v1482 = vpow.pop %v1481
        %v1483 = vmul.f32 %v1478, 1.442695
        %v1484 = vpow.pop %v1483
        %v1485 = vmul.f32 %v1479, 1.442695
        %v1486 = vpow.pop %v1485
        %v1487 = vmul.f32 %v1480, 1.442695
        %v1488 = vpow.pop %v1487
        %v1489 = vsel %vm820, %v1482, 0.0
        %1490 = vadd.xlane.f32.xlu0 %v1489
        %v1491 = vpop.xlane.xlu0 %1490
        %v1492 = vsel %vm820, %v1484, 0.0
        %1493 = vadd.xlane.f32.xlu0 %v1492
        %v1494 = vpop.xlane.xlu0 %1493
        %v1495 = vsel %vm820, %v1486, 0.0
        %1496 = vadd.xlane.f32.xlu0 %v1495
        %v1497 = vpop.xlane.xlu0 %1496
        %v1498 = vsel %vm820, %v1488, 0.0
        %1499 = vadd.xlane.f32.xlu0 %v1498
        %v1500 = vpop.xlane.xlu0 %1499
        %v1501 = vrcp.pop %v1491
        %v1502 = vrcp.pop %v1494
        %v1503 = vrcp.pop %v1497
        %v1504 = vrcp.pop %v1500
        %v1505 = vmul.f32 %v1482, %v1501
        %v1506 = vmul.f32 %v1484, %v1502
        %v1507 = vmul.f32 %v1486, %v1503
        %v1508 = vmul.f32 %v1488, %v1504
        %v1509 = vpack.c.bf16 %v1505, %v1505
        %v1510 = vpack.c.bf16 %v1506, %v1506
        %v1511 = vpack.c.bf16 %v1507, %v1507
        %v1512 = vpack.c.bf16 %v1508, %v1508
        %1513 = vrot.lane.b32.xlu0 %v1367, 64
        %v1514 = vpop.permute.xlu0 %1513
        %v1516 = vsel %vm820, %v1509, 0
        %v1519 = vsel %vm969, %v1514, 0
        %1521 = vmatpush.bf16.msra.mxu0 0
        %1522 = vmatpush.bf16.msra.mxu0 0
        %1523 = vmatpush.bf16.msra.mxu0 0
        %1524 = vmatpush.bf16.msra.mxu0 0
        %1525 = vmatpush.bf16.msra.mxu0 0
        %1526 = vmatpush.bf16.msra.mxu0 0
        %1527 = vmatpush.bf16.msra.mxu0 0
        %1528 = vmatpush.bf16.msra.mxu0 %v1519
        %1529 = vmatmul.bf16.gmra.mxu0 %v1516
        %v1530 = vpop.f32.mrf.mxu0
        %v1531 = vadd.f32 0.0, %v1530
        %v1532 = vpop.f32.mrf.mxu0
        %1533 = vdwg.mxu0
        %1534 = vrot.lane.b32.xlu0 %v1391, 64
        %v1535 = vpop.permute.xlu0 %1534
        %v1537 = vsel %vm820, %v1510, 0
        %v1540 = vsel %vm969, %v1535, 0
        %1542 = vmatpush.bf16.msra.mxu0 0
        %1543 = vmatpush.bf16.msra.mxu0 0
        %1544 = vmatpush.bf16.msra.mxu0 0
        %1545 = vmatpush.bf16.msra.mxu0 0
        %1546 = vmatpush.bf16.msra.mxu0 0
        %1547 = vmatpush.bf16.msra.mxu0 0
        %1548 = vmatpush.bf16.msra.mxu0 0
        %1549 = vmatpush.bf16.msra.mxu0 %v1540
        %1550 = vmatmul.bf16.gmra.mxu0 %v1537
        %v1551 = vpop.f32.mrf.mxu0
        %v1552 = vadd.f32 0.0, %v1551
        %v1553 = vpop.f32.mrf.mxu0
        %1554 = vdwg.mxu0
        %1555 = vrot.lane.b32.xlu0 %v1415, 64
        %v1556 = vpop.permute.xlu0 %1555
        %v1558 = vsel %vm820, %v1511, 0
        %v1561 = vsel %vm969, %v1556, 0
        %1563 = vmatpush.bf16.msra.mxu0 0
        %1564 = vmatpush.bf16.msra.mxu0 0
        %1565 = vmatpush.bf16.msra.mxu0 0
        %1566 = vmatpush.bf16.msra.mxu0 0
        %1567 = vmatpush.bf16.msra.mxu0 0
        %1568 = vmatpush.bf16.msra.mxu0 0
        %1569 = vmatpush.bf16.msra.mxu0 0
        %1570 = vmatpush.bf16.msra.mxu0 %v1561
        %1571 = vmatmul.bf16.gmra.mxu0 %v1558
        %v1572 = vpop.f32.mrf.mxu0
        %v1573 = vadd.f32 0.0, %v1572
        %v1574 = vpop.f32.mrf.mxu0
        %1575 = vdwg.mxu0
        %1576 = vrot.lane.b32.xlu0 %v1439, 64
        %v1577 = vpop.permute.xlu0 %1576
        %v1579 = vsel %vm820, %v1512, 0
        %v1582 = vsel %vm969, %v1577, 0
        %1584 = vmatpush.bf16.msra.mxu0 0
        %1585 = vmatpush.bf16.msra.mxu0 0
        %1586 = vmatpush.bf16.msra.mxu0 0
        %1587 = vmatpush.bf16.msra.mxu0 0
        %1588 = vmatpush.bf16.msra.mxu0 0
        %1589 = vmatpush.bf16.msra.mxu0 0
        %1590 = vmatpush.bf16.msra.mxu0 0
        %1591 = vmatpush.bf16.msra.mxu0 %v1582
        %1592 = vmatmul.bf16.gmra.mxu0 %v1579
        %v1593 = vpop.f32.mrf.mxu0
        %v1594 = vadd.f32 0.0, %v1593
        %v1595 = vpop.f32.mrf.mxu0
        %1596 = vdwg.mxu0
        %v1597 = vpack.c.bf16 %v1531, %v1531
        %v1598 = vpack.c.bf16 %v1552, %v1552
        %v1599 = vpack.c.bf16 %v1573, %v1573
        %v1600 = vpack.c.bf16 %v1594, %v1594
        %v1602 = vsel %vm820, %v1597, 0
        %v1605 = vsel %vm969, %v1313, 0
        %1607 = vmatpush.bf16.msra.mxu0 0
        %1608 = vmatpush.bf16.msra.mxu0 0
        %1609 = vmatpush.bf16.msra.mxu0 0
        %1610 = vmatpush.bf16.msra.mxu0 0
        %1611 = vmatpush.bf16.msra.mxu0 0
        %1612 = vmatpush.bf16.msra.mxu0 0
        %1613 = vmatpush.bf16.msra.mxu0 0
        %1614 = vmatpush.bf16.msra.mxu0 %v1605
        %1615 = vmatmul.bf16.gmra.mxu0 %v1602
        %v1616 = vpop.f32.mrf.mxu0
        %v1617 = vadd.f32 0.0, %v1616
        %v1618 = vpop.f32.mrf.mxu0
        %1619 = vdwg.mxu0
        %v1621 = vsel %vm820, %v1598, 0
        %v1624 = vsel %vm969, %v1314, 0
        %1626 = vmatpush.bf16.msra.mxu0 0
        %1627 = vmatpush.bf16.msra.mxu0 0
        %1628 = vmatpush.bf16.msra.mxu0 0
        %1629 = vmatpush.bf16.msra.mxu0 0
        %1630 = vmatpush.bf16.msra.mxu0 0
        %1631 = vmatpush.bf16.msra.mxu0 0
        %1632 = vmatpush.bf16.msra.mxu0 0
        %1633 = vmatpush.bf16.msra.mxu0 %v1624
        %1634 = vmatmul.bf16.gmra.mxu0 %v1621
        %v1635 = vpop.f32.mrf.mxu0
        %v1636 = vadd.f32 0.0, %v1635
        %v1637 = vpop.f32.mrf.mxu0
        %1638 = vdwg.mxu0
        %v1640 = vsel %vm820, %v1599, 0
        %v1643 = vsel %vm969, %v1315, 0
        %1645 = vmatpush.bf16.msra.mxu0 0
        %1646 = vmatpush.bf16.msra.mxu0 0
        %1647 = vmatpush.bf16.msra.mxu0 0
        %1648 = vmatpush.bf16.msra.mxu0 0
        %1649 = vmatpush.bf16.msra.mxu0 0
        %1650 = vmatpush.bf16.msra.mxu0 0
        %1651 = vmatpush.bf16.msra.mxu0 0
        %1652 = vmatpush.bf16.msra.mxu0 %v1643
        %1653 = vmatmul.bf16.gmra.mxu0 %v1640
        %v1654 = vpop.f32.mrf.mxu0
        %v1655 = vadd.f32 0.0, %v1654
        %v1656 = vpop.f32.mrf.mxu0
        %1657 = vdwg.mxu0
        %v1659 = vsel %vm820, %v1600, 0
        %v1662 = vsel %vm969, %v1316, 0
        %1664 = vmatpush.bf16.msra.mxu0 0
        %1665 = vmatpush.bf16.msra.mxu0 0
        %1666 = vmatpush.bf16.msra.mxu0 0
        %1667 = vmatpush.bf16.msra.mxu0 0
        %1668 = vmatpush.bf16.msra.mxu0 0
        %1669 = vmatpush.bf16.msra.mxu0 0
        %1670 = vmatpush.bf16.msra.mxu0 0
        %1671 = vmatpush.bf16.msra.mxu0 %v1662
        %1672 = vmatmul.bf16.gmra.mxu0 %v1659
        %v1673 = vpop.f32.mrf.mxu0
        %v1674 = vadd.f32 0.0, %v1673
        %v1675 = vpop.f32.mrf.mxu0
        %1676 = vdwg.mxu0
        %v1677 = vsel %vm784, %v1617, 0.0
        %v1678 = vsel %vm784, %v1636, 0.0
        %v1679 = vadd.f32 %v1677, %v1678
        %v1680 = vsel %vm784, %v1655, 0.0
        %v1681 = vadd.f32 %v1679, %v1680
        %v1682 = vsel %vm784, %v1674, 0.0
        %v1683 = vadd.f32 %v1681, %v1682
        %v1685 = vperm.slane %v1318, 0
        %v1687 = vadd.f32 %v1683, %v1685
        %v1688 = vadd.f32 %v1304, %v1687
        %s1689 = scalar_lea.vmem %s7, 1
        %v1690 = vld [vmem:[%s1689] sm:$0x1]
        %s1691 = scalar_lea.vmem %s8, 1
        %v1692 = vld [vmem:[%s1691] sm:$0x1]
        %v1693 = vsel %vm784, %v1688, 0.0
        %1694 = vadd.xlane.f32.xlu0 %v1693
        %v1695 = vpop.xlane.xlu0 %1694
        %v1696 = vmul.f32 %v1695, %v1152
        %v1697 = vsub.f32 %v1688, %v1696
        %v1698 = vmul.f32 %v1697, %v1697
        %v1699 = vsel %vm784, %v1698, 0.0
        %1700 = vadd.xlane.f32.xlu0 %v1699
        %v1701 = vpop.xlane.xlu0 %1700
        %v1702 = vmul.f32 %v1701, %v1152
        %v1703 = vadd.f32 %v1702, 1e-05
        %v1704 = vrsqrt.pop %v1703
        %v1705 = vmul.f32 %v1704, %v1703
        %v1706 = vmul.f32 %v1705, %v1704
        %v1707 = vmul.f32 0.5, %v1706
        %v1708 = vsub.f32 1.5, %v1707
        %v1709 = vmul.f32 %v1704, %v1708
        %vm1710 = vweird.f32 %v1703
        %vm1711 = vweird.f32 %v1704
        %vm1712 = vmor %vm1710, %vm1711
        %v1713 = vsel %vm1712, %v1704, %v1709
        %v1714 = vmul.f32 %v1697, %v1713
        %v1716 = vperm.slane %v1690, 0
        %v1718 = vmul.f32 %v1714, %v1716
        %v1720 = vperm.slane %v1692, 0
        %v1722 = vadd.f32 %v1718, %v1720
        %v1723 = vpack.c.bf16 %v1722, %v1722
        %s1724 = scalar_lea.vmem %s9, 16
        %v1725 = vld [vmem:[%s1724] sm:$0xf]
        %v1726 = vld [vmem:[%s1724 + $0x4] sm:$0xf]
        %v1727 = vld [vmem:[%s1724 + $0x8] sm:$0xf]
        %v1728 = vld [vmem:[%s1724 + $0xc] sm:$0xf]
        %s1729 = scalar_lea.vmem %s10, 1
        %v1730 = vld [vmem:[%s1729] sm:$0x1]
        %v1732 = vperm.slane %v1730, 0
        %v1738 = vunpack.c.l.b16 %v1725
        %v1739 = vunpack.c.l.b16 %v1726
        %v1740 = vunpack.c.l.b16 %v1727
        %v1741 = vunpack.c.l.b16 %v1728
        %v1742 = vpack.c.b16 %v1739, %v1738
        %v1743 = vpack.c.b16 %v1741, %v1740
        %v1747 = vsel %vm784, %v1723, 0
        %1749 = vmatpush.bf16.msra.mxu0 0
        %1750 = vmatpush.bf16.msra.mxu0 0
        %1751 = vmatpush.bf16.msra.mxu0 0
        %1752 = vmatpush.bf16.msra.mxu0 0
        %1753 = vmatpush.bf16.msra.mxu0 0
        %1754 = vmatpush.bf16.msra.mxu0 0
        %1755 = vmatpush.bf16.msra.mxu0 %v1743
        %1756 = vmatpush.bf16.msra.mxu0 %v1742
        %1757 = vmatmul.bf16.gmra.mxu0 %v1747
        %v1758 = vpop.f32.mrf.mxu0
        %v1759 = vadd.f32 %v1732, %v1758
        %v1760 = vpop.f32.mrf.mxu0
        %1761 = vdwg.mxu0
        %v1762 = vmax.f32 %v1759, 0.0
        %v1763 = vpack.c.bf16 %v1762, %v1762
        %s1764 = scalar_lea.vmem %s11, 32
        %v1765 = vld [vmem:[%s1764] sm:$0xf]
        %v1766 = vld [vmem:[%s1764 + $0x4] sm:$0xf]
        %v1767 = vld [vmem:[%s1764 + $0x8] sm:$0xf]
        %v1768 = vld [vmem:[%s1764 + $0xc] sm:$0xf]
        %v1769 = vld [vmem:[%s1764 + $0x10] sm:$0xf]
        %v1770 = vld [vmem:[%s1764 + $0x14] sm:$0xf]
        %v1771 = vld [vmem:[%s1764 + $0x18] sm:$0xf]
        %v1772 = vld [vmem:[%s1764 + $0x1c] sm:$0xf]
        %s1773 = scalar_lea.vmem %s12, 1
        %v1774 = vld [vmem:[%s1773] sm:$0x1]
        %v1776 = vperm.slane %v1774, 0
        %v1786 = vunpack.c.l.b16 %v1765
        %v1787 = vunpack.c.l.b16 %v1766
        %v1788 = vunpack.c.l.b16 %v1767
        %v1789 = vunpack.c.l.b16 %v1768
        %v1790 = vunpack.c.l.b16 %v1769
        %v1791 = vunpack.c.l.b16 %v1770
        %v1792 = vunpack.c.l.b16 %v1771
        %v1793 = vunpack.c.l.b16 %v1772
        %v1794 = vpack.c.b16 %v1787, %v1786
        %v1795 = vpack.c.b16 %v1789, %v1788
        %v1796 = vpack.c.b16 %v1791, %v1790
        %v1797 = vpack.c.b16 %v1793, %v1792
        %v1803 = vsel %vm1255, %v1763, 0
        %1805 = vmatpush.bf16.msra.mxu0 0
        %1806 = vmatpush.bf16.msra.mxu0 0
        %1807 = vmatpush.bf16.msra.mxu0 0
        %1808 = vmatpush.bf16.msra.mxu0 0
        %1809 = vmatpush.bf16.msra.mxu0 %v1797
        %1810 = vmatpush.bf16.msra.mxu0 %v1796
        %1811 = vmatpush.bf16.msra.mxu0 %v1795
        %1812 = vmatpush.bf16.msra.mxu0 %v1794
        %1813 = vmatmul.bf16.gmra.mxu0 %v1803
        %v1814 = vpop.f32.mrf.mxu0
        %v1815 = vadd.f32 %v1776, %v1814
        %v1816 = vpop.f32.mrf.mxu0
        %1817 = vdwg.mxu0
        %v1818 = vadd.f32 %v1722, %v1815
        %s1819 = scalar_lea.vmem %s13, 1
        %v1820 = vld [vmem:[%s1819] sm:$0x1]
        %s1821 = scalar_lea.vmem %s14, 1
        %v1822 = vld [vmem:[%s1821] sm:$0x1]
        %v1823 = vsel %vm784, %v1818, 0.0
        %1824 = vadd.xlane.f32.xlu0 %v1823
        %v1825 = vpop.xlane.xlu0 %1824
        %v1826 = vmul.f32 %v1825, %v1152
        %v1827 = vsub.f32 %v1818, %v1826
        %v1828 = vmul.f32 %v1827, %v1827
        %v1829 = vsel %vm784, %v1828, 0.0
        %1830 = vadd.xlane.f32.xlu0 %v1829
        %v1831 = vpop.xlane.xlu0 %1830
        %v1832 = vmul.f32 %v1831, %v1152
        %v1833 = vadd.f32 %v1832, 1e-05
        %v1834 = vrsqrt.pop %v1833
        %v1835 = vmul.f32 %v1834, %v1833
        %v1836 = vmul.f32 %v1835, %v1834
        %v1837 = vmul.f32 0.5, %v1836
        %v1838 = vsub.f32 1.5, %v1837
        %v1839 = vmul.f32 %v1834, %v1838
        %vm1840 = vweird.f32 %v1833
        %vm1841 = vweird.f32 %v1834
        %vm1842 = vmor %vm1840, %vm1841
        %v1843 = vsel %vm1842, %v1834, %v1839
        %v1844 = vmul.f32 %v1827, %v1843
        %v1846 = vperm.slane %v1820, 0
        %v1848 = vmul.f32 %v1844, %v1846
        %v1850 = vperm.slane %v1822, 0
        %v1852 = vadd.f32 %v1848, %v1850
        %v1853 = vld [vmem:[%s15] sm:$0xf]
        %v1854 = vld [vmem:[%s15 + $0x4] sm:$0xf]
        %v1855 = vld [vmem:[%s15 + $0x8] sm:$0xf]
        %v1856 = vld [vmem:[%s15 + $0xc] sm:$0xf]
        %v1857 = vld [vmem:[#allocation2] sm:$0x1]
        %v1858 = vld [vmem:[#allocation5] sm:$0xf]
        %v1859 = vld [vmem:[#allocation5 + $0x4] sm:$0xf]
        %v1860 = vld [vmem:[#allocation5 + $0x8] sm:$0xf]
        %v1861 = vld [vmem:[#allocation5 + $0xc] sm:$0xf]
        %v1862 = vld [vmem:[#allocation7] sm:$0x1]
        %v1863 = vpack.c.bf16 %v1852, %v1852
        %v1865 = vperm.slane %v1857, 0
        %v1871 = vunpack.c.l.b16 %v1853
        %v1872 = vunpack.c.l.b16 %v1854
        %v1873 = vunpack.c.l.b16 %v1855
        %v1874 = vunpack.c.l.b16 %v1856
        %v1875 = vpack.c.b16 %v1872, %v1871
        %v1876 = vpack.c.b16 %v1874, %v1873
        %v1880 = vsel %vm784, %v1863, 0
        %1882 = vmatpush.bf16.msra.mxu0 0
        %1883 = vmatpush.bf16.msra.mxu0 0
        %1884 = vmatpush.bf16.msra.mxu0 0
        %1885 = vmatpush.bf16.msra.mxu0 0
        %1886 = vmatpush.bf16.msra.mxu0 0
        %1887 = vmatpush.bf16.msra.mxu0 0
        %1888 = vmatpush.bf16.msra.mxu0 %v1876
        %1889 = vmatpush.bf16.msra.mxu0 %v1875
        %1890 = vmatmul.bf16.gmra.mxu0 %v1880
        %v1891 = vpop.f32.mrf.mxu0
        %v1892 = vadd.f32 %v1865, %v1891
        %v1893 = vpop.f32.mrf.mxu0
        %1894 = vdwg.mxu0
        %1896 = vrot.lane.b32.xlu0 %v1892, 120
        %v1897 = vpop.permute.xlu0 %1896
        %1899 = vrot.lane.b32.xlu0 %v1892, 112
        %v1900 = vpop.permute.xlu0 %1899
        %1902 = vrot.lane.b32.xlu0 %v1892, 104
        %v1903 = vpop.permute.xlu0 %1902
        %v1905 = vpack.c.bf16 %v1892, %v1892
        %v1906 = vpack.c.bf16 %v1897, %v1897
        %v1907 = vpack.c.bf16 %v1900, %v1900
        %v1908 = vpack.c.bf16 %v1903, %v1903
        %v1910 = vunpack.c.l.b16 %v1905
        %v1911 = vpack.c.b16 %v1910, %v1910
        %1912 = vrot.lane.b32.xlu0 %v1911, 96
        %v1913 = vpop.permute.xlu0 %1912
        %v1915 = vsel %vm820, %v1905, 0
        %v1918 = vsel %vm820, %v1913, 0
        %1920 = vmatpush.bf16.xpose.msra.mxu0 0
        %1921 = vmatpush.bf16.xpose.msra.mxu0 0
        %1922 = vmatpush.bf16.xpose.msra.mxu0 0
        %1923 = vmatpush.bf16.xpose.msra.mxu0 0
        %1924 = vmatpush.bf16.xpose.msra.mxu0 0
        %1925 = vmatpush.bf16.xpose.msra.mxu0 0
        %1926 = vmatpush.bf16.xpose.msra.mxu0 0
        %1927 = vmatpush.bf16.xpose.msra.mxu0 %v1918
        %1928 = vmatmul.bf16.gmra.mxu0 %v1915
        %v1929 = vpop.f32.mrf.mxu0
        %v1930 = vadd.f32 0.0, %v1929
        %v1931 = vpop.f32.mrf.mxu0
        %1932 = vdwg.mxu0
        %v1934 = vunpack.c.l.b16 %v1906
        %v1935 = vpack.c.b16 %v1934, %v1934
        %1936 = vrot.lane.b32.xlu0 %v1935, 96
        %v1937 = vpop.permute.xlu0 %1936
        %v1939 = vsel %vm820, %v1906, 0
        %v1942 = vsel %vm820, %v1937, 0
        %1944 = vmatpush.bf16.xpose.msra.mxu0 0
        %1945 = vmatpush.bf16.xpose.msra.mxu0 0
        %1946 = vmatpush.bf16.xpose.msra.mxu0 0
        %1947 = vmatpush.bf16.xpose.msra.mxu0 0
        %1948 = vmatpush.bf16.xpose.msra.mxu0 0
        %1949 = vmatpush.bf16.xpose.msra.mxu0 0
        %1950 = vmatpush.bf16.xpose.msra.mxu0 0
        %1951 = vmatpush.bf16.xpose.msra.mxu0 %v1942
        %1952 = vmatmul.bf16.gmra.mxu0 %v1939
        %v1953 = vpop.f32.mrf.mxu0
        %v1954 = vadd.f32 0.0, %v1953
        %v1955 = vpop.f32.mrf.mxu0
        %1956 = vdwg.mxu0
        %v1958 = vunpack.c.l.b16 %v1907
        %v1959 = vpack.c.b16 %v1958, %v1958
        %1960 = vrot.lane.b32.xlu0 %v1959, 96
        %v1961 = vpop.permute.xlu0 %1960
        %v1963 = vsel %vm820, %v1907, 0
        %v1966 = vsel %vm820, %v1961, 0
        %1968 = vmatpush.bf16.xpose.msra.mxu0 0
        %1969 = vmatpush.bf16.xpose.msra.mxu0 0
        %1970 = vmatpush.bf16.xpose.msra.mxu0 0
        %1971 = vmatpush.bf16.xpose.msra.mxu0 0
        %1972 = vmatpush.bf16.xpose.msra.mxu0 0
        %1973 = vmatpush.bf16.xpose.msra.mxu0 0
        %1974 = vmatpush.bf16.xpose.msra.mxu0 0
        %1975 = vmatpush.bf16.xpose.msra.mxu0 %v1966
        %1976 = vmatmul.bf16.gmra.mxu0 %v1963
        %v1977 = vpop.f32.mrf.mxu0
        %v1978 = vadd.f32 0.0, %v1977
        %v1979 = vpop.f32.mrf.mxu0
        %1980 = vdwg.mxu0
        %v1982 = vunpack.c.l.b16 %v1908
        %v1983 = vpack.c.b16 %v1982, %v1982
        %1984 = vrot.lane.b32.xlu0 %v1983, 96
        %v1985 = vpop.permute.xlu0 %1984
        %v1987 = vsel %vm820, %v1908, 0
        %v1990 = vsel %vm820, %v1985, 0
        %1992 = vmatpush.bf16.xpose.msra.mxu0 0
        %1993 = vmatpush.bf16.xpose.msra.mxu0 0
        %1994 = vmatpush.bf16.xpose.msra.mxu0 0
        %1995 = vmatpush.bf16.xpose.msra.mxu0 0
        %1996 = vmatpush.bf16.xpose.msra.mxu0 0
        %1997 = vmatpush.bf16.xpose.msra.mxu0 0
        %1998 = vmatpush.bf16.xpose.msra.mxu0 0
        %1999 = vmatpush.bf16.xpose.msra.mxu0 %v1990
        %2000 = vmatmul.bf16.gmra.mxu0 %v1987
        %v2001 = vpop.f32.mrf.mxu0
        %v2002 = vadd.f32 0.0, %v2001
        %v2003 = vpop.f32.mrf.mxu0
        %2004 = vdwg.mxu0
        %v2005 = vmul.f32 %v1930, 0.35355338
        %v2006 = vmul.f32 %v1954, 0.35355338
        %v2007 = vmul.f32 %v1978, 0.35355338
        %v2008 = vmul.f32 %v2002, 0.35355338
        %v2009 = vsel %vm820, %v2005, -inf
        %2010 = vmax.xlane.f32.xlu0 %v2009
        %v2011 = vpop.xlane.xlu0 %2010
        %v2012 = vsel %vm820, %v2006, -inf
        %2013 = vmax.xlane.f32.xlu0 %v2012
        %v2014 = vpop.xlane.xlu0 %2013
        %v2015 = vsel %vm820, %v2007, -inf
        %2016 = vmax.xlane.f32.xlu0 %v2015
        %v2017 = vpop.xlane.xlu0 %2016
        %v2018 = vsel %vm820, %v2008, -inf
        %2019 = vmax.xlane.f32.xlu0 %v2018
        %v2020 = vpop.xlane.xlu0 %2019
        %v2021 = vsub.f32 %v2005, %v2011
        %v2022 = vsub.f32 %v2006, %v2014
        %v2023 = vsub.f32 %v2007, %v2017
        %v2024 = vsub.f32 %v2008, %v2020
        %v2025 = vmul.f32 %v2021, 1.442695
        %v2026 = vpow.pop %v2025
        %v2027 = vmul.f32 %v2022, 1.442695
        %v2028 = vpow.pop %v2027
        %v2029 = vmul.f32 %v2023, 1.442695
        %v2030 = vpow.pop %v2029
        %v2031 = vmul.f32 %v2024, 1.442695
        %v2032 = vpow.pop %v2031
        %v2033 = vsel %vm820, %v2026, 0.0
        %2034 = vadd.xlane.f32.xlu0 %v2033
        %v2035 = vpop.xlane.xlu0 %2034
        %v2036 = vsel %vm820, %v2028, 0.0
        %2037 = vadd.xlane.f32.xlu0 %v2036
        %v2038 = vpop.xlane.xlu0 %2037
        %v2039 = vsel %vm820, %v2030, 0.0
        %2040 = vadd.xlane.f32.xlu0 %v2039
        %v2041 = vpop.xlane.xlu0 %2040
        %v2042 = vsel %vm820, %v2032, 0.0
        %2043 = vadd.xlane.f32.xlu0 %v2042
        %v2044 = vpop.xlane.xlu0 %2043
        %v2045 = vrcp.pop %v2035
        %v2046 = vrcp.pop %v2038
        %v2047 = vrcp.pop %v2041
        %v2048 = vrcp.pop %v2044
        %v2049 = vmul.f32 %v2026, %v2045
        %v2050 = vmul.f32 %v2028, %v2046
        %v2051 = vmul.f32 %v2030, %v2047
        %v2052 = vmul.f32 %v2032, %v2048
        %v2053 = vpack.c.bf16 %v2049, %v2049
        %v2054 = vpack.c.bf16 %v2050, %v2050
        %v2055 = vpack.c.bf16 %v2051, %v2051
        %v2056 = vpack.c.bf16 %v2052, %v2052
        %2057 = vrot.lane.b32.xlu0 %v1911, 64
        %v2058 = vpop.permute.xlu0 %2057
        %v2060 = vsel %vm820, %v2053, 0
        %v2063 = vsel %vm969, %v2058, 0
        %2065 = vmatpush.bf16.msra.mxu0 0
        %2066 = vmatpush.bf16.msra.mxu0 0
        %2067 = vmatpush.bf16.msra.mxu0 0
        %2068 = vmatpush.bf16.msra.mxu0 0
        %2069 = vmatpush.bf16.msra.mxu0 0
        %2070 = vmatpush.bf16.msra.mxu0 0
        %2071 = vmatpush.bf16.msra.mxu0 0
        %2072 = vmatpush.bf16.msra.mxu0 %v2063
        %2073 = vmatmul.bf16.gmra.mxu0 %v2060
        %v2074 = vpop.f32.mrf.mxu0
        %v2075 = vadd.f32 0.0, %v2074
        %v2076 = vpop.f32.mrf.mxu0
        %2077 = vdwg.mxu0
        %2078 = vrot.lane.b32.xlu0 %v1935, 64
        %v2079 = vpop.permute.xlu0 %2078
        %v2081 = vsel %vm820, %v2054, 0
        %v2084 = vsel %vm969, %v2079, 0
        %2086 = vmatpush.bf16.msra.mxu0 0
        %2087 = vmatpush.bf16.msra.mxu0 0
        %2088 = vmatpush.bf16.msra.mxu0 0
        %2089 = vmatpush.bf16.msra.mxu0 0
        %2090 = vmatpush.bf16.msra.mxu0 0
        %2091 = vmatpush.bf16.msra.mxu0 0
        %2092 = vmatpush.bf16.msra.mxu0 0
        %2093 = vmatpush.bf16.msra.mxu0 %v2084
        %2094 = vmatmul.bf16.gmra.mxu0 %v2081
        %v2095 = vpop.f32.mrf.mxu0
        %v2096 = vadd.f32 0.0, %v2095
        %v2097 = vpop.f32.mrf.mxu0
        %2098 = vdwg.mxu0
        %2099 = vrot.lane.b32.xlu0 %v1959, 64
        %v2100 = vpop.permute.xlu0 %2099
        %v2102 = vsel %vm820, %v2055, 0
        %v2105 = vsel %vm969, %v2100, 0
        %2107 = vmatpush.bf16.msra.mxu0 0
        %2108 = vmatpush.bf16.msra.mxu0 0
        %2109 = vmatpush.bf16.msra.mxu0 0
        %2110 = vmatpush.bf16.msra.mxu0 0
        %2111 = vmatpush.bf16.msra.mxu0 0
        %2112 = vmatpush.bf16.msra.mxu0 0
        %2113 = vmatpush.bf16.msra.mxu0 0
        %2114 = vmatpush.bf16.msra.mxu0 %v2105
        %2115 = vmatmul.bf16.gmra.mxu0 %v2102
        %v2116 = vpop.f32.mrf.mxu0
        %v2117 = vadd.f32 0.0, %v2116
        %v2118 = vpop.f32.mrf.mxu0
        %2119 = vdwg.mxu0
        %2120 = vrot.lane.b32.xlu0 %v1983, 64
        %v2121 = vpop.permute.xlu0 %2120
        %v2123 = vsel %vm820, %v2056, 0
        %v2126 = vsel %vm969, %v2121, 0
        %2128 = vmatpush.bf16.msra.mxu0 0
        %2129 = vmatpush.bf16.msra.mxu0 0
        %2130 = vmatpush.bf16.msra.mxu0 0
        %2131 = vmatpush.bf16.msra.mxu0 0
        %2132 = vmatpush.bf16.msra.mxu0 0
        %2133 = vmatpush.bf16.msra.mxu0 0
        %2134 = vmatpush.bf16.msra.mxu0 0
        %2135 = vmatpush.bf16.msra.mxu0 %v2126
        %2136 = vmatmul.bf16.gmra.mxu0 %v2123
        %v2137 = vpop.f32.mrf.mxu0
        %v2138 = vadd.f32 0.0, %v2137
        %v2139 = vpop.f32.mrf.mxu0
        %2140 = vdwg.mxu0
        %v2141 = vpack.c.bf16 %v2075, %v2075
        %v2142 = vpack.c.bf16 %v2096, %v2096
        %v2143 = vpack.c.bf16 %v2117, %v2117
        %v2144 = vpack.c.bf16 %v2138, %v2138
        %v2146 = vsel %vm820, %v2141, 0
        %v2149 = vsel %vm969, %v1858, 0
        %2151 = vmatpush.bf16.msra.mxu0 0
        %2152 = vmatpush.bf16.msra.mxu0 0
        %2153 = vmatpush.bf16.msra.mxu0 0
        %2154 = vmatpush.bf16.msra.mxu0 0
        %2155 = vmatpush.bf16.msra.mxu0 0
        %2156 = vmatpush.bf16.msra.mxu0 0
        %2157 = vmatpush.bf16.msra.mxu0 0
        %2158 = vmatpush.bf16.msra.mxu0 %v2149
        %2159 = vmatmul.bf16.gmra.mxu0 %v2146
        %v2160 = vpop.f32.mrf.mxu0
        %v2161 = vadd.f32 0.0, %v2160
        %v2162 = vpop.f32.mrf.mxu0
        %2163 = vdwg.mxu0
        %v2165 = vsel %vm820, %v2142, 0
        %v2168 = vsel %vm969, %v1859, 0
        %2170 = vmatpush.bf16.msra.mxu0 0
        %2171 = vmatpush.bf16.msra.mxu0 0
        %2172 = vmatpush.bf16.msra.mxu0 0
        %2173 = vmatpush.bf16.msra.mxu0 0
        %2174 = vmatpush.bf16.msra.mxu0 0
        %2175 = vmatpush.bf16.msra.mxu0 0
        %2176 = vmatpush.bf16.msra.mxu0 0
        %2177 = vmatpush.bf16.msra.mxu0 %v2168
        %2178 = vmatmul.bf16.gmra.mxu0 %v2165
        %v2179 = vpop.f32.mrf.mxu0
        %v2180 = vadd.f32 0.0, %v2179
        %v2181 = vpop.f32.mrf.mxu0
        %2182 = vdwg.mxu0
        %v2184 = vsel %vm820, %v2143, 0
        %v2187 = vsel %vm969, %v1860, 0
        %2189 = vmatpush.bf16.msra.mxu0 0
        %2190 = vmatpush.bf16.msra.mxu0 0
        %2191 = vmatpush.bf16.msra.mxu0 0
        %2192 = vmatpush.bf16.msra.mxu0 0
        %2193 = vmatpush.bf16.msra.mxu0 0
        %2194 = vmatpush.bf16.msra.mxu0 0
        %2195 = vmatpush.bf16.msra.mxu0 0
        %2196 = vmatpush.bf16.msra.mxu0 %v2187
        %2197 = vmatmul.bf16.gmra.mxu0 %v2184
        %v2198 = vpop.f32.mrf.mxu0
        %v2199 = vadd.f32 0.0, %v2198
        %v2200 = vpop.f32.mrf.mxu0
        %2201 = vdwg.mxu0
        %v2203 = vsel %vm820, %v2144, 0
        %v2206 = vsel %vm969, %v1861, 0
        %2208 = vmatpush.bf16.msra.mxu0 0
        %2209 = vmatpush.bf16.msra.mxu0 0
        %2210 = vmatpush.bf16.msra.mxu0 0
        %2211 = vmatpush.bf16.msra.mxu0 0
        %2212 = vmatpush.bf16.msra.mxu0 0
        %2213 = vmatpush.bf16.msra.mxu0 0
        %2214 = vmatpush.bf16.msra.mxu0 0
        %2215 = vmatpush.bf16.msra.mxu0 %v2206
        %2216 = vmatmul.bf16.gmra.mxu0 %v2203
        %v2217 = vpop.f32.mrf.mxu0
        %v2218 = vadd.f32 0.0, %v2217
        %v2219 = vpop.f32.mrf.mxu0
        %2220 = vdwg.mxu0
        %v2221 = vsel %vm784, %v2161, 0.0
        %v2222 = vsel %vm784, %v2180, 0.0
        %v2223 = vadd.f32 %v2221, %v2222
        %v2224 = vsel %vm784, %v2199, 0.0
        %v2225 = vadd.f32 %v2223, %v2224
        %v2226 = vsel %vm784, %v2218, 0.0
        %v2227 = vadd.f32 %v2225, %v2226
        %v2229 = vperm.slane %v1862, 0
        %v2231 = vadd.f32 %v2227, %v2229
        %v2232 = vsel %vm784, %v2231, 0.0
        %v2233 = vrot.slane %v2232, 4
        %v2234 = vadd.f32 %v2232, %v2233
        %v2235 = vrot.slane %v2234, 2
        %v2236 = vadd.f32 %v2234, %v2235
        %v2237 = vrot.slane %v2236, 1
        %v2238 = vadd.f32 %v2236, %v2237
        %v2239 = vrcp.pop 8.0
        %v2240 = vmul.f32 8.0, %v2239
        %v2241 = vsub.f32 1.0, %v2240
        %v2242 = vmul.f32 %v2239, %v2241
        %v2243 = vadd.f32 %v2239, %v2242
        %vm2244 = vweird.f32 %v2239
        %v2245 = vsel %vm2244, %v2239, %v2243
        %v2246 = vmul.f32 %v2238, %v2245
        %v2247 = vpack.c.bf16 %v2246, %v2246
        %v2248 = vld [vmem:[%s19] sm:$0xf]
        %v2249 = vld [vmem:[%s19 + $0x4] sm:$0xf]
        %v2250 = vld [vmem:[%s19 + $0x8] sm:$0xf]
        %v2251 = vld [vmem:[%s19 + $0xc] sm:$0xf]
        %v2252 = vld [vmem:[%s20] sm:$0x1]
        %v2257 = vunpack.c.l.b16 %v2248
        %v2258 = vunpack.c.l.b16 %v2249
        %v2259 = vunpack.c.l.b16 %v2250
        %v2260 = vunpack.c.l.b16 %v2251
        %v2261 = vpack.c.b16 %v2258, %v2257
        %v2262 = vpack.c.b16 %v2260, %v2259
        %v2266 = vsel %vm784, %v2247, 0
        %2268 = vmatpush.bf16.msra.mxu0 0
        %2269 = vmatpush.bf16.msra.mxu0 0
        %2270 = vmatpush.bf16.msra.mxu0 0
        %2271 = vmatpush.bf16.msra.mxu0 0
        %2272 = vmatpush.bf16.msra.mxu0 0
        %2273 = vmatpush.bf16.msra.mxu0 0
        %2274 = vmatpush.bf16.msra.mxu0 %v2262
        %2275 = vmatpush.bf16.msra.mxu0 %v2261
        %2276 = vmatmul.bf16.gmra.mxu0 %v2266
        %v2277 = vpop.f32.mrf.mxu0
        %v2278 = vadd.f32 %v2252, %v2277
        %v2279 = vpop.f32.mrf.mxu0
        %2280 = vdwg.mxu0
        %vm2281 = vcmask 114688
        %2282 = vst.msk [vmem:[%s692] sm:$0x1] %vm2281, %v2278
        %s2283 = sand.u32 %s491, 1
        %s2284 = scalar_lea.sflag [#allocation4], %s2283
        %s2285 = sand.u32 %s491, 1
        %s2286 = scalar_lea.vmem [#allocation8], %s2285
        // Predicated region
        $region117: #{transformer_model_forward.1} parent=103 // pred_check
          %p2287 = pneg %p501
        $region118: #{transformer_model_forward.1} parent=103 // pred_check_branch
          %2289 = sbr.rel (%p2287) target = $region120
        $region119: #{transformer_model_forward.1} parent=103 // pred_region
          %2291 = vsyncadd %s2284, 0
          %s2292 = scalar_lea.hbm %s21, %s37
          %s2294 = sshll.u32 %s2286, 4
          %s2295 = int_to_ptr.vmem [resolvable:$true] %s2294
          %s2296 = sshll.u32 %s2292, 4
          %s2297 = int_to_ptr.hbm [resolvable:$true] %s2296
          %2299 = dma.vmem_to_hbm [thread:$0]  %s2295, 16, %s2297, %s2284
        $region120: #{transformer_model_forward.1} parent=103 // pred_fallthru
          _
      $region104: #{transformer_model_forward.1} parent=5 // pred_fallthru
        _
      %p2300 = scmp.le.s32.totalorder 2, %s32
      // Predicated region
      $region121: #{transformer_model_forward.1} parent=5 // pred_check
        %p2301 = pneg %p2300
      $region122: #{transformer_model_forward.1} parent=5 // pred_check_branch
        %2303 = sbr.rel (%p2301) target = $region124
      $region123: #{transformer_model_forward.1} parent=5 // pred_region
        %s2304 = ssub.s32 %s32, 2
        // Predicated region
        $region125: #{transformer_model_forward.1} parent=123 // pred_check
          %p2305 = pneg %p507
        $region126: #{transformer_model_forward.1} parent=123 // pred_check_branch
          %2307 = sbr.rel (%p2305) target = $region128
        $region127: #{transformer_model_forward.1} parent=123 // pred_region
          %s2308 = sand.u32 %s492, 1
          %s2309 = scalar_lea.sflag [#allocation4], %s2308
          %s2310 = sand.u32 %s492, 1
          %s2311 = scalar_lea.vmem [#allocation8], %s2310
          %2313 = dma.done %s2309, 16
        $region128: #{transformer_model_forward.1} parent=123 // pred_fallthru
          _
      $region124: #{transformer_model_forward.1} parent=5 // pred_fallthru
        _
    $region6: #{transformer_model_forward.1} parent=1 // loop_footer
      %s36 = sadd.s32 1, %s32
    $region7: #{transformer_model_forward.1} parent=1 // loop_footer_branch
      %31 = sbr.rel target = $region3
    $region8: #{transformer_model_forward.1} parent=1 // loop_exit
      _
    %2314 = vsyncpa [#allocation3], 1
    %s2315 = scalar_lea.sflag [#allocation3], 1
    %2316 = vsyncpa %s2315, 1
    %2317 = vsyncpa [#allocation6], 1
    %2318 = vsyncpa [#allocation4], 1
    %s2319 = scalar_lea.sflag [#allocation4], 1
    %2320 = vsyncpa %s2319, 1

</llo_original>
